<compile_context>
chip_gen: v7x
topology: tpu7x:2x2x1
jax: 0.10.0
libtpu: 0.0.40
codegen_flags: <defaults>
</compile_context>

<pallas_src>
import math
from functools import partial

import jax
import jax.numpy as jnp
from jax import lax
from jax.experimental import pallas as pl
from jax.experimental.pallas import tpu as pltpu


def _linear_kernel(x_ref, w_ref, b_ref, o_ref):
    """o = x @ w.T + b for one batch tile (everything resident in VMEM).

    x_ref: (TB, D)   w_ref: (C, D)   b_ref: (1, C)   o_ref: (TB, C)
    """
    logits = lax.dot_general(
        x_ref[...],
        w_ref[...],
        dimension_numbers=(((1,), (1,)), ((), ())),  # contract D with D (RHS transposed on MXU)
        preferred_element_type=jnp.float32,
    )
    o_ref[...] = (logits + b_ref[...]).astype(o_ref.dtype)


def linear_classifier_forward(x, weight, bias, *, tile_b=256, stream_bf16=False):
    """Pallas forward pass matching PyTorch LinearClassifier.forward.

    Args:
        x:           (B, 3, H, W) float32 image batch (NCHW, like PyTorch).
        weight:      (num_classes, D) float32, D = 3*H*W (nn.Linear layout).
        bias:        (num_classes,) float32.
        tile_b:      max rows per batch tile (256 fits v7x's 64 MiB VMEM
                     double-buffered with K whole).
        stream_bf16: stream x / W as bf16 into the MXU (f32 accumulation).

    Returns:
        (B, num_classes) float32 logits.
    """
    b = x.shape[0]
    d = x.shape[1] * x.shape[2] * x.shape[3]
    c = weight.shape[0]
    assert weight.shape == (c, d)
    assert bias.shape == (c,)

    # Flatten exactly like torch's x.view(b, -1); keep weight un-transposed.
    x_flat = x.reshape(b, d)
    bias_row = bias.reshape(1, c).astype(jnp.float32)

    if stream_bf16:
        x_flat = x_flat.astype(jnp.bfloat16)
        weight = weight.astype(jnp.bfloat16)

    # Batch tile: full B if it fits, else 256-row blocks (divisible by 8,
    # satisfying the (8, 128) sublane constraint; last block may be partial).
    tb = b if b <= tile_b else tile_b
    grid = (pl.cdiv(b, tb),)

    # Explicit scoped-VMEM budget: double-buffered x tile + resident W +
    # output, with margin. Capped below v7x's 64 MiB physical VMEM.
    in_itemsize = jnp.dtype(x_flat.dtype).itemsize
    vmem_need = (
        2 * tb * d * in_itemsize      # x tile, double-buffered
        + 2 * c * d * in_itemsize     # weight (resident; buffer pair)
        + 2 * tb * c * 4              # output tile
        + 2 * c * 4                   # bias
        + (2 << 20)                   # headroom
    )
    vmem_limit = int(min(max(vmem_need, 16 << 20), 56 << 20))

    out = pl.pallas_call(
        _linear_kernel,
        out_shape=jax.ShapeDtypeStruct((b, c), jnp.float32),
        grid=grid,
        in_specs=[
            pl.BlockSpec((tb, d), lambda i: (i, 0)),   # x tile, streamed over B
            pl.BlockSpec((c, d), lambda i: (0, 0)),    # W (C, D): lane-dense, resident
            pl.BlockSpec((1, c), lambda i: (0, 0)),    # bias (1, C), resident
        ],
        out_specs=pl.BlockSpec((tb, c), lambda i: (i, 0)),
        compiler_params=pltpu.CompilerParams(
            dimension_semantics=("parallel",),         # batch axis: megacore-shardable
            vmem_limit_bytes=vmem_limit,
        ),
        cost_estimate=pl.CostEstimate(
            flops=2 * b * c * d,
            transcendentals=0,
            bytes_accessed=in_itemsize * (b * d + c * d) + 4 * (b * c + c),
        ),
    )(x_flat, weight, bias_row)
    return out


def init_params(h=64, w=64, num_classes=6, seed=0):
    """Deterministic init mimicking nn.Linear's uniform(-1/sqrt(in), 1/sqrt(in))."""
    d = 3 * h * w
    key = jax.random.PRNGKey(seed)
    k_w, k_b = jax.random.split(key)
    bound = 1.0 / math.sqrt(d)
    weight = jax.random.uniform(
        k_w, (num_classes, d), jnp.float32, minval=-bound, maxval=bound
    )
    bias = jax.random.uniform(
        k_b, (num_classes,), jnp.float32, minval=-bound, maxval=bound
    )
    return weight, bias


if __name__ == "__main__":
    H, W, NUM_CLASSES = 64, 64, 6
    BATCH = 2

    key = jax.random.PRNGKey(0)
    k_x, k_x2 = jax.random.split(key)
    weight, bias = init_params(H, W, NUM_CLASSES, seed=0)

    # --- default tiny-batch path (single grid step, matches module defaults) ---
    x = jax.random.normal(k_x, (BATCH, 3, H, W), dtype=jnp.float32)
    fwd = jax.jit(partial(linear_classifier_forward))
    logits = jax.block_until_ready(fwd(x, weight, bias))

    ref = x.reshape(BATCH, -1) @ weight.T + bias
    assert logits.shape == (BATCH, NUM_CLASSES)
    assert jnp.allclose(logits, ref, atol=1e-4, rtol=1e-4)

    # --- multi-block grid sanity check (exercises parallel batch axis +
    #     resident-W constant index_map) ---
    B2 = 16
    x2 = jax.random.normal(k_x2, (B2, 3, H, W), dtype=jnp.float32)
    logits2 = jax.block_until_ready(
        linear_classifier_forward(x2, weight, bias, tile_b=8)
    )
    ref2 = x2.reshape(B2, -1) @ weight.T + bias
    assert logits2.shape == (B2, NUM_CLASSES)
    assert jnp.allclose(logits2, ref2, atol=1e-4, rtol=1e-4)

    print("KERNEL_OK")
</pallas_src>

<mosaic_0001>
module attributes {stable_mosaic.version = 11 : i64} {
  func.func @_linear_kernel(%arg0: i32, %arg1: memref<2x12288xf32, #tpu.memory_space<vmem>>, %arg2: memref<6x12288xf32, #tpu.memory_space<vmem>>, %arg3: memref<1x6xf32, #tpu.memory_space<vmem>>, %arg4: memref<2x6xf32, #tpu.memory_space<vmem>>) attributes {dimension_semantics = [#tpu.dimension_semantics<parallel>], iteration_bounds = array<i64: 1>, scalar_prefetch = 0 : i64, scratch_operands = 0 : i64, tpu.core_type = #tpu.core_type<tc>, window_params = [{transform_indices = @transform_0, window_bounds = array<i64: 2, 12288>}, {pipeline_mode = #tpu.pipeline_mode<synchronous>, transform_indices = @transform_1, window_bounds = array<i64: 6, 12288>}, {pipeline_mode = #tpu.pipeline_mode<synchronous>, transform_indices = @transform_2, window_bounds = array<i64: 1, 6>}, {transform_indices = @transform_3, window_bounds = array<i64: 2, 6>}]} {
    %c0 = arith.constant 0 : index
    %c0_0 = arith.constant 0 : index
    %0 = vector.load %arg1[%c0, %c0_0] : memref<2x12288xf32, #tpu.memory_space<vmem>>, vector<2x12288xf32>
    %c0_1 = arith.constant 0 : index
    %c0_2 = arith.constant 0 : index
    %1 = vector.load %arg2[%c0_1, %c0_2] : memref<6x12288xf32, #tpu.memory_space<vmem>>, vector<6x12288xf32>
    %cst = arith.constant dense<0.000000e+00> : vector<2x6xf32>
    %2 = tpu.matmul %0, %1, %cst {dimension_numbers = #tpu.dot_dimension_numbers<[1], [1], [0], [0], [0, 0, 1, 0], [], []>} : vector<2x12288xf32>, vector<6x12288xf32>, vector<2x6xf32> -> vector<2x6xf32>
    %c0_3 = arith.constant 0 : index
    %c0_4 = arith.constant 0 : index
    %3 = vector.load %arg3[%c0_3, %c0_4] : memref<1x6xf32, #tpu.memory_space<vmem>>, vector<1x6xf32>
    %4 = vector.broadcast %3 : vector<1x6xf32> to vector<2x6xf32>
    %5 = arith.addf %2, %4 : vector<2x6xf32>
    %c0_5 = arith.constant 0 : index
    %c0_6 = arith.constant 0 : index
    %6 = vector.load %arg4[%c0_5, %c0_6] : memref<2x6xf32, #tpu.memory_space<vmem>>, vector<2x6xf32>
    tpu.vector_store %arg4[%c0_5, %c0_6], %5 {strides = array<i32>} : memref<2x6xf32, #tpu.memory_space<vmem>>, vector<2x6xf32>,
    return
  }
  func.func @transform_0(%arg0: i32) -> (i32, i32) {
    %c0_i32 = arith.constant 0 : i32
    %c0_i32_0 = arith.constant 0 : i32
    return %arg0, %c0_i32 : i32, i32
  }
  func.func @transform_1(%arg0: i32) -> (i32, i32) {
    %c0_i32 = arith.constant 0 : i32
    %c0_i32_0 = arith.constant 0 : i32
    %c0_i32_1 = arith.constant 0 : i32
    return %c0_i32, %c0_i32_0 : i32, i32
  }
  func.func @transform_2(%arg0: i32) -> (i32, i32) {
    %c0_i32 = arith.constant 0 : i32
    %c0_i32_0 = arith.constant 0 : i32
    %c0_i32_1 = arith.constant 0 : i32
    return %c0_i32, %c0_i32_0 : i32, i32
  }
  func.func @transform_3(%arg0: i32) -> (i32, i32) {
    %c0_i32 = arith.constant 0 : i32
    %c0_i32_0 = arith.constant 0 : i32
    return %arg0, %c0_i32 : i32, i32
  }
}

</mosaic_0001>

<llo_original>
// kernel: linear_classifier_forward.1
$region0: #{linear_classifier_forward.1}
  #allocation0 [shape = 'u32[]', space=smem, size = 0x4, offset = 0x4, fixed_abs, tag = 'smem constant byte address 0x4 - core index']
  #allocation1 [shape = 'u32[144,128]{1,0:T(1,128)}', space=vmem, size = 0x12000, scoped, tag = 'internal scratch']
  %s0 = inlined_call_operand.vmem [shape: f32[2,12288], index: 0, kind: input, shape index: {}]
  %s1 = inlined_call_operand.hbm [shape: f32[6,12288], index: 1, kind: input, shape index: {}]
  %s2 = inlined_call_operand.vmem [shape: f32[1,6], index: 2, kind: input, shape index: {}]
  %s3 = inlined_call_operand.hbm [shape: f32[2,6], index: 3, kind: output, shape index: {}]
  %s4 = sld [smem:[#allocation0]]
  $region26: #{linear_classifier_forward.1} parent=0
    _
  %s6 = ssub.s32 1, %s4
  %s7 = scalar_select 0, %s6, %s4
  $region1: #{linear_classifier_forward.1} parent=0
    #allocation2 [shape = 'u8[393216]{0}', space=vmem, size = 0x60000, scoped, tag = 'input window, operand 1, single buffered']
    #allocation3 [shape = 's32[1]{0}', space=sflag, size = 0x4, scoped, tag = 'scoped memory for linear_classifier_forward.1']
    #allocation4 [shape = 's32[1]{0}', space=sflag, size = 0x4, scoped, tag = 'scoped memory for linear_classifier_forward.1']
    #allocation5 [shape = 'u8[1024]{0}', space=vmem, size = 0x400, scoped, tag = 'output window, operand 0, single buffered']
    %8 = vsyncpa [#allocation3], 0
    %9 = vsyncpa [#allocation4], 0
    // Predicated region
    $region2: #{linear_classifier_forward.1} parent=1 // pred_check
      _
    $region3: #{linear_classifier_forward.1} parent=1 // pred_check_branch
      %11 = sbr.rel (0) target = $region5
    $region4: #{linear_classifier_forward.1} parent=1 // pred_region
      _
    $region5: #{linear_classifier_forward.1} parent=1 // pred_fallthru
      _
    // Predicated region
    $region6: #{linear_classifier_forward.1} parent=1 // pred_check
      _
    $region7: #{linear_classifier_forward.1} parent=1 // pred_check_branch
      %13 = sbr.rel (0) target = $region9
    $region8: #{linear_classifier_forward.1} parent=1 // pred_region
      %s15 = ssub.s32 12288, 12288
      %16 = vsyncadd [#allocation3], %s15
      %s18 = sshll.u32 [#allocation2], 4
      %s19 = int_to_ptr.vmem [resolvable:$true] %s18
      %21 = dma.hbm_to_vmem [thread:$0]  %s1, 12288, %s19, [#allocation3]
    $region9: #{linear_classifier_forward.1} parent=1 // pred_fallthru
      _
    // Predicated region
    $region10: #{linear_classifier_forward.1} parent=1 // pred_check
      _
    $region11: #{linear_classifier_forward.1} parent=1 // pred_check_branch
      %23 = sbr.rel (0) target = $region13
    $region12: #{linear_classifier_forward.1} parent=1 // pred_region
      _
    $region13: #{linear_classifier_forward.1} parent=1 // pred_fallthru
      _
    // Predicated region
    $region14: #{linear_classifier_forward.1} parent=1 // pred_check
      _
    $region15: #{linear_classifier_forward.1} parent=1 // pred_check_branch
      %25 = sbr.rel (0) target = $region17
    $region16: #{linear_classifier_forward.1} parent=1 // pred_region
      %26 = dma.done [#allocation3], 12288
    $region17: #{linear_classifier_forward.1} parent=1 // pred_fallthru
      _
    %v27 = vld [vmem:[%s0] sm:$0xff]
    %v28 = vld [vmem:[%s0 + $0x8] sm:$0xff]
    %v29 = vld [vmem:[%s0 + $0x10] sm:$0xff]
    %v30 = vld [vmem:[%s0 + $0x18] sm:$0xff]
    %v31 = vld [vmem:[%s0 + $0x20] sm:$0xff]
    %v32 = vld [vmem:[%s0 + $0x28] sm:$0xff]
    %v33 = vld [vmem:[%s0 + $0x30] sm:$0xff]
    %v34 = vld [vmem:[%s0 + $0x38] sm:$0xff]
    %v35 = vld [vmem:[%s0 + $0x40] sm:$0xff]
    %v36 = vld [vmem:[%s0 + $0x48] sm:$0xff]
    %v37 = vld [vmem:[%s0 + $0x50] sm:$0xff]
    %v38 = vld [vmem:[%s0 + $0x58] sm:$0xff]
    %v39 = vld [vmem:[%s0 + $0x60] sm:$0xff]
    %v40 = vld [vmem:[%s0 + $0x68] sm:$0xff]
    %v41 = vld [vmem:[%s0 + $0x70] sm:$0xff]
    %v42 = vld [vmem:[%s0 + $0x78] sm:$0xff]
    %v43 = vld [vmem:[%s0 + $0x80] sm:$0xff]
    %v44 = vld [vmem:[%s0 + $0x88] sm:$0xff]
    %v45 = vld [vmem:[%s0 + $0x90] sm:$0xff]
    %v46 = vld [vmem:[%s0 + $0x98] sm:$0xff]
    %v47 = vld [vmem:[%s0 + $0xa0] sm:$0xff]
    %v48 = vld [vmem:[%s0 + $0xa8] sm:$0xff]
    %v49 = vld [vmem:[%s0 + $0xb0] sm:$0xff]
    %v50 = vld [vmem:[%s0 + $0xb8] sm:$0xff]
    %v51 = vld [vmem:[#allocation2] sm:$0x3f]
    %v52 = vld [vmem:[#allocation2 + $0x8] sm:$0x3f]
    %v53 = vld [vmem:[#allocation2 + $0x10] sm:$0x3f]
    %v54 = vld [vmem:[#allocation2 + $0x18] sm:$0x3f]
    %v55 = vld [vmem:[#allocation2 + $0x20] sm:$0x3f]
    %v56 = vld [vmem:[#allocation2 + $0x28] sm:$0x3f]
    %v57 = vld [vmem:[#allocation2 + $0x30] sm:$0x3f]
    %v58 = vld [vmem:[#allocation2 + $0x38] sm:$0x3f]
    %v59 = vld [vmem:[#allocation2 + $0x40] sm:$0x3f]
    %v60 = vld [vmem:[#allocation2 + $0x48] sm:$0x3f]
    %v61 = vld [vmem:[#allocation2 + $0x50] sm:$0x3f]
    %v62 = vld [vmem:[#allocation2 + $0x58] sm:$0x3f]
    %v63 = vld [vmem:[#allocation2 + $0x60] sm:$0x3f]
    %v64 = vld [vmem:[#allocation2 + $0x68] sm:$0x3f]
    %v65 = vld [vmem:[#allocation2 + $0x70] sm:$0x3f]
    %v66 = vld [vmem:[#allocation2 + $0x78] sm:$0x3f]
    %v67 = vld [vmem:[#allocation2 + $0x80] sm:$0x3f]
    %v68 = vld [vmem:[#allocation2 + $0x88] sm:$0x3f]
    %v69 = vld [vmem:[#allocation2 + $0x90] sm:$0x3f]
    %v70 = vld [vmem:[#allocation2 + $0x98] sm:$0x3f]
    %v71 = vld [vmem:[#allocation2 + $0xa0] sm:$0x3f]
    %v72 = vld [vmem:[#allocation2 + $0xa8] sm:$0x3f]
    %v73 = vld [vmem:[#allocation2 + $0xb0] sm:$0x3f]
    %v74 = vld [vmem:[#allocation2 + $0xb8] sm:$0x3f]
    %v75 = vld [vmem:[#allocation2 + $0xc0] sm:$0x3f]
    %v76 = vld [vmem:[#allocation2 + $0xc8] sm:$0x3f]
    %v77 = vld [vmem:[#allocation2 + $0xd0] sm:$0x3f]
    %v78 = vld [vmem:[#allocation2 + $0xd8] sm:$0x3f]
    %v79 = vld [vmem:[#allocation2 + $0xe0] sm:$0x3f]
    %v80 = vld [vmem:[#allocation2 + $0xe8] sm:$0x3f]
    %v81 = vld [vmem:[#allocation2 + $0xf0] sm:$0x3f]
    %v82 = vld [vmem:[#allocation2 + $0xf8] sm:$0x3f]
    %v83 = vld [vmem:[#allocation2 + $0x100] sm:$0x3f]
    %v84 = vld [vmem:[#allocation2 + $0x108] sm:$0x3f]
    %v85 = vld [vmem:[#allocation2 + $0x110] sm:$0x3f]
    %v86 = vld [vmem:[#allocation2 + $0x118] sm:$0x3f]
    %v87 = vld [vmem:[#allocation2 + $0x120] sm:$0x3f]
    %v88 = vld [vmem:[#allocation2 + $0x128] sm:$0x3f]
    %v89 = vld [vmem:[#allocation2 + $0x130] sm:$0x3f]
    %v90 = vld [vmem:[#allocation2 + $0x138] sm:$0x3f]
    %v91 = vld [vmem:[#allocation2 + $0x140] sm:$0x3f]
    %v92 = vld [vmem:[#allocation2 + $0x148] sm:$0x3f]
    %v93 = vld [vmem:[#allocation2 + $0x150] sm:$0x3f]
    %v94 = vld [vmem:[#allocation2 + $0x158] sm:$0x3f]
    %v95 = vld [vmem:[#allocation2 + $0x160] sm:$0x3f]
    %v96 = vld [vmem:[#allocation2 + $0x168] sm:$0x3f]
    %v97 = vld [vmem:[#allocation2 + $0x170] sm:$0x3f]
    %v98 = vld [vmem:[#allocation2 + $0x178] sm:$0x3f]
    %v99 = vld [vmem:[#allocation2 + $0x180] sm:$0x3f]
    %v100 = vld [vmem:[#allocation2 + $0x188] sm:$0x3f]
    %v101 = vld [vmem:[#allocation2 + $0x190] sm:$0x3f]
    %v102 = vld [vmem:[#allocation2 + $0x198] sm:$0x3f]
    %v103 = vld [vmem:[#allocation2 + $0x1a0] sm:$0x3f]
    %v104 = vld [vmem:[#allocation2 + $0x1a8] sm:$0x3f]
    %v105 = vld [vmem:[#allocation2 + $0x1b0] sm:$0x3f]
    %v106 = vld [vmem:[#allocation2 + $0x1b8] sm:$0x3f]
    %v107 = vld [vmem:[#allocation2 + $0x1c0] sm:$0x3f]
    %v108 = vld [vmem:[#allocation2 + $0x1c8] sm:$0x3f]
    %v109 = vld [vmem:[#allocation2 + $0x1d0] sm:$0x3f]
    %v110 = vld [vmem:[#allocation2 + $0x1d8] sm:$0x3f]
    %v111 = vld [vmem:[#allocation2 + $0x1e0] sm:$0x3f]
    %v112 = vld [vmem:[#allocation2 + $0x1e8] sm:$0x3f]
    %v113 = vld [vmem:[#allocation2 + $0x1f0] sm:$0x3f]
    %v114 = vld [vmem:[#allocation2 + $0x1f8] sm:$0x3f]
    %v115 = vld [vmem:[#allocation2 + $0x200] sm:$0x3f]
    %v116 = vld [vmem:[#allocation2 + $0x208] sm:$0x3f]
    %v117 = vld [vmem:[#allocation2 + $0x210] sm:$0x3f]
    %v118 = vld [vmem:[#allocation2 + $0x218] sm:$0x3f]
    %v119 = vld [vmem:[#allocation2 + $0x220] sm:$0x3f]
    %v120 = vld [vmem:[#allocation2 + $0x228] sm:$0x3f]
    %v121 = vld [vmem:[#allocation2 + $0x230] sm:$0x3f]
    %v122 = vld [vmem:[#allocation2 + $0x238] sm:$0x3f]
    %v123 = vld [vmem:[#allocation2 + $0x240] sm:$0x3f]
    %v124 = vld [vmem:[#allocation2 + $0x248] sm:$0x3f]
    %v125 = vld [vmem:[#allocation2 + $0x250] sm:$0x3f]
    %v126 = vld [vmem:[#allocation2 + $0x258] sm:$0x3f]
    %v127 = vld [vmem:[#allocation2 + $0x260] sm:$0x3f]
    %v128 = vld [vmem:[#allocation2 + $0x268] sm:$0x3f]
    %v129 = vld [vmem:[#allocation2 + $0x270] sm:$0x3f]
    %v130 = vld [vmem:[#allocation2 + $0x278] sm:$0x3f]
    %v131 = vld [vmem:[#allocation2 + $0x280] sm:$0x3f]
    %v132 = vld [vmem:[#allocation2 + $0x288] sm:$0x3f]
    %v133 = vld [vmem:[#allocation2 + $0x290] sm:$0x3f]
    %v134 = vld [vmem:[#allocation2 + $0x298] sm:$0x3f]
    %v135 = vld [vmem:[#allocation2 + $0x2a0] sm:$0x3f]
    %v136 = vld [vmem:[#allocation2 + $0x2a8] sm:$0x3f]
    %v137 = vld [vmem:[#allocation2 + $0x2b0] sm:$0x3f]
    %v138 = vld [vmem:[#allocation2 + $0x2b8] sm:$0x3f]
    %v139 = vld [vmem:[#allocation2 + $0x2c0] sm:$0x3f]
    %v140 = vld [vmem:[#allocation2 + $0x2c8] sm:$0x3f]
    %v141 = vld [vmem:[#allocation2 + $0x2d0] sm:$0x3f]
    %v142 = vld [vmem:[#allocation2 + $0x2d8] sm:$0x3f]
    %v143 = vld [vmem:[#allocation2 + $0x2e0] sm:$0x3f]
    %v144 = vld [vmem:[#allocation2 + $0x2e8] sm:$0x3f]
    %v145 = vld [vmem:[#allocation2 + $0x2f0] sm:$0x3f]
    %v146 = vld [vmem:[#allocation2 + $0x2f8] sm:$0x3f]
    %v147 = vld [vmem:[%s2] sm:$0x1]
    %v149 = vlaneseq
    %v150 = vshrl.u32 %v149, 7
    %v151 = vsub.s32 0, %v150
    %v152 = vrot.slane %v147, %v151
    %v178 = vcombine.high %v27, %v27
    %v180 = vunpack.c.l.s4 1983009808
    %v181 = vunpack.c.0.s8 %v180
    %v182 = vlaneseq
    %v183 = vshrl.u32 %v182, 7
    %v184 = vsub.s32 %v181, %v183
    %v185 = vrot.slane %v27, %v184
    %v187 = vunpack.c.l.s4 1983009808
    %v188 = vunpack.c.0.s8 %v187
    %v189 = vlaneseq
    %v190 = vshrl.u32 %v189, 7
    %v191 = vsub.s32 %v188, %v190
    %v192 = vrot.slane %v178, %v191
    %v193 = vcombine.high %v185, %v185
    %v194 = vcombine.high %v192, %v192
    %v195 = vcombine.high %v28, %v28
    %v197 = vunpack.c.l.s4 1983009808
    %v198 = vunpack.c.0.s8 %v197
    %v199 = vlaneseq
    %v200 = vshrl.u32 %v199, 7
    %v201 = vsub.s32 %v198, %v200
    %v202 = vrot.slane %v28, %v201
    %v204 = vunpack.c.l.s4 1983009808
    %v205 = vunpack.c.0.s8 %v204
    %v206 = vlaneseq
    %v207 = vshrl.u32 %v206, 7
    %v208 = vsub.s32 %v205, %v207
    %v209 = vrot.slane %v195, %v208
    %v210 = vcombine.high %v202, %v202
    %v211 = vcombine.high %v209, %v209
    %v212 = vcombine.high %v29, %v29
    %v214 = vunpack.c.l.s4 1983009808
    %v215 = vunpack.c.0.s8 %v214
    %v216 = vlaneseq
    %v217 = vshrl.u32 %v216, 7
    %v218 = vsub.s32 %v215, %v217
    %v219 = vrot.slane %v29, %v218
    %v221 = vunpack.c.l.s4 1983009808
    %v222 = vunpack.c.0.s8 %v221
    %v223 = vlaneseq
    %v224 = vshrl.u32 %v223, 7
    %v225 = vsub.s32 %v222, %v224
    %v226 = vrot.slane %v212, %v225
    %v227 = vcombine.high %v219, %v219
    %v228 = vcombine.high %v226, %v226
    %v229 = vcombine.high %v30, %v30
    %v231 = vunpack.c.l.s4 1983009808
    %v232 = vunpack.c.0.s8 %v231
    %v233 = vlaneseq
    %v234 = vshrl.u32 %v233, 7
    %v235 = vsub.s32 %v232, %v234
    %v236 = vrot.slane %v30, %v235
    %v238 = vunpack.c.l.s4 1983009808
    %v239 = vunpack.c.0.s8 %v238
    %v240 = vlaneseq
    %v241 = vshrl.u32 %v240, 7
    %v242 = vsub.s32 %v239, %v241
    %v243 = vrot.slane %v229, %v242
    %v244 = vcombine.high %v236, %v236
    %v245 = vcombine.high %v243, %v243
    %v246 = vcombine.high %v31, %v31
    %v248 = vunpack.c.l.s4 1983009808
    %v249 = vunpack.c.0.s8 %v248
    %v250 = vlaneseq
    %v251 = vshrl.u32 %v250, 7
    %v252 = vsub.s32 %v249, %v251
    %v253 = vrot.slane %v31, %v252
    %v255 = vunpack.c.l.s4 1983009808
    %v256 = vunpack.c.0.s8 %v255
    %v257 = vlaneseq
    %v258 = vshrl.u32 %v257, 7
    %v259 = vsub.s32 %v256, %v258
    %v260 = vrot.slane %v246, %v259
    %v261 = vcombine.high %v253, %v253
    %v262 = vcombine.high %v260, %v260
    %v263 = vcombine.high %v32, %v32
    %v265 = vunpack.c.l.s4 1983009808
    %v266 = vunpack.c.0.s8 %v265
    %v267 = vlaneseq
    %v268 = vshrl.u32 %v267, 7
    %v269 = vsub.s32 %v266, %v268
    %v270 = vrot.slane %v32, %v269
    %v272 = vunpack.c.l.s4 1983009808
    %v273 = vunpack.c.0.s8 %v272
    %v274 = vlaneseq
    %v275 = vshrl.u32 %v274, 7
    %v276 = vsub.s32 %v273, %v275
    %v277 = vrot.slane %v263, %v276
    %v278 = vcombine.high %v270, %v270
    %v279 = vcombine.high %v277, %v277
    %v280 = vcombine.high %v33, %v33
    %v282 = vunpack.c.l.s4 1983009808
    %v283 = vunpack.c.0.s8 %v282
    %v284 = vlaneseq
    %v285 = vshrl.u32 %v284, 7
    %v286 = vsub.s32 %v283, %v285
    %v287 = vrot.slane %v33, %v286
    %v289 = vunpack.c.l.s4 1983009808
    %v290 = vunpack.c.0.s8 %v289
    %v291 = vlaneseq
    %v292 = vshrl.u32 %v291, 7
    %v293 = vsub.s32 %v290, %v292
    %v294 = vrot.slane %v280, %v293
    %v295 = vcombine.high %v287, %v287
    %v296 = vcombine.high %v294, %v294
    %v297 = vcombine.high %v34, %v34
    %v299 = vunpack.c.l.s4 1983009808
    %v300 = vunpack.c.0.s8 %v299
    %v301 = vlaneseq
    %v302 = vshrl.u32 %v301, 7
    %v303 = vsub.s32 %v300, %v302
    %v304 = vrot.slane %v34, %v303
    %v306 = vunpack.c.l.s4 1983009808
    %v307 = vunpack.c.0.s8 %v306
    %v308 = vlaneseq
    %v309 = vshrl.u32 %v308, 7
    %v310 = vsub.s32 %v307, %v309
    %v311 = vrot.slane %v297, %v310
    %v312 = vcombine.high %v304, %v304
    %v313 = vcombine.high %v311, %v311
    %v314 = vcombine.high %v35, %v35
    %v316 = vunpack.c.l.s4 1983009808
    %v317 = vunpack.c.0.s8 %v316
    %v318 = vlaneseq
    %v319 = vshrl.u32 %v318, 7
    %v320 = vsub.s32 %v317, %v319
    %v321 = vrot.slane %v35, %v320
    %v323 = vunpack.c.l.s4 1983009808
    %v324 = vunpack.c.0.s8 %v323
    %v325 = vlaneseq
    %v326 = vshrl.u32 %v325, 7
    %v327 = vsub.s32 %v324, %v326
    %v328 = vrot.slane %v314, %v327
    %v329 = vcombine.high %v321, %v321
    %v330 = vcombine.high %v328, %v328
    %v331 = vcombine.high %v36, %v36
    %v333 = vunpack.c.l.s4 1983009808
    %v334 = vunpack.c.0.s8 %v333
    %v335 = vlaneseq
    %v336 = vshrl.u32 %v335, 7
    %v337 = vsub.s32 %v334, %v336
    %v338 = vrot.slane %v36, %v337
    %v340 = vunpack.c.l.s4 1983009808
    %v341 = vunpack.c.0.s8 %v340
    %v342 = vlaneseq
    %v343 = vshrl.u32 %v342, 7
    %v344 = vsub.s32 %v341, %v343
    %v345 = vrot.slane %v331, %v344
    %v346 = vcombine.high %v338, %v338
    %v347 = vcombine.high %v345, %v345
    %v348 = vcombine.high %v37, %v37
    %v350 = vunpack.c.l.s4 1983009808
    %v351 = vunpack.c.0.s8 %v350
    %v352 = vlaneseq
    %v353 = vshrl.u32 %v352, 7
    %v354 = vsub.s32 %v351, %v353
    %v355 = vrot.slane %v37, %v354
    %v357 = vunpack.c.l.s4 1983009808
    %v358 = vunpack.c.0.s8 %v357
    %v359 = vlaneseq
    %v360 = vshrl.u32 %v359, 7
    %v361 = vsub.s32 %v358, %v360
    %v362 = vrot.slane %v348, %v361
    %v363 = vcombine.high %v355, %v355
    %v364 = vcombine.high %v362, %v362
    %v365 = vcombine.high %v38, %v38
    %v367 = vunpack.c.l.s4 1983009808
    %v368 = vunpack.c.0.s8 %v367
    %v369 = vlaneseq
    %v370 = vshrl.u32 %v369, 7
    %v371 = vsub.s32 %v368, %v370
    %v372 = vrot.slane %v38, %v371
    %v374 = vunpack.c.l.s4 1983009808
    %v375 = vunpack.c.0.s8 %v374
    %v376 = vlaneseq
    %v377 = vshrl.u32 %v376, 7
    %v378 = vsub.s32 %v375, %v377
    %v379 = vrot.slane %v365, %v378
    %v380 = vcombine.high %v372, %v372
    %v381 = vcombine.high %v379, %v379
    %v382 = vcombine.high %v39, %v39
    %v384 = vunpack.c.l.s4 1983009808
    %v385 = vunpack.c.0.s8 %v384
    %v386 = vlaneseq
    %v387 = vshrl.u32 %v386, 7
    %v388 = vsub.s32 %v385, %v387
    %v389 = vrot.slane %v39, %v388
    %v391 = vunpack.c.l.s4 1983009808
    %v392 = vunpack.c.0.s8 %v391
    %v393 = vlaneseq
    %v394 = vshrl.u32 %v393, 7
    %v395 = vsub.s32 %v392, %v394
    %v396 = vrot.slane %v382, %v395
    %v397 = vcombine.high %v389, %v389
    %v398 = vcombine.high %v396, %v396
    %v399 = vcombine.high %v40, %v40
    %v401 = vunpack.c.l.s4 1983009808
    %v402 = vunpack.c.0.s8 %v401
    %v403 = vlaneseq
    %v404 = vshrl.u32 %v403, 7
    %v405 = vsub.s32 %v402, %v404
    %v406 = vrot.slane %v40, %v405
    %v408 = vunpack.c.l.s4 1983009808
    %v409 = vunpack.c.0.s8 %v408
    %v410 = vlaneseq
    %v411 = vshrl.u32 %v410, 7
    %v412 = vsub.s32 %v409, %v411
    %v413 = vrot.slane %v399, %v412
    %v414 = vcombine.high %v406, %v406
    %v415 = vcombine.high %v413, %v413
    %v416 = vcombine.high %v41, %v41
    %v418 = vunpack.c.l.s4 1983009808
    %v419 = vunpack.c.0.s8 %v418
    %v420 = vlaneseq
    %v421 = vshrl.u32 %v420, 7
    %v422 = vsub.s32 %v419, %v421
    %v423 = vrot.slane %v41, %v422
    %v425 = vunpack.c.l.s4 1983009808
    %v426 = vunpack.c.0.s8 %v425
    %v427 = vlaneseq
    %v428 = vshrl.u32 %v427, 7
    %v429 = vsub.s32 %v426, %v428
    %v430 = vrot.slane %v416, %v429
    %v431 = vcombine.high %v423, %v423
    %v432 = vcombine.high %v430, %v430
    %v433 = vcombine.high %v42, %v42
    %v435 = vunpack.c.l.s4 1983009808
    %v436 = vunpack.c.0.s8 %v435
    %v437 = vlaneseq
    %v438 = vshrl.u32 %v437, 7
    %v439 = vsub.s32 %v436, %v438
    %v440 = vrot.slane %v42, %v439
    %v442 = vunpack.c.l.s4 1983009808
    %v443 = vunpack.c.0.s8 %v442
    %v444 = vlaneseq
    %v445 = vshrl.u32 %v444, 7
    %v446 = vsub.s32 %v443, %v445
    %v447 = vrot.slane %v433, %v446
    %v448 = vcombine.high %v440, %v440
    %v449 = vcombine.high %v447, %v447
    %v450 = vcombine.high %v43, %v43
    %v452 = vunpack.c.l.s4 1983009808
    %v453 = vunpack.c.0.s8 %v452
    %v454 = vlaneseq
    %v455 = vshrl.u32 %v454, 7
    %v456 = vsub.s32 %v453, %v455
    %v457 = vrot.slane %v43, %v456
    %v459 = vunpack.c.l.s4 1983009808
    %v460 = vunpack.c.0.s8 %v459
    %v461 = vlaneseq
    %v462 = vshrl.u32 %v461, 7
    %v463 = vsub.s32 %v460, %v462
    %v464 = vrot.slane %v450, %v463
    %v465 = vcombine.high %v457, %v457
    %v466 = vcombine.high %v464, %v464
    %v467 = vcombine.high %v44, %v44
    %v469 = vunpack.c.l.s4 1983009808
    %v470 = vunpack.c.0.s8 %v469
    %v471 = vlaneseq
    %v472 = vshrl.u32 %v471, 7
    %v473 = vsub.s32 %v470, %v472
    %v474 = vrot.slane %v44, %v473
    %v476 = vunpack.c.l.s4 1983009808
    %v477 = vunpack.c.0.s8 %v476
    %v478 = vlaneseq
    %v479 = vshrl.u32 %v478, 7
    %v480 = vsub.s32 %v477, %v479
    %v481 = vrot.slane %v467, %v480
    %v482 = vcombine.high %v474, %v474
    %v483 = vcombine.high %v481, %v481
    %v484 = vcombine.high %v45, %v45
    %v486 = vunpack.c.l.s4 1983009808
    %v487 = vunpack.c.0.s8 %v486
    %v488 = vlaneseq
    %v489 = vshrl.u32 %v488, 7
    %v490 = vsub.s32 %v487, %v489
    %v491 = vrot.slane %v45, %v490
    %v493 = vunpack.c.l.s4 1983009808
    %v494 = vunpack.c.0.s8 %v493
    %v495 = vlaneseq
    %v496 = vshrl.u32 %v495, 7
    %v497 = vsub.s32 %v494, %v496
    %v498 = vrot.slane %v484, %v497
    %v499 = vcombine.high %v491, %v491
    %v500 = vcombine.high %v498, %v498
    %v501 = vcombine.high %v46, %v46
    %v503 = vunpack.c.l.s4 1983009808
    %v504 = vunpack.c.0.s8 %v503
    %v505 = vlaneseq
    %v506 = vshrl.u32 %v505, 7
    %v507 = vsub.s32 %v504, %v506
    %v508 = vrot.slane %v46, %v507
    %v510 = vunpack.c.l.s4 1983009808
    %v511 = vunpack.c.0.s8 %v510
    %v512 = vlaneseq
    %v513 = vshrl.u32 %v512, 7
    %v514 = vsub.s32 %v511, %v513
    %v515 = vrot.slane %v501, %v514
    %v516 = vcombine.high %v508, %v508
    %v517 = vcombine.high %v515, %v515
    %v518 = vcombine.high %v47, %v47
    %v520 = vunpack.c.l.s4 1983009808
    %v521 = vunpack.c.0.s8 %v520
    %v522 = vlaneseq
    %v523 = vshrl.u32 %v522, 7
    %v524 = vsub.s32 %v521, %v523
    %v525 = vrot.slane %v47, %v524
    %v527 = vunpack.c.l.s4 1983009808
    %v528 = vunpack.c.0.s8 %v527
    %v529 = vlaneseq
    %v530 = vshrl.u32 %v529, 7
    %v531 = vsub.s32 %v528, %v530
    %v532 = vrot.slane %v518, %v531
    %v533 = vcombine.high %v525, %v525
    %v534 = vcombine.high %v532, %v532
    %v535 = vcombine.high %v48, %v48
    %v537 = vunpack.c.l.s4 1983009808
    %v538 = vunpack.c.0.s8 %v537
    %v539 = vlaneseq
    %v540 = vshrl.u32 %v539, 7
    %v541 = vsub.s32 %v538, %v540
    %v542 = vrot.slane %v48, %v541
    %v544 = vunpack.c.l.s4 1983009808
    %v545 = vunpack.c.0.s8 %v544
    %v546 = vlaneseq
    %v547 = vshrl.u32 %v546, 7
    %v548 = vsub.s32 %v545, %v547
    %v549 = vrot.slane %v535, %v548
    %v550 = vcombine.high %v542, %v542
    %v551 = vcombine.high %v549, %v549
    %v552 = vcombine.high %v49, %v49
    %v554 = vunpack.c.l.s4 1983009808
    %v555 = vunpack.c.0.s8 %v554
    %v556 = vlaneseq
    %v557 = vshrl.u32 %v556, 7
    %v558 = vsub.s32 %v555, %v557
    %v559 = vrot.slane %v49, %v558
    %v561 = vunpack.c.l.s4 1983009808
    %v562 = vunpack.c.0.s8 %v561
    %v563 = vlaneseq
    %v564 = vshrl.u32 %v563, 7
    %v565 = vsub.s32 %v562, %v564
    %v566 = vrot.slane %v552, %v565
    %v567 = vcombine.high %v559, %v559
    %v568 = vcombine.high %v566, %v566
    %v569 = vcombine.high %v50, %v50
    %v571 = vunpack.c.l.s4 1983009808
    %v572 = vunpack.c.0.s8 %v571
    %v573 = vlaneseq
    %v574 = vshrl.u32 %v573, 7
    %v575 = vsub.s32 %v572, %v574
    %v576 = vrot.slane %v50, %v575
    %v578 = vunpack.c.l.s4 1983009808
    %v579 = vunpack.c.0.s8 %v578
    %v580 = vlaneseq
    %v581 = vshrl.u32 %v580, 7
    %v582 = vsub.s32 %v579, %v581
    %v583 = vrot.slane %v569, %v582
    %v584 = vcombine.high %v576, %v576
    %v585 = vcombine.high %v583, %v583
    %682 = vmatprep.subr.mxu0 %v52
    %683 = vmatpush1.xpose.msra.mxu0 %v51
    %684 = vmatprep.subr.mxu0 0.0
    %685 = vmatpush1.xpose.msra.mxu0 0.0
    %686 = vmatprep.subr.mxu0 0.0
    %687 = vmatpush1.xpose.msra.mxu0 0.0
    %688 = vmatprep.subr.mxu0 0.0
    %689 = vmatpush1.xpose.msra.mxu0 0.0
    %690 = vmatprep.subr.mxu0 0.0
    %691 = vmatpush1.xpose.msra.mxu0 0.0
    %692 = vmatprep.subr.mxu0 0.0
    %693 = vmatpush1.xpose.msra.mxu0 0.0
    %694 = vmatprep.subr.mxu0 0.0
    %695 = vmatpush1.xpose.msra.mxu0 0.0
    %696 = vmatprep.subr.mxu0 0.0
    %697 = vmatpush1.xpose.msra.mxu0 0.0
    %698 = vmatprep.subr.mxu0 0.0
    %699 = vmatpush1.xpose.msra.mxu0 0.0
    %700 = vmatprep.subr.mxu0 0.0
    %701 = vmatpush1.xpose.msra.mxu0 0.0
    %702 = vmatprep.subr.mxu0 0.0
    %703 = vmatpush1.xpose.msra.mxu0 0.0
    %704 = vmatprep.subr.mxu0 0.0
    %705 = vmatpush1.xpose.msra.mxu0 0.0
    %706 = vmatprep.subr.mxu0 0.0
    %707 = vmatpush1.xpose.msra.mxu0 0.0
    %708 = vmatprep.subr.mxu0 0.0
    %709 = vmatpush1.xpose.msra.mxu0 0.0
    %710 = vmatprep.subr.mxu0 0.0
    %711 = vmatpush1.xpose.msra.mxu0 0.0
    %712 = vmatprep.subr.mxu0 0.0
    %713 = vmatpush1.xpose.msra.mxu0 0.0
    %714 = vmatprep.subr.mxu0 0.0
    %715 = vmatpush1.xpose.msra.mxu0 0.0
    %716 = vmatprep.subr.mxu0 0.0
    %717 = vmatpush1.xpose.msra.mxu0 0.0
    %718 = vmatprep.subr.mxu0 0.0
    %719 = vmatpush1.xpose.msra.mxu0 0.0
    %720 = vmatprep.subr.mxu0 0.0
    %721 = vmatpush1.xpose.msra.mxu0 0.0
    %722 = vmatprep.subr.mxu0 0.0
    %723 = vmatpush1.xpose.msra.mxu0 0.0
    %724 = vmatprep.subr.mxu0 0.0
    %725 = vmatpush1.xpose.msra.mxu0 0.0
    %726 = vmatprep.subr.mxu0 0.0
    %727 = vmatpush1.xpose.msra.mxu0 0.0
    %728 = vmatprep.subr.mxu0 0.0
    %729 = vmatpush1.xpose.msra.mxu0 0.0
    %730 = vmatprep.subr.mxu0 0.0
    %731 = vmatpush1.xpose.msra.mxu0 0.0
    %732 = vmatprep.subr.mxu0 0.0
    %733 = vmatpush1.xpose.msra.mxu0 0.0
    %734 = vmatprep.subr.mxu0 0.0
    %735 = vmatpush1.xpose.msra.mxu0 0.0
    %736 = vmatprep.subr.mxu0 0.0
    %737 = vmatpush1.xpose.msra.mxu0 0.0
    %738 = vmatprep.subr.mxu0 0.0
    %739 = vmatpush1.xpose.msra.mxu0 0.0
    %740 = vmatprep.subr.mxu0 0.0
    %741 = vmatpush1.xpose.msra.mxu0 0.0
    %742 = vmatprep.subr.mxu0 0.0
    %743 = vmatpush1.xpose.msra.mxu0 0.0
    %744 = vmatprep.subr.mxu0 0.0
    %745 = vmatpush1.xpose.msra.mxu0 0.0
    %746 = vmatprep.mubr.f32.mxu0 %v193
    %747 = vmatmul.mubr.f32.gmra.mrb[0].mxu0 %v185
    %v748 = vpop.f32.mrb[0].mxu0
    %v749 = vadd.f32 %v152, %v748
    %v750 = vpop.f32.mrb[0].mxu0
    %751 = vdwg.mxu0
    %752 = vmatprep.subr.mxu0 %v54
    %753 = vmatpush1.xpose.msra.mxu0 %v53
    %754 = vmatprep.subr.mxu0 0.0
    %755 = vmatpush1.xpose.msra.mxu0 0.0
    %756 = vmatprep.subr.mxu0 0.0
    %757 = vmatpush1.xpose.msra.mxu0 0.0
    %758 = vmatprep.subr.mxu0 0.0
    %759 = vmatpush1.xpose.msra.mxu0 0.0
    %760 = vmatprep.subr.mxu0 0.0
    %761 = vmatpush1.xpose.msra.mxu0 0.0
    %762 = vmatprep.subr.mxu0 0.0
    %763 = vmatpush1.xpose.msra.mxu0 0.0
    %764 = vmatprep.subr.mxu0 0.0
    %765 = vmatpush1.xpose.msra.mxu0 0.0
    %766 = vmatprep.subr.mxu0 0.0
    %767 = vmatpush1.xpose.msra.mxu0 0.0
    %768 = vmatprep.subr.mxu0 0.0
    %769 = vmatpush1.xpose.msra.mxu0 0.0
    %770 = vmatprep.subr.mxu0 0.0
    %771 = vmatpush1.xpose.msra.mxu0 0.0
    %772 = vmatprep.subr.mxu0 0.0
    %773 = vmatpush1.xpose.msra.mxu0 0.0
    %774 = vmatprep.subr.mxu0 0.0
    %775 = vmatpush1.xpose.msra.mxu0 0.0
    %776 = vmatprep.subr.mxu0 0.0
    %777 = vmatpush1.xpose.msra.mxu0 0.0
    %778 = vmatprep.subr.mxu0 0.0
    %779 = vmatpush1.xpose.msra.mxu0 0.0
    %780 = vmatprep.subr.mxu0 0.0
    %781 = vmatpush1.xpose.msra.mxu0 0.0
    %782 = vmatprep.subr.mxu0 0.0
    %783 = vmatpush1.xpose.msra.mxu0 0.0
    %784 = vmatprep.subr.mxu0 0.0
    %785 = vmatpush1.xpose.msra.mxu0 0.0
    %786 = vmatprep.subr.mxu0 0.0
    %787 = vmatpush1.xpose.msra.mxu0 0.0
    %788 = vmatprep.subr.mxu0 0.0
    %789 = vmatpush1.xpose.msra.mxu0 0.0
    %790 = vmatprep.subr.mxu0 0.0
    %791 = vmatpush1.xpose.msra.mxu0 0.0
    %792 = vmatprep.subr.mxu0 0.0
    %793 = vmatpush1.xpose.msra.mxu0 0.0
    %794 = vmatprep.subr.mxu0 0.0
    %795 = vmatpush1.xpose.msra.mxu0 0.0
    %796 = vmatprep.subr.mxu0 0.0
    %797 = vmatpush1.xpose.msra.mxu0 0.0
    %798 = vmatprep.subr.mxu0 0.0
    %799 = vmatpush1.xpose.msra.mxu0 0.0
    %800 = vmatprep.subr.mxu0 0.0
    %801 = vmatpush1.xpose.msra.mxu0 0.0
    %802 = vmatprep.subr.mxu0 0.0
    %803 = vmatpush1.xpose.msra.mxu0 0.0
    %804 = vmatprep.subr.mxu0 0.0
    %805 = vmatpush1.xpose.msra.mxu0 0.0
    %806 = vmatprep.subr.mxu0 0.0
    %807 = vmatpush1.xpose.msra.mxu0 0.0
    %808 = vmatprep.subr.mxu0 0.0
    %809 = vmatpush1.xpose.msra.mxu0 0.0
    %810 = vmatprep.subr.mxu0 0.0
    %811 = vmatpush1.xpose.msra.mxu0 0.0
    %812 = vmatprep.subr.mxu0 0.0
    %813 = vmatpush1.xpose.msra.mxu0 0.0
    %814 = vmatprep.subr.mxu0 0.0
    %815 = vmatpush1.xpose.msra.mxu0 0.0
    %816 = vmatprep.mubr.f32.mxu0 %v194
    %817 = vmatmul.mubr.f32.gmra.mrb[0].mxu0 %v192
    %v818 = vpop.f32.mrb[0].mxu0
    %v819 = vadd.f32 %v749, %v818
    %v820 = vpop.f32.mrb[0].mxu0
    %821 = vdwg.mxu0
    %822 = vmatprep.subr.mxu0 %v56
    %823 = vmatpush1.xpose.msra.mxu0 %v55
    %824 = vmatprep.subr.mxu0 0.0
    %825 = vmatpush1.xpose.msra.mxu0 0.0
    %826 = vmatprep.subr.mxu0 0.0
    %827 = vmatpush1.xpose.msra.mxu0 0.0
    %828 = vmatprep.subr.mxu0 0.0
    %829 = vmatpush1.xpose.msra.mxu0 0.0
    %830 = vmatprep.subr.mxu0 0.0
    %831 = vmatpush1.xpose.msra.mxu0 0.0
    %832 = vmatprep.subr.mxu0 0.0
    %833 = vmatpush1.xpose.msra.mxu0 0.0
    %834 = vmatprep.subr.mxu0 0.0
    %835 = vmatpush1.xpose.msra.mxu0 0.0
    %836 = vmatprep.subr.mxu0 0.0
    %837 = vmatpush1.xpose.msra.mxu0 0.0
    %838 = vmatprep.subr.mxu0 0.0
    %839 = vmatpush1.xpose.msra.mxu0 0.0
    %840 = vmatprep.subr.mxu0 0.0
    %841 = vmatpush1.xpose.msra.mxu0 0.0
    %842 = vmatprep.subr.mxu0 0.0
    %843 = vmatpush1.xpose.msra.mxu0 0.0
    %844 = vmatprep.subr.mxu0 0.0
    %845 = vmatpush1.xpose.msra.mxu0 0.0
    %846 = vmatprep.subr.mxu0 0.0
    %847 = vmatpush1.xpose.msra.mxu0 0.0
    %848 = vmatprep.subr.mxu0 0.0
    %849 = vmatpush1.xpose.msra.mxu0 0.0
    %850 = vmatprep.subr.mxu0 0.0
    %851 = vmatpush1.xpose.msra.mxu0 0.0
    %852 = vmatprep.subr.mxu0 0.0
    %853 = vmatpush1.xpose.msra.mxu0 0.0
    %854 = vmatprep.subr.mxu0 0.0
    %855 = vmatpush1.xpose.msra.mxu0 0.0
    %856 = vmatprep.subr.mxu0 0.0
    %857 = vmatpush1.xpose.msra.mxu0 0.0
    %858 = vmatprep.subr.mxu0 0.0
    %859 = vmatpush1.xpose.msra.mxu0 0.0
    %860 = vmatprep.subr.mxu0 0.0
    %861 = vmatpush1.xpose.msra.mxu0 0.0
    %862 = vmatprep.subr.mxu0 0.0
    %863 = vmatpush1.xpose.msra.mxu0 0.0
    %864 = vmatprep.subr.mxu0 0.0
    %865 = vmatpush1.xpose.msra.mxu0 0.0
    %866 = vmatprep.subr.mxu0 0.0
    %867 = vmatpush1.xpose.msra.mxu0 0.0
    %868 = vmatprep.subr.mxu0 0.0
    %869 = vmatpush1.xpose.msra.mxu0 0.0
    %870 = vmatprep.subr.mxu0 0.0
    %871 = vmatpush1.xpose.msra.mxu0 0.0
    %872 = vmatprep.subr.mxu0 0.0
    %873 = vmatpush1.xpose.msra.mxu0 0.0
    %874 = vmatprep.subr.mxu0 0.0
    %875 = vmatpush1.xpose.msra.mxu0 0.0
    %876 = vmatprep.subr.mxu0 0.0
    %877 = vmatpush1.xpose.msra.mxu0 0.0
    %878 = vmatprep.subr.mxu0 0.0
    %879 = vmatpush1.xpose.msra.mxu0 0.0
    %880 = vmatprep.subr.mxu0 0.0
    %881 = vmatpush1.xpose.msra.mxu0 0.0
    %882 = vmatprep.subr.mxu0 0.0
    %883 = vmatpush1.xpose.msra.mxu0 0.0
    %884 = vmatprep.subr.mxu0 0.0
    %885 = vmatpush1.xpose.msra.mxu0 0.0
    %886 = vmatprep.mubr.f32.mxu0 %v210
    %887 = vmatmul.mubr.f32.gmra.mrb[0].mxu0 %v202
    %v888 = vpop.f32.mrb[0].mxu0
    %v889 = vadd.f32 %v819, %v888
    %v890 = vpop.f32.mrb[0].mxu0
    %891 = vdwg.mxu0
    %892 = vmatprep.subr.mxu0 %v58
    %893 = vmatpush1.xpose.msra.mxu0 %v57
    %894 = vmatprep.subr.mxu0 0.0
    %895 = vmatpush1.xpose.msra.mxu0 0.0
    %896 = vmatprep.subr.mxu0 0.0
    %897 = vmatpush1.xpose.msra.mxu0 0.0
    %898 = vmatprep.subr.mxu0 0.0
    %899 = vmatpush1.xpose.msra.mxu0 0.0
    %900 = vmatprep.subr.mxu0 0.0
    %901 = vmatpush1.xpose.msra.mxu0 0.0
    %902 = vmatprep.subr.mxu0 0.0
    %903 = vmatpush1.xpose.msra.mxu0 0.0
    %904 = vmatprep.subr.mxu0 0.0
    %905 = vmatpush1.xpose.msra.mxu0 0.0
    %906 = vmatprep.subr.mxu0 0.0
    %907 = vmatpush1.xpose.msra.mxu0 0.0
    %908 = vmatprep.subr.mxu0 0.0
    %909 = vmatpush1.xpose.msra.mxu0 0.0
    %910 = vmatprep.subr.mxu0 0.0
    %911 = vmatpush1.xpose.msra.mxu0 0.0
    %912 = vmatprep.subr.mxu0 0.0
    %913 = vmatpush1.xpose.msra.mxu0 0.0
    %914 = vmatprep.subr.mxu0 0.0
    %915 = vmatpush1.xpose.msra.mxu0 0.0
    %916 = vmatprep.subr.mxu0 0.0
    %917 = vmatpush1.xpose.msra.mxu0 0.0
    %918 = vmatprep.subr.mxu0 0.0
    %919 = vmatpush1.xpose.msra.mxu0 0.0
    %920 = vmatprep.subr.mxu0 0.0
    %921 = vmatpush1.xpose.msra.mxu0 0.0
    %922 = vmatprep.subr.mxu0 0.0
    %923 = vmatpush1.xpose.msra.mxu0 0.0
    %924 = vmatprep.subr.mxu0 0.0
    %925 = vmatpush1.xpose.msra.mxu0 0.0
    %926 = vmatprep.subr.mxu0 0.0
    %927 = vmatpush1.xpose.msra.mxu0 0.0
    %928 = vmatprep.subr.mxu0 0.0
    %929 = vmatpush1.xpose.msra.mxu0 0.0
    %930 = vmatprep.subr.mxu0 0.0
    %931 = vmatpush1.xpose.msra.mxu0 0.0
    %932 = vmatprep.subr.mxu0 0.0
    %933 = vmatpush1.xpose.msra.mxu0 0.0
    %934 = vmatprep.subr.mxu0 0.0
    %935 = vmatpush1.xpose.msra.mxu0 0.0
    %936 = vmatprep.subr.mxu0 0.0
    %937 = vmatpush1.xpose.msra.mxu0 0.0
    %938 = vmatprep.subr.mxu0 0.0
    %939 = vmatpush1.xpose.msra.mxu0 0.0
    %940 = vmatprep.subr.mxu0 0.0
    %941 = vmatpush1.xpose.msra.mxu0 0.0
    %942 = vmatprep.subr.mxu0 0.0
    %943 = vmatpush1.xpose.msra.mxu0 0.0
    %944 = vmatprep.subr.mxu0 0.0
    %945 = vmatpush1.xpose.msra.mxu0 0.0
    %946 = vmatprep.subr.mxu0 0.0
    %947 = vmatpush1.xpose.msra.mxu0 0.0
    %948 = vmatprep.subr.mxu0 0.0
    %949 = vmatpush1.xpose.msra.mxu0 0.0
    %950 = vmatprep.subr.mxu0 0.0
    %951 = vmatpush1.xpose.msra.mxu0 0.0
    %952 = vmatprep.subr.mxu0 0.0
    %953 = vmatpush1.xpose.msra.mxu0 0.0
    %954 = vmatprep.subr.mxu0 0.0
    %955 = vmatpush1.xpose.msra.mxu0 0.0
    %956 = vmatprep.mubr.f32.mxu0 %v211
    %957 = vmatmul.mubr.f32.gmra.mrb[0].mxu0 %v209
    %v958 = vpop.f32.mrb[0].mxu0
    %v959 = vadd.f32 %v889, %v958
    %v960 = vpop.f32.mrb[0].mxu0
    %961 = vdwg.mxu0
    %962 = vmatprep.subr.mxu0 %v60
    %963 = vmatpush1.xpose.msra.mxu0 %v59
    %964 = vmatprep.subr.mxu0 0.0
    %965 = vmatpush1.xpose.msra.mxu0 0.0
    %966 = vmatprep.subr.mxu0 0.0
    %967 = vmatpush1.xpose.msra.mxu0 0.0
    %968 = vmatprep.subr.mxu0 0.0
    %969 = vmatpush1.xpose.msra.mxu0 0.0
    %970 = vmatprep.subr.mxu0 0.0
    %971 = vmatpush1.xpose.msra.mxu0 0.0
    %972 = vmatprep.subr.mxu0 0.0
    %973 = vmatpush1.xpose.msra.mxu0 0.0
    %974 = vmatprep.subr.mxu0 0.0
    %975 = vmatpush1.xpose.msra.mxu0 0.0
    %976 = vmatprep.subr.mxu0 0.0
    %977 = vmatpush1.xpose.msra.mxu0 0.0
    %978 = vmatprep.subr.mxu0 0.0
    %979 = vmatpush1.xpose.msra.mxu0 0.0
    %980 = vmatprep.subr.mxu0 0.0
    %981 = vmatpush1.xpose.msra.mxu0 0.0
    %982 = vmatprep.subr.mxu0 0.0
    %983 = vmatpush1.xpose.msra.mxu0 0.0
    %984 = vmatprep.subr.mxu0 0.0
    %985 = vmatpush1.xpose.msra.mxu0 0.0
    %986 = vmatprep.subr.mxu0 0.0
    %987 = vmatpush1.xpose.msra.mxu0 0.0
    %988 = vmatprep.subr.mxu0 0.0
    %989 = vmatpush1.xpose.msra.mxu0 0.0
    %990 = vmatprep.subr.mxu0 0.0
    %991 = vmatpush1.xpose.msra.mxu0 0.0
    %992 = vmatprep.subr.mxu0 0.0
    %993 = vmatpush1.xpose.msra.mxu0 0.0
    %994 = vmatprep.subr.mxu0 0.0
    %995 = vmatpush1.xpose.msra.mxu0 0.0
    %996 = vmatprep.subr.mxu0 0.0
    %997 = vmatpush1.xpose.msra.mxu0 0.0
    %998 = vmatprep.subr.mxu0 0.0
    %999 = vmatpush1.xpose.msra.mxu0 0.0
    %1000 = vmatprep.subr.mxu0 0.0
    %1001 = vmatpush1.xpose.msra.mxu0 0.0
    %1002 = vmatprep.subr.mxu0 0.0
    %1003 = vmatpush1.xpose.msra.mxu0 0.0
    %1004 = vmatprep.subr.mxu0 0.0
    %1005 = vmatpush1.xpose.msra.mxu0 0.0
    %1006 = vmatprep.subr.mxu0 0.0
    %1007 = vmatpush1.xpose.msra.mxu0 0.0
    %1008 = vmatprep.subr.mxu0 0.0
    %1009 = vmatpush1.xpose.msra.mxu0 0.0
    %1010 = vmatprep.subr.mxu0 0.0
    %1011 = vmatpush1.xpose.msra.mxu0 0.0
    %1012 = vmatprep.subr.mxu0 0.0
    %1013 = vmatpush1.xpose.msra.mxu0 0.0
    %1014 = vmatprep.subr.mxu0 0.0
    %1015 = vmatpush1.xpose.msra.mxu0 0.0
    %1016 = vmatprep.subr.mxu0 0.0
    %1017 = vmatpush1.xpose.msra.mxu0 0.0
    %1018 = vmatprep.subr.mxu0 0.0
    %1019 = vmatpush1.xpose.msra.mxu0 0.0
    %1020 = vmatprep.subr.mxu0 0.0
    %1021 = vmatpush1.xpose.msra.mxu0 0.0
    %1022 = vmatprep.subr.mxu0 0.0
    %1023 = vmatpush1.xpose.msra.mxu0 0.0
    %1024 = vmatprep.subr.mxu0 0.0
    %1025 = vmatpush1.xpose.msra.mxu0 0.0
    %1026 = vmatprep.mubr.f32.mxu0 %v227
    %1027 = vmatmul.mubr.f32.gmra.mrb[0].mxu0 %v219
    %v1028 = vpop.f32.mrb[0].mxu0
    %v1029 = vadd.f32 %v959, %v1028
    %v1030 = vpop.f32.mrb[0].mxu0
    %1031 = vdwg.mxu0
    %1032 = vmatprep.subr.mxu0 %v62
    %1033 = vmatpush1.xpose.msra.mxu0 %v61
    %1034 = vmatprep.subr.mxu0 0.0
    %1035 = vmatpush1.xpose.msra.mxu0 0.0
    %1036 = vmatprep.subr.mxu0 0.0
    %1037 = vmatpush1.xpose.msra.mxu0 0.0
    %1038 = vmatprep.subr.mxu0 0.0
    %1039 = vmatpush1.xpose.msra.mxu0 0.0
    %1040 = vmatprep.subr.mxu0 0.0
    %1041 = vmatpush1.xpose.msra.mxu0 0.0
    %1042 = vmatprep.subr.mxu0 0.0
    %1043 = vmatpush1.xpose.msra.mxu0 0.0
    %1044 = vmatprep.subr.mxu0 0.0
    %1045 = vmatpush1.xpose.msra.mxu0 0.0
    %1046 = vmatprep.subr.mxu0 0.0
    %1047 = vmatpush1.xpose.msra.mxu0 0.0
    %1048 = vmatprep.subr.mxu0 0.0
    %1049 = vmatpush1.xpose.msra.mxu0 0.0
    %1050 = vmatprep.subr.mxu0 0.0
    %1051 = vmatpush1.xpose.msra.mxu0 0.0
    %1052 = vmatprep.subr.mxu0 0.0
    %1053 = vmatpush1.xpose.msra.mxu0 0.0
    %1054 = vmatprep.subr.mxu0 0.0
    %1055 = vmatpush1.xpose.msra.mxu0 0.0
    %1056 = vmatprep.subr.mxu0 0.0
    %1057 = vmatpush1.xpose.msra.mxu0 0.0
    %1058 = vmatprep.subr.mxu0 0.0
    %1059 = vmatpush1.xpose.msra.mxu0 0.0
    %1060 = vmatprep.subr.mxu0 0.0
    %1061 = vmatpush1.xpose.msra.mxu0 0.0
    %1062 = vmatprep.subr.mxu0 0.0
    %1063 = vmatpush1.xpose.msra.mxu0 0.0
    %1064 = vmatprep.subr.mxu0 0.0
    %1065 = vmatpush1.xpose.msra.mxu0 0.0
    %1066 = vmatprep.subr.mxu0 0.0
    %1067 = vmatpush1.xpose.msra.mxu0 0.0
    %1068 = vmatprep.subr.mxu0 0.0
    %1069 = vmatpush1.xpose.msra.mxu0 0.0
    %1070 = vmatprep.subr.mxu0 0.0
    %1071 = vmatpush1.xpose.msra.mxu0 0.0
    %1072 = vmatprep.subr.mxu0 0.0
    %1073 = vmatpush1.xpose.msra.mxu0 0.0
    %1074 = vmatprep.subr.mxu0 0.0
    %1075 = vmatpush1.xpose.msra.mxu0 0.0
    %1076 = vmatprep.subr.mxu0 0.0
    %1077 = vmatpush1.xpose.msra.mxu0 0.0
    %1078 = vmatprep.subr.mxu0 0.0
    %1079 = vmatpush1.xpose.msra.mxu0 0.0
    %1080 = vmatprep.subr.mxu0 0.0
    %1081 = vmatpush1.xpose.msra.mxu0 0.0
    %1082 = vmatprep.subr.mxu0 0.0
    %1083 = vmatpush1.xpose.msra.mxu0 0.0
    %1084 = vmatprep.subr.mxu0 0.0
    %1085 = vmatpush1.xpose.msra.mxu0 0.0
    %1086 = vmatprep.subr.mxu0 0.0
    %1087 = vmatpush1.xpose.msra.mxu0 0.0
    %1088 = vmatprep.subr.mxu0 0.0
    %1089 = vmatpush1.xpose.msra.mxu0 0.0
    %1090 = vmatprep.subr.mxu0 0.0
    %1091 = vmatpush1.xpose.msra.mxu0 0.0
    %1092 = vmatprep.subr.mxu0 0.0
    %1093 = vmatpush1.xpose.msra.mxu0 0.0
    %1094 = vmatprep.subr.mxu0 0.0
    %1095 = vmatpush1.xpose.msra.mxu0 0.0
    %1096 = vmatprep.mubr.f32.mxu0 %v228
    %1097 = vmatmul.mubr.f32.gmra.mrb[0].mxu0 %v226
    %v1098 = vpop.f32.mrb[0].mxu0
    %v1099 = vadd.f32 %v1029, %v1098
    %v1100 = vpop.f32.mrb[0].mxu0
    %1101 = vdwg.mxu0
    %1102 = vmatprep.subr.mxu0 %v64
    %1103 = vmatpush1.xpose.msra.mxu0 %v63
    %1104 = vmatprep.subr.mxu0 0.0
    %1105 = vmatpush1.xpose.msra.mxu0 0.0
    %1106 = vmatprep.subr.mxu0 0.0
    %1107 = vmatpush1.xpose.msra.mxu0 0.0
    %1108 = vmatprep.subr.mxu0 0.0
    %1109 = vmatpush1.xpose.msra.mxu0 0.0
    %1110 = vmatprep.subr.mxu0 0.0
    %1111 = vmatpush1.xpose.msra.mxu0 0.0
    %1112 = vmatprep.subr.mxu0 0.0
    %1113 = vmatpush1.xpose.msra.mxu0 0.0
    %1114 = vmatprep.subr.mxu0 0.0
    %1115 = vmatpush1.xpose.msra.mxu0 0.0
    %1116 = vmatprep.subr.mxu0 0.0
    %1117 = vmatpush1.xpose.msra.mxu0 0.0
    %1118 = vmatprep.subr.mxu0 0.0
    %1119 = vmatpush1.xpose.msra.mxu0 0.0
    %1120 = vmatprep.subr.mxu0 0.0
    %1121 = vmatpush1.xpose.msra.mxu0 0.0
    %1122 = vmatprep.subr.mxu0 0.0
    %1123 = vmatpush1.xpose.msra.mxu0 0.0
    %1124 = vmatprep.subr.mxu0 0.0
    %1125 = vmatpush1.xpose.msra.mxu0 0.0
    %1126 = vmatprep.subr.mxu0 0.0
    %1127 = vmatpush1.xpose.msra.mxu0 0.0
    %1128 = vmatprep.subr.mxu0 0.0
    %1129 = vmatpush1.xpose.msra.mxu0 0.0
    %1130 = vmatprep.subr.mxu0 0.0
    %1131 = vmatpush1.xpose.msra.mxu0 0.0
    %1132 = vmatprep.subr.mxu0 0.0
    %1133 = vmatpush1.xpose.msra.mxu0 0.0
    %1134 = vmatprep.subr.mxu0 0.0
    %1135 = vmatpush1.xpose.msra.mxu0 0.0
    %1136 = vmatprep.subr.mxu0 0.0
    %1137 = vmatpush1.xpose.msra.mxu0 0.0
    %1138 = vmatprep.subr.mxu0 0.0
    %1139 = vmatpush1.xpose.msra.mxu0 0.0
    %1140 = vmatprep.subr.mxu0 0.0
    %1141 = vmatpush1.xpose.msra.mxu0 0.0
    %1142 = vmatprep.subr.mxu0 0.0
    %1143 = vmatpush1.xpose.msra.mxu0 0.0
    %1144 = vmatprep.subr.mxu0 0.0
    %1145 = vmatpush1.xpose.msra.mxu0 0.0
    %1146 = vmatprep.subr.mxu0 0.0
    %1147 = vmatpush1.xpose.msra.mxu0 0.0
    %1148 = vmatprep.subr.mxu0 0.0
    %1149 = vmatpush1.xpose.msra.mxu0 0.0
    %1150 = vmatprep.subr.mxu0 0.0
    %1151 = vmatpush1.xpose.msra.mxu0 0.0
    %1152 = vmatprep.subr.mxu0 0.0
    %1153 = vmatpush1.xpose.msra.mxu0 0.0
    %1154 = vmatprep.subr.mxu0 0.0
    %1155 = vmatpush1.xpose.msra.mxu0 0.0
    %1156 = vmatprep.subr.mxu0 0.0
    %1157 = vmatpush1.xpose.msra.mxu0 0.0
    %1158 = vmatprep.subr.mxu0 0.0
    %1159 = vmatpush1.xpose.msra.mxu0 0.0
    %1160 = vmatprep.subr.mxu0 0.0
    %1161 = vmatpush1.xpose.msra.mxu0 0.0
    %1162 = vmatprep.subr.mxu0 0.0
    %1163 = vmatpush1.xpose.msra.mxu0 0.0
    %1164 = vmatprep.subr.mxu0 0.0
    %1165 = vmatpush1.xpose.msra.mxu0 0.0
    %1166 = vmatprep.mubr.f32.mxu0 %v244
    %1167 = vmatmul.mubr.f32.gmra.mrb[0].mxu0 %v236
    %v1168 = vpop.f32.mrb[0].mxu0
    %v1169 = vadd.f32 %v1099, %v1168
    %v1170 = vpop.f32.mrb[0].mxu0
    %1171 = vdwg.mxu0
    %1172 = vmatprep.subr.mxu0 %v66
    %1173 = vmatpush1.xpose.msra.mxu0 %v65
    %1174 = vmatprep.subr.mxu0 0.0
    %1175 = vmatpush1.xpose.msra.mxu0 0.0
    %1176 = vmatprep.subr.mxu0 0.0
    %1177 = vmatpush1.xpose.msra.mxu0 0.0
    %1178 = vmatprep.subr.mxu0 0.0
    %1179 = vmatpush1.xpose.msra.mxu0 0.0
    %1180 = vmatprep.subr.mxu0 0.0
    %1181 = vmatpush1.xpose.msra.mxu0 0.0
    %1182 = vmatprep.subr.mxu0 0.0
    %1183 = vmatpush1.xpose.msra.mxu0 0.0
    %1184 = vmatprep.subr.mxu0 0.0
    %1185 = vmatpush1.xpose.msra.mxu0 0.0
    %1186 = vmatprep.subr.mxu0 0.0
    %1187 = vmatpush1.xpose.msra.mxu0 0.0
    %1188 = vmatprep.subr.mxu0 0.0
    %1189 = vmatpush1.xpose.msra.mxu0 0.0
    %1190 = vmatprep.subr.mxu0 0.0
    %1191 = vmatpush1.xpose.msra.mxu0 0.0
    %1192 = vmatprep.subr.mxu0 0.0
    %1193 = vmatpush1.xpose.msra.mxu0 0.0
    %1194 = vmatprep.subr.mxu0 0.0
    %1195 = vmatpush1.xpose.msra.mxu0 0.0
    %1196 = vmatprep.subr.mxu0 0.0
    %1197 = vmatpush1.xpose.msra.mxu0 0.0
    %1198 = vmatprep.subr.mxu0 0.0
    %1199 = vmatpush1.xpose.msra.mxu0 0.0
    %1200 = vmatprep.subr.mxu0 0.0
    %1201 = vmatpush1.xpose.msra.mxu0 0.0
    %1202 = vmatprep.subr.mxu0 0.0
    %1203 = vmatpush1.xpose.msra.mxu0 0.0
    %1204 = vmatprep.subr.mxu0 0.0
    %1205 = vmatpush1.xpose.msra.mxu0 0.0
    %1206 = vmatprep.subr.mxu0 0.0
    %1207 = vmatpush1.xpose.msra.mxu0 0.0
    %1208 = vmatprep.subr.mxu0 0.0
    %1209 = vmatpush1.xpose.msra.mxu0 0.0
    %1210 = vmatprep.subr.mxu0 0.0
    %1211 = vmatpush1.xpose.msra.mxu0 0.0
    %1212 = vmatprep.subr.mxu0 0.0
    %1213 = vmatpush1.xpose.msra.mxu0 0.0
    %1214 = vmatprep.subr.mxu0 0.0
    %1215 = vmatpush1.xpose.msra.mxu0 0.0
    %1216 = vmatprep.subr.mxu0 0.0
    %1217 = vmatpush1.xpose.msra.mxu0 0.0
    %1218 = vmatprep.subr.mxu0 0.0
    %1219 = vmatpush1.xpose.msra.mxu0 0.0
    %1220 = vmatprep.subr.mxu0 0.0
    %1221 = vmatpush1.xpose.msra.mxu0 0.0
    %1222 = vmatprep.subr.mxu0 0.0
    %1223 = vmatpush1.xpose.msra.mxu0 0.0
    %1224 = vmatprep.subr.mxu0 0.0
    %1225 = vmatpush1.xpose.msra.mxu0 0.0
    %1226 = vmatprep.subr.mxu0 0.0
    %1227 = vmatpush1.xpose.msra.mxu0 0.0
    %1228 = vmatprep.subr.mxu0 0.0
    %1229 = vmatpush1.xpose.msra.mxu0 0.0
    %1230 = vmatprep.subr.mxu0 0.0
    %1231 = vmatpush1.xpose.msra.mxu0 0.0
    %1232 = vmatprep.subr.mxu0 0.0
    %1233 = vmatpush1.xpose.msra.mxu0 0.0
    %1234 = vmatprep.subr.mxu0 0.0
    %1235 = vmatpush1.xpose.msra.mxu0 0.0
    %1236 = vmatprep.mubr.f32.mxu0 %v245
    %1237 = vmatmul.mubr.f32.gmra.mrb[0].mxu0 %v243
    %v1238 = vpop.f32.mrb[0].mxu0
    %v1239 = vadd.f32 %v1169, %v1238
    %v1240 = vpop.f32.mrb[0].mxu0
    %1241 = vdwg.mxu0
    %1242 = vmatprep.subr.mxu0 %v68
    %1243 = vmatpush1.xpose.msra.mxu0 %v67
    %1244 = vmatprep.subr.mxu0 0.0
    %1245 = vmatpush1.xpose.msra.mxu0 0.0
    %1246 = vmatprep.subr.mxu0 0.0
    %1247 = vmatpush1.xpose.msra.mxu0 0.0
    %1248 = vmatprep.subr.mxu0 0.0
    %1249 = vmatpush1.xpose.msra.mxu0 0.0
    %1250 = vmatprep.subr.mxu0 0.0
    %1251 = vmatpush1.xpose.msra.mxu0 0.0
    %1252 = vmatprep.subr.mxu0 0.0
    %1253 = vmatpush1.xpose.msra.mxu0 0.0
    %1254 = vmatprep.subr.mxu0 0.0
    %1255 = vmatpush1.xpose.msra.mxu0 0.0
    %1256 = vmatprep.subr.mxu0 0.0
    %1257 = vmatpush1.xpose.msra.mxu0 0.0
    %1258 = vmatprep.subr.mxu0 0.0
    %1259 = vmatpush1.xpose.msra.mxu0 0.0
    %1260 = vmatprep.subr.mxu0 0.0
    %1261 = vmatpush1.xpose.msra.mxu0 0.0
    %1262 = vmatprep.subr.mxu0 0.0
    %1263 = vmatpush1.xpose.msra.mxu0 0.0
    %1264 = vmatprep.subr.mxu0 0.0
    %1265 = vmatpush1.xpose.msra.mxu0 0.0
    %1266 = vmatprep.subr.mxu0 0.0
    %1267 = vmatpush1.xpose.msra.mxu0 0.0
    %1268 = vmatprep.subr.mxu0 0.0
    %1269 = vmatpush1.xpose.msra.mxu0 0.0
    %1270 = vmatprep.subr.mxu0 0.0
    %1271 = vmatpush1.xpose.msra.mxu0 0.0
    %1272 = vmatprep.subr.mxu0 0.0
    %1273 = vmatpush1.xpose.msra.mxu0 0.0
    %1274 = vmatprep.subr.mxu0 0.0
    %1275 = vmatpush1.xpose.msra.mxu0 0.0
    %1276 = vmatprep.subr.mxu0 0.0
    %1277 = vmatpush1.xpose.msra.mxu0 0.0
    %1278 = vmatprep.subr.mxu0 0.0
    %1279 = vmatpush1.xpose.msra.mxu0 0.0
    %1280 = vmatprep.subr.mxu0 0.0
    %1281 = vmatpush1.xpose.msra.mxu0 0.0
    %1282 = vmatprep.subr.mxu0 0.0
    %1283 = vmatpush1.xpose.msra.mxu0 0.0
    %1284 = vmatprep.subr.mxu0 0.0
    %1285 = vmatpush1.xpose.msra.mxu0 0.0
    %1286 = vmatprep.subr.mxu0 0.0
    %1287 = vmatpush1.xpose.msra.mxu0 0.0
    %1288 = vmatprep.subr.mxu0 0.0
    %1289 = vmatpush1.xpose.msra.mxu0 0.0
    %1290 = vmatprep.subr.mxu0 0.0
    %1291 = vmatpush1.xpose.msra.mxu0 0.0
    %1292 = vmatprep.subr.mxu0 0.0
    %1293 = vmatpush1.xpose.msra.mxu0 0.0
    %1294 = vmatprep.subr.mxu0 0.0
    %1295 = vmatpush1.xpose.msra.mxu0 0.0
    %1296 = vmatprep.subr.mxu0 0.0
    %1297 = vmatpush1.xpose.msra.mxu0 0.0
    %1298 = vmatprep.subr.mxu0 0.0
    %1299 = vmatpush1.xpose.msra.mxu0 0.0
    %1300 = vmatprep.subr.mxu0 0.0
    %1301 = vmatpush1.xpose.msra.mxu0 0.0
    %1302 = vmatprep.subr.mxu0 0.0
    %1303 = vmatpush1.xpose.msra.mxu0 0.0
    %1304 = vmatprep.subr.mxu0 0.0
    %1305 = vmatpush1.xpose.msra.mxu0 0.0
    %1306 = vmatprep.mubr.f32.mxu0 %v261
    %1307 = vmatmul.mubr.f32.gmra.mrb[0].mxu0 %v253
    %v1308 = vpop.f32.mrb[0].mxu0
    %v1309 = vadd.f32 %v1239, %v1308
    %v1310 = vpop.f32.mrb[0].mxu0
    %1311 = vdwg.mxu0
    %1312 = vmatprep.subr.mxu0 %v70
    %1313 = vmatpush1.xpose.msra.mxu0 %v69
    %1314 = vmatprep.subr.mxu0 0.0
    %1315 = vmatpush1.xpose.msra.mxu0 0.0
    %1316 = vmatprep.subr.mxu0 0.0
    %1317 = vmatpush1.xpose.msra.mxu0 0.0
    %1318 = vmatprep.subr.mxu0 0.0
    %1319 = vmatpush1.xpose.msra.mxu0 0.0
    %1320 = vmatprep.subr.mxu0 0.0
    %1321 = vmatpush1.xpose.msra.mxu0 0.0
    %1322 = vmatprep.subr.mxu0 0.0
    %1323 = vmatpush1.xpose.msra.mxu0 0.0
    %1324 = vmatprep.subr.mxu0 0.0
    %1325 = vmatpush1.xpose.msra.mxu0 0.0
    %1326 = vmatprep.subr.mxu0 0.0
    %1327 = vmatpush1.xpose.msra.mxu0 0.0
    %1328 = vmatprep.subr.mxu0 0.0
    %1329 = vmatpush1.xpose.msra.mxu0 0.0
    %1330 = vmatprep.subr.mxu0 0.0
    %1331 = vmatpush1.xpose.msra.mxu0 0.0
    %1332 = vmatprep.subr.mxu0 0.0
    %1333 = vmatpush1.xpose.msra.mxu0 0.0
    %1334 = vmatprep.subr.mxu0 0.0
    %1335 = vmatpush1.xpose.msra.mxu0 0.0
    %1336 = vmatprep.subr.mxu0 0.0
    %1337 = vmatpush1.xpose.msra.mxu0 0.0
    %1338 = vmatprep.subr.mxu0 0.0
    %1339 = vmatpush1.xpose.msra.mxu0 0.0
    %1340 = vmatprep.subr.mxu0 0.0
    %1341 = vmatpush1.xpose.msra.mxu0 0.0
    %1342 = vmatprep.subr.mxu0 0.0
    %1343 = vmatpush1.xpose.msra.mxu0 0.0
    %1344 = vmatprep.subr.mxu0 0.0
    %1345 = vmatpush1.xpose.msra.mxu0 0.0
    %1346 = vmatprep.subr.mxu0 0.0
    %1347 = vmatpush1.xpose.msra.mxu0 0.0
    %1348 = vmatprep.subr.mxu0 0.0
    %1349 = vmatpush1.xpose.msra.mxu0 0.0
    %1350 = vmatprep.subr.mxu0 0.0
    %1351 = vmatpush1.xpose.msra.mxu0 0.0
    %1352 = vmatprep.subr.mxu0 0.0
    %1353 = vmatpush1.xpose.msra.mxu0 0.0
    %1354 = vmatprep.subr.mxu0 0.0
    %1355 = vmatpush1.xpose.msra.mxu0 0.0
    %1356 = vmatprep.subr.mxu0 0.0
    %1357 = vmatpush1.xpose.msra.mxu0 0.0
    %1358 = vmatprep.subr.mxu0 0.0
    %1359 = vmatpush1.xpose.msra.mxu0 0.0
    %1360 = vmatprep.subr.mxu0 0.0
    %1361 = vmatpush1.xpose.msra.mxu0 0.0
    %1362 = vmatprep.subr.mxu0 0.0
    %1363 = vmatpush1.xpose.msra.mxu0 0.0
    %1364 = vmatprep.subr.mxu0 0.0
    %1365 = vmatpush1.xpose.msra.mxu0 0.0
    %1366 = vmatprep.subr.mxu0 0.0
    %1367 = vmatpush1.xpose.msra.mxu0 0.0
    %1368 = vmatprep.subr.mxu0 0.0
    %1369 = vmatpush1.xpose.msra.mxu0 0.0
    %1370 = vmatprep.subr.mxu0 0.0
    %1371 = vmatpush1.xpose.msra.mxu0 0.0
    %1372 = vmatprep.subr.mxu0 0.0
    %1373 = vmatpush1.xpose.msra.mxu0 0.0
    %1374 = vmatprep.subr.mxu0 0.0
    %1375 = vmatpush1.xpose.msra.mxu0 0.0
    %1376 = vmatprep.mubr.f32.mxu0 %v262
    %1377 = vmatmul.mubr.f32.gmra.mrb[0].mxu0 %v260
    %v1378 = vpop.f32.mrb[0].mxu0
    %v1379 = vadd.f32 %v1309, %v1378
    %v1380 = vpop.f32.mrb[0].mxu0
    %1381 = vdwg.mxu0
    %1382 = vmatprep.subr.mxu0 %v72
    %1383 = vmatpush1.xpose.msra.mxu0 %v71
    %1384 = vmatprep.subr.mxu0 0.0
    %1385 = vmatpush1.xpose.msra.mxu0 0.0
    %1386 = vmatprep.subr.mxu0 0.0
    %1387 = vmatpush1.xpose.msra.mxu0 0.0
    %1388 = vmatprep.subr.mxu0 0.0
    %1389 = vmatpush1.xpose.msra.mxu0 0.0
    %1390 = vmatprep.subr.mxu0 0.0
    %1391 = vmatpush1.xpose.msra.mxu0 0.0
    %1392 = vmatprep.subr.mxu0 0.0
    %1393 = vmatpush1.xpose.msra.mxu0 0.0
    %1394 = vmatprep.subr.mxu0 0.0
    %1395 = vmatpush1.xpose.msra.mxu0 0.0
    %1396 = vmatprep.subr.mxu0 0.0
    %1397 = vmatpush1.xpose.msra.mxu0 0.0
    %1398 = vmatprep.subr.mxu0 0.0
    %1399 = vmatpush1.xpose.msra.mxu0 0.0
    %1400 = vmatprep.subr.mxu0 0.0
    %1401 = vmatpush1.xpose.msra.mxu0 0.0
    %1402 = vmatprep.subr.mxu0 0.0
    %1403 = vmatpush1.xpose.msra.mxu0 0.0
    %1404 = vmatprep.subr.mxu0 0.0
    %1405 = vmatpush1.xpose.msra.mxu0 0.0
    %1406 = vmatprep.subr.mxu0 0.0
    %1407 = vmatpush1.xpose.msra.mxu0 0.0
    %1408 = vmatprep.subr.mxu0 0.0
    %1409 = vmatpush1.xpose.msra.mxu0 0.0
    %1410 = vmatprep.subr.mxu0 0.0
    %1411 = vmatpush1.xpose.msra.mxu0 0.0
    %1412 = vmatprep.subr.mxu0 0.0
    %1413 = vmatpush1.xpose.msra.mxu0 0.0
    %1414 = vmatprep.subr.mxu0 0.0
    %1415 = vmatpush1.xpose.msra.mxu0 0.0
    %1416 = vmatprep.subr.mxu0 0.0
    %1417 = vmatpush1.xpose.msra.mxu0 0.0
    %1418 = vmatprep.subr.mxu0 0.0
    %1419 = vmatpush1.xpose.msra.mxu0 0.0
    %1420 = vmatprep.subr.mxu0 0.0
    %1421 = vmatpush1.xpose.msra.mxu0 0.0
    %1422 = vmatprep.subr.mxu0 0.0
    %1423 = vmatpush1.xpose.msra.mxu0 0.0
    %1424 = vmatprep.subr.mxu0 0.0
    %1425 = vmatpush1.xpose.msra.mxu0 0.0
    %1426 = vmatprep.subr.mxu0 0.0
    %1427 = vmatpush1.xpose.msra.mxu0 0.0
    %1428 = vmatprep.subr.mxu0 0.0
    %1429 = vmatpush1.xpose.msra.mxu0 0.0
    %1430 = vmatprep.subr.mxu0 0.0
    %1431 = vmatpush1.xpose.msra.mxu0 0.0
    %1432 = vmatprep.subr.mxu0 0.0
    %1433 = vmatpush1.xpose.msra.mxu0 0.0
    %1434 = vmatprep.subr.mxu0 0.0
    %1435 = vmatpush1.xpose.msra.mxu0 0.0
    %1436 = vmatprep.subr.mxu0 0.0
    %1437 = vmatpush1.xpose.msra.mxu0 0.0
    %1438 = vmatprep.subr.mxu0 0.0
    %1439 = vmatpush1.xpose.msra.mxu0 0.0
    %1440 = vmatprep.subr.mxu0 0.0
    %1441 = vmatpush1.xpose.msra.mxu0 0.0
    %1442 = vmatprep.subr.mxu0 0.0
    %1443 = vmatpush1.xpose.msra.mxu0 0.0
    %1444 = vmatprep.subr.mxu0 0.0
    %1445 = vmatpush1.xpose.msra.mxu0 0.0
    %1446 = vmatprep.mubr.f32.mxu0 %v278
    %1447 = vmatmul.mubr.f32.gmra.mrb[0].mxu0 %v270
    %v1448 = vpop.f32.mrb[0].mxu0
    %v1449 = vadd.f32 %v1379, %v1448
    %v1450 = vpop.f32.mrb[0].mxu0
    %1451 = vdwg.mxu0
    %1452 = vmatprep.subr.mxu0 %v74
    %1453 = vmatpush1.xpose.msra.mxu0 %v73
    %1454 = vmatprep.subr.mxu0 0.0
    %1455 = vmatpush1.xpose.msra.mxu0 0.0
    %1456 = vmatprep.subr.mxu0 0.0
    %1457 = vmatpush1.xpose.msra.mxu0 0.0
    %1458 = vmatprep.subr.mxu0 0.0
    %1459 = vmatpush1.xpose.msra.mxu0 0.0
    %1460 = vmatprep.subr.mxu0 0.0
    %1461 = vmatpush1.xpose.msra.mxu0 0.0
    %1462 = vmatprep.subr.mxu0 0.0
    %1463 = vmatpush1.xpose.msra.mxu0 0.0
    %1464 = vmatprep.subr.mxu0 0.0
    %1465 = vmatpush1.xpose.msra.mxu0 0.0
    %1466 = vmatprep.subr.mxu0 0.0
    %1467 = vmatpush1.xpose.msra.mxu0 0.0
    %1468 = vmatprep.subr.mxu0 0.0
    %1469 = vmatpush1.xpose.msra.mxu0 0.0
    %1470 = vmatprep.subr.mxu0 0.0
    %1471 = vmatpush1.xpose.msra.mxu0 0.0
    %1472 = vmatprep.subr.mxu0 0.0
    %1473 = vmatpush1.xpose.msra.mxu0 0.0
    %1474 = vmatprep.subr.mxu0 0.0
    %1475 = vmatpush1.xpose.msra.mxu0 0.0
    %1476 = vmatprep.subr.mxu0 0.0
    %1477 = vmatpush1.xpose.msra.mxu0 0.0
    %1478 = vmatprep.subr.mxu0 0.0
    %1479 = vmatpush1.xpose.msra.mxu0 0.0
    %1480 = vmatprep.subr.mxu0 0.0
    %1481 = vmatpush1.xpose.msra.mxu0 0.0
    %1482 = vmatprep.subr.mxu0 0.0
    %1483 = vmatpush1.xpose.msra.mxu0 0.0
    %1484 = vmatprep.subr.mxu0 0.0
    %1485 = vmatpush1.xpose.msra.mxu0 0.0
    %1486 = vmatprep.subr.mxu0 0.0
    %1487 = vmatpush1.xpose.msra.mxu0 0.0
    %1488 = vmatprep.subr.mxu0 0.0
    %1489 = vmatpush1.xpose.msra.mxu0 0.0
    %1490 = vmatprep.subr.mxu0 0.0
    %1491 = vmatpush1.xpose.msra.mxu0 0.0
    %1492 = vmatprep.subr.mxu0 0.0
    %1493 = vmatpush1.xpose.msra.mxu0 0.0
    %1494 = vmatprep.subr.mxu0 0.0
    %1495 = vmatpush1.xpose.msra.mxu0 0.0
    %1496 = vmatprep.subr.mxu0 0.0
    %1497 = vmatpush1.xpose.msra.mxu0 0.0
    %1498 = vmatprep.subr.mxu0 0.0
    %1499 = vmatpush1.xpose.msra.mxu0 0.0
    %1500 = vmatprep.subr.mxu0 0.0
    %1501 = vmatpush1.xpose.msra.mxu0 0.0
    %1502 = vmatprep.subr.mxu0 0.0
    %1503 = vmatpush1.xpose.msra.mxu0 0.0
    %1504 = vmatprep.subr.mxu0 0.0
    %1505 = vmatpush1.xpose.msra.mxu0 0.0
    %1506 = vmatprep.subr.mxu0 0.0
    %1507 = vmatpush1.xpose.msra.mxu0 0.0
    %1508 = vmatprep.subr.mxu0 0.0
    %1509 = vmatpush1.xpose.msra.mxu0 0.0
    %1510 = vmatprep.subr.mxu0 0.0
    %1511 = vmatpush1.xpose.msra.mxu0 0.0
    %1512 = vmatprep.subr.mxu0 0.0
    %1513 = vmatpush1.xpose.msra.mxu0 0.0
    %1514 = vmatprep.subr.mxu0 0.0
    %1515 = vmatpush1.xpose.msra.mxu0 0.0
    %1516 = vmatprep.mubr.f32.mxu0 %v279
    %1517 = vmatmul.mubr.f32.gmra.mrb[0].mxu0 %v277
    %v1518 = vpop.f32.mrb[0].mxu0
    %v1519 = vadd.f32 %v1449, %v1518
    %v1520 = vpop.f32.mrb[0].mxu0
    %1521 = vdwg.mxu0
    %1522 = vmatprep.subr.mxu0 %v76
    %1523 = vmatpush1.xpose.msra.mxu0 %v75
    %1524 = vmatprep.subr.mxu0 0.0
    %1525 = vmatpush1.xpose.msra.mxu0 0.0
    %1526 = vmatprep.subr.mxu0 0.0
    %1527 = vmatpush1.xpose.msra.mxu0 0.0
    %1528 = vmatprep.subr.mxu0 0.0
    %1529 = vmatpush1.xpose.msra.mxu0 0.0
    %1530 = vmatprep.subr.mxu0 0.0
    %1531 = vmatpush1.xpose.msra.mxu0 0.0
    %1532 = vmatprep.subr.mxu0 0.0
    %1533 = vmatpush1.xpose.msra.mxu0 0.0
    %1534 = vmatprep.subr.mxu0 0.0
    %1535 = vmatpush1.xpose.msra.mxu0 0.0
    %1536 = vmatprep.subr.mxu0 0.0
    %1537 = vmatpush1.xpose.msra.mxu0 0.0
    %1538 = vmatprep.subr.mxu0 0.0
    %1539 = vmatpush1.xpose.msra.mxu0 0.0
    %1540 = vmatprep.subr.mxu0 0.0
    %1541 = vmatpush1.xpose.msra.mxu0 0.0
    %1542 = vmatprep.subr.mxu0 0.0
    %1543 = vmatpush1.xpose.msra.mxu0 0.0
    %1544 = vmatprep.subr.mxu0 0.0
    %1545 = vmatpush1.xpose.msra.mxu0 0.0
    %1546 = vmatprep.subr.mxu0 0.0
    %1547 = vmatpush1.xpose.msra.mxu0 0.0
    %1548 = vmatprep.subr.mxu0 0.0
    %1549 = vmatpush1.xpose.msra.mxu0 0.0
    %1550 = vmatprep.subr.mxu0 0.0
    %1551 = vmatpush1.xpose.msra.mxu0 0.0
    %1552 = vmatprep.subr.mxu0 0.0
    %1553 = vmatpush1.xpose.msra.mxu0 0.0
    %1554 = vmatprep.subr.mxu0 0.0
    %1555 = vmatpush1.xpose.msra.mxu0 0.0
    %1556 = vmatprep.subr.mxu0 0.0
    %1557 = vmatpush1.xpose.msra.mxu0 0.0
    %1558 = vmatprep.subr.mxu0 0.0
    %1559 = vmatpush1.xpose.msra.mxu0 0.0
    %1560 = vmatprep.subr.mxu0 0.0
    %1561 = vmatpush1.xpose.msra.mxu0 0.0
    %1562 = vmatprep.subr.mxu0 0.0
    %1563 = vmatpush1.xpose.msra.mxu0 0.0
    %1564 = vmatprep.subr.mxu0 0.0
    %1565 = vmatpush1.xpose.msra.mxu0 0.0
    %1566 = vmatprep.subr.mxu0 0.0
    %1567 = vmatpush1.xpose.msra.mxu0 0.0
    %1568 = vmatprep.subr.mxu0 0.0
    %1569 = vmatpush1.xpose.msra.mxu0 0.0
    %1570 = vmatprep.subr.mxu0 0.0
    %1571 = vmatpush1.xpose.msra.mxu0 0.0
    %1572 = vmatprep.subr.mxu0 0.0
    %1573 = vmatpush1.xpose.msra.mxu0 0.0
    %1574 = vmatprep.subr.mxu0 0.0
    %1575 = vmatpush1.xpose.msra.mxu0 0.0
    %1576 = vmatprep.subr.mxu0 0.0
    %1577 = vmatpush1.xpose.msra.mxu0 0.0
    %1578 = vmatprep.subr.mxu0 0.0
    %1579 = vmatpush1.xpose.msra.mxu0 0.0
    %1580 = vmatprep.subr.mxu0 0.0
    %1581 = vmatpush1.xpose.msra.mxu0 0.0
    %1582 = vmatprep.subr.mxu0 0.0
    %1583 = vmatpush1.xpose.msra.mxu0 0.0
    %1584 = vmatprep.subr.mxu0 0.0
    %1585 = vmatpush1.xpose.msra.mxu0 0.0
    %1586 = vmatprep.mubr.f32.mxu0 %v295
    %1587 = vmatmul.mubr.f32.gmra.mrb[0].mxu0 %v287
    %v1588 = vpop.f32.mrb[0].mxu0
    %v1589 = vadd.f32 %v1519, %v1588
    %v1590 = vpop.f32.mrb[0].mxu0
    %1591 = vdwg.mxu0
    %1592 = vmatprep.subr.mxu0 %v78
    %1593 = vmatpush1.xpose.msra.mxu0 %v77
    %1594 = vmatprep.subr.mxu0 0.0
    %1595 = vmatpush1.xpose.msra.mxu0 0.0
    %1596 = vmatprep.subr.mxu0 0.0
    %1597 = vmatpush1.xpose.msra.mxu0 0.0
    %1598 = vmatprep.subr.mxu0 0.0
    %1599 = vmatpush1.xpose.msra.mxu0 0.0
    %1600 = vmatprep.subr.mxu0 0.0
    %1601 = vmatpush1.xpose.msra.mxu0 0.0
    %1602 = vmatprep.subr.mxu0 0.0
    %1603 = vmatpush1.xpose.msra.mxu0 0.0
    %1604 = vmatprep.subr.mxu0 0.0
    %1605 = vmatpush1.xpose.msra.mxu0 0.0
    %1606 = vmatprep.subr.mxu0 0.0
    %1607 = vmatpush1.xpose.msra.mxu0 0.0
    %1608 = vmatprep.subr.mxu0 0.0
    %1609 = vmatpush1.xpose.msra.mxu0 0.0
    %1610 = vmatprep.subr.mxu0 0.0
    %1611 = vmatpush1.xpose.msra.mxu0 0.0
    %1612 = vmatprep.subr.mxu0 0.0
    %1613 = vmatpush1.xpose.msra.mxu0 0.0
    %1614 = vmatprep.subr.mxu0 0.0
    %1615 = vmatpush1.xpose.msra.mxu0 0.0
    %1616 = vmatprep.subr.mxu0 0.0
    %1617 = vmatpush1.xpose.msra.mxu0 0.0
    %1618 = vmatprep.subr.mxu0 0.0
    %1619 = vmatpush1.xpose.msra.mxu0 0.0
    %1620 = vmatprep.subr.mxu0 0.0
    %1621 = vmatpush1.xpose.msra.mxu0 0.0
    %1622 = vmatprep.subr.mxu0 0.0
    %1623 = vmatpush1.xpose.msra.mxu0 0.0
    %1624 = vmatprep.subr.mxu0 0.0
    %1625 = vmatpush1.xpose.msra.mxu0 0.0
    %1626 = vmatprep.subr.mxu0 0.0
    %1627 = vmatpush1.xpose.msra.mxu0 0.0
    %1628 = vmatprep.subr.mxu0 0.0
    %1629 = vmatpush1.xpose.msra.mxu0 0.0
    %1630 = vmatprep.subr.mxu0 0.0
    %1631 = vmatpush1.xpose.msra.mxu0 0.0
    %1632 = vmatprep.subr.mxu0 0.0
    %1633 = vmatpush1.xpose.msra.mxu0 0.0
    %1634 = vmatprep.subr.mxu0 0.0
    %1635 = vmatpush1.xpose.msra.mxu0 0.0
    %1636 = vmatprep.subr.mxu0 0.0
    %1637 = vmatpush1.xpose.msra.mxu0 0.0
    %1638 = vmatprep.subr.mxu0 0.0
    %1639 = vmatpush1.xpose.msra.mxu0 0.0
    %1640 = vmatprep.subr.mxu0 0.0
    %1641 = vmatpush1.xpose.msra.mxu0 0.0
    %1642 = vmatprep.subr.mxu0 0.0
    %1643 = vmatpush1.xpose.msra.mxu0 0.0
    %1644 = vmatprep.subr.mxu0 0.0
    %1645 = vmatpush1.xpose.msra.mxu0 0.0
    %1646 = vmatprep.subr.mxu0 0.0
    %1647 = vmatpush1.xpose.msra.mxu0 0.0
    %1648 = vmatprep.subr.mxu0 0.0
    %1649 = vmatpush1.xpose.msra.mxu0 0.0
    %1650 = vmatprep.subr.mxu0 0.0
    %1651 = vmatpush1.xpose.msra.mxu0 0.0
    %1652 = vmatprep.subr.mxu0 0.0
    %1653 = vmatpush1.xpose.msra.mxu0 0.0
    %1654 = vmatprep.subr.mxu0 0.0
    %1655 = vmatpush1.xpose.msra.mxu0 0.0
    %1656 = vmatprep.mubr.f32.mxu0 %v296
    %1657 = vmatmul.mubr.f32.gmra.mrb[0].mxu0 %v294
    %v1658 = vpop.f32.mrb[0].mxu0
    %v1659 = vadd.f32 %v1589, %v1658
    %v1660 = vpop.f32.mrb[0].mxu0
    %1661 = vdwg.mxu0
    %1662 = vmatprep.subr.mxu0 %v80
    %1663 = vmatpush1.xpose.msra.mxu0 %v79
    %1664 = vmatprep.subr.mxu0 0.0
    %1665 = vmatpush1.xpose.msra.mxu0 0.0
    %1666 = vmatprep.subr.mxu0 0.0
    %1667 = vmatpush1.xpose.msra.mxu0 0.0
    %1668 = vmatprep.subr.mxu0 0.0
    %1669 = vmatpush1.xpose.msra.mxu0 0.0
    %1670 = vmatprep.subr.mxu0 0.0
    %1671 = vmatpush1.xpose.msra.mxu0 0.0
    %1672 = vmatprep.subr.mxu0 0.0
    %1673 = vmatpush1.xpose.msra.mxu0 0.0
    %1674 = vmatprep.subr.mxu0 0.0
    %1675 = vmatpush1.xpose.msra.mxu0 0.0
    %1676 = vmatprep.subr.mxu0 0.0
    %1677 = vmatpush1.xpose.msra.mxu0 0.0
    %1678 = vmatprep.subr.mxu0 0.0
    %1679 = vmatpush1.xpose.msra.mxu0 0.0
    %1680 = vmatprep.subr.mxu0 0.0
    %1681 = vmatpush1.xpose.msra.mxu0 0.0
    %1682 = vmatprep.subr.mxu0 0.0
    %1683 = vmatpush1.xpose.msra.mxu0 0.0
    %1684 = vmatprep.subr.mxu0 0.0
    %1685 = vmatpush1.xpose.msra.mxu0 0.0
    %1686 = vmatprep.subr.mxu0 0.0
    %1687 = vmatpush1.xpose.msra.mxu0 0.0
    %1688 = vmatprep.subr.mxu0 0.0
    %1689 = vmatpush1.xpose.msra.mxu0 0.0
    %1690 = vmatprep.subr.mxu0 0.0
    %1691 = vmatpush1.xpose.msra.mxu0 0.0
    %1692 = vmatprep.subr.mxu0 0.0
    %1693 = vmatpush1.xpose.msra.mxu0 0.0
    %1694 = vmatprep.subr.mxu0 0.0
    %1695 = vmatpush1.xpose.msra.mxu0 0.0
    %1696 = vmatprep.subr.mxu0 0.0
    %1697 = vmatpush1.xpose.msra.mxu0 0.0
    %1698 = vmatprep.subr.mxu0 0.0
    %1699 = vmatpush1.xpose.msra.mxu0 0.0
    %1700 = vmatprep.subr.mxu0 0.0
    %1701 = vmatpush1.xpose.msra.mxu0 0.0
    %1702 = vmatprep.subr.mxu0 0.0
    %1703 = vmatpush1.xpose.msra.mxu0 0.0
    %1704 = vmatprep.subr.mxu0 0.0
    %1705 = vmatpush1.xpose.msra.mxu0 0.0
    %1706 = vmatprep.subr.mxu0 0.0
    %1707 = vmatpush1.xpose.msra.mxu0 0.0
    %1708 = vmatprep.subr.mxu0 0.0
    %1709 = vmatpush1.xpose.msra.mxu0 0.0
    %1710 = vmatprep.subr.mxu0 0.0
    %1711 = vmatpush1.xpose.msra.mxu0 0.0
    %1712 = vmatprep.subr.mxu0 0.0
    %1713 = vmatpush1.xpose.msra.mxu0 0.0
    %1714 = vmatprep.subr.mxu0 0.0
    %1715 = vmatpush1.xpose.msra.mxu0 0.0
    %1716 = vmatprep.subr.mxu0 0.0
    %1717 = vmatpush1.xpose.msra.mxu0 0.0
    %1718 = vmatprep.subr.mxu0 0.0
    %1719 = vmatpush1.xpose.msra.mxu0 0.0
    %1720 = vmatprep.subr.mxu0 0.0
    %1721 = vmatpush1.xpose.msra.mxu0 0.0
    %1722 = vmatprep.subr.mxu0 0.0
    %1723 = vmatpush1.xpose.msra.mxu0 0.0
    %1724 = vmatprep.subr.mxu0 0.0
    %1725 = vmatpush1.xpose.msra.mxu0 0.0
    %1726 = vmatprep.mubr.f32.mxu0 %v312
    %1727 = vmatmul.mubr.f32.gmra.mrb[0].mxu0 %v304
    %v1728 = vpop.f32.mrb[0].mxu0
    %v1729 = vadd.f32 %v1659, %v1728
    %v1730 = vpop.f32.mrb[0].mxu0
    %1731 = vdwg.mxu0
    %1732 = vmatprep.subr.mxu0 %v82
    %1733 = vmatpush1.xpose.msra.mxu0 %v81
    %1734 = vmatprep.subr.mxu0 0.0
    %1735 = vmatpush1.xpose.msra.mxu0 0.0
    %1736 = vmatprep.subr.mxu0 0.0
    %1737 = vmatpush1.xpose.msra.mxu0 0.0
    %1738 = vmatprep.subr.mxu0 0.0
    %1739 = vmatpush1.xpose.msra.mxu0 0.0
    %1740 = vmatprep.subr.mxu0 0.0
    %1741 = vmatpush1.xpose.msra.mxu0 0.0
    %1742 = vmatprep.subr.mxu0 0.0
    %1743 = vmatpush1.xpose.msra.mxu0 0.0
    %1744 = vmatprep.subr.mxu0 0.0
    %1745 = vmatpush1.xpose.msra.mxu0 0.0
    %1746 = vmatprep.subr.mxu0 0.0
    %1747 = vmatpush1.xpose.msra.mxu0 0.0
    %1748 = vmatprep.subr.mxu0 0.0
    %1749 = vmatpush1.xpose.msra.mxu0 0.0
    %1750 = vmatprep.subr.mxu0 0.0
    %1751 = vmatpush1.xpose.msra.mxu0 0.0
    %1752 = vmatprep.subr.mxu0 0.0
    %1753 = vmatpush1.xpose.msra.mxu0 0.0
    %1754 = vmatprep.subr.mxu0 0.0
    %1755 = vmatpush1.xpose.msra.mxu0 0.0
    %1756 = vmatprep.subr.mxu0 0.0
    %1757 = vmatpush1.xpose.msra.mxu0 0.0
    %1758 = vmatprep.subr.mxu0 0.0
    %1759 = vmatpush1.xpose.msra.mxu0 0.0
    %1760 = vmatprep.subr.mxu0 0.0
    %1761 = vmatpush1.xpose.msra.mxu0 0.0
    %1762 = vmatprep.subr.mxu0 0.0
    %1763 = vmatpush1.xpose.msra.mxu0 0.0
    %1764 = vmatprep.subr.mxu0 0.0
    %1765 = vmatpush1.xpose.msra.mxu0 0.0
    %1766 = vmatprep.subr.mxu0 0.0
    %1767 = vmatpush1.xpose.msra.mxu0 0.0
    %1768 = vmatprep.subr.mxu0 0.0
    %1769 = vmatpush1.xpose.msra.mxu0 0.0
    %1770 = vmatprep.subr.mxu0 0.0
    %1771 = vmatpush1.xpose.msra.mxu0 0.0
    %1772 = vmatprep.subr.mxu0 0.0
    %1773 = vmatpush1.xpose.msra.mxu0 0.0
    %1774 = vmatprep.subr.mxu0 0.0
    %1775 = vmatpush1.xpose.msra.mxu0 0.0
    %1776 = vmatprep.subr.mxu0 0.0
    %1777 = vmatpush1.xpose.msra.mxu0 0.0
    %1778 = vmatprep.subr.mxu0 0.0
    %1779 = vmatpush1.xpose.msra.mxu0 0.0
    %1780 = vmatprep.subr.mxu0 0.0
    %1781 = vmatpush1.xpose.msra.mxu0 0.0
    %1782 = vmatprep.subr.mxu0 0.0
    %1783 = vmatpush1.xpose.msra.mxu0 0.0
    %1784 = vmatprep.subr.mxu0 0.0
    %1785 = vmatpush1.xpose.msra.mxu0 0.0
    %1786 = vmatprep.subr.mxu0 0.0
    %1787 = vmatpush1.xpose.msra.mxu0 0.0
    %1788 = vmatprep.subr.mxu0 0.0
    %1789 = vmatpush1.xpose.msra.mxu0 0.0
    %1790 = vmatprep.subr.mxu0 0.0
    %1791 = vmatpush1.xpose.msra.mxu0 0.0
    %1792 = vmatprep.subr.mxu0 0.0
    %1793 = vmatpush1.xpose.msra.mxu0 0.0
    %1794 = vmatprep.subr.mxu0 0.0
    %1795 = vmatpush1.xpose.msra.mxu0 0.0
    %1796 = vmatprep.mubr.f32.mxu0 %v313
    %1797 = vmatmul.mubr.f32.gmra.mrb[0].mxu0 %v311
    %v1798 = vpop.f32.mrb[0].mxu0
    %v1799 = vadd.f32 %v1729, %v1798
    %v1800 = vpop.f32.mrb[0].mxu0
    %1801 = vdwg.mxu0
    %1802 = vmatprep.subr.mxu0 %v84
    %1803 = vmatpush1.xpose.msra.mxu0 %v83
    %1804 = vmatprep.subr.mxu0 0.0
    %1805 = vmatpush1.xpose.msra.mxu0 0.0
    %1806 = vmatprep.subr.mxu0 0.0
    %1807 = vmatpush1.xpose.msra.mxu0 0.0
    %1808 = vmatprep.subr.mxu0 0.0
    %1809 = vmatpush1.xpose.msra.mxu0 0.0
    %1810 = vmatprep.subr.mxu0 0.0
    %1811 = vmatpush1.xpose.msra.mxu0 0.0
    %1812 = vmatprep.subr.mxu0 0.0
    %1813 = vmatpush1.xpose.msra.mxu0 0.0
    %1814 = vmatprep.subr.mxu0 0.0
    %1815 = vmatpush1.xpose.msra.mxu0 0.0
    %1816 = vmatprep.subr.mxu0 0.0
    %1817 = vmatpush1.xpose.msra.mxu0 0.0
    %1818 = vmatprep.subr.mxu0 0.0
    %1819 = vmatpush1.xpose.msra.mxu0 0.0
    %1820 = vmatprep.subr.mxu0 0.0
    %1821 = vmatpush1.xpose.msra.mxu0 0.0
    %1822 = vmatprep.subr.mxu0 0.0
    %1823 = vmatpush1.xpose.msra.mxu0 0.0
    %1824 = vmatprep.subr.mxu0 0.0
    %1825 = vmatpush1.xpose.msra.mxu0 0.0
    %1826 = vmatprep.subr.mxu0 0.0
    %1827 = vmatpush1.xpose.msra.mxu0 0.0
    %1828 = vmatprep.subr.mxu0 0.0
    %1829 = vmatpush1.xpose.msra.mxu0 0.0
    %1830 = vmatprep.subr.mxu0 0.0
    %1831 = vmatpush1.xpose.msra.mxu0 0.0
    %1832 = vmatprep.subr.mxu0 0.0
    %1833 = vmatpush1.xpose.msra.mxu0 0.0
    %1834 = vmatprep.subr.mxu0 0.0
    %1835 = vmatpush1.xpose.msra.mxu0 0.0
    %1836 = vmatprep.subr.mxu0 0.0
    %1837 = vmatpush1.xpose.msra.mxu0 0.0
    %1838 = vmatprep.subr.mxu0 0.0
    %1839 = vmatpush1.xpose.msra.mxu0 0.0
    %1840 = vmatprep.subr.mxu0 0.0
    %1841 = vmatpush1.xpose.msra.mxu0 0.0
    %1842 = vmatprep.subr.mxu0 0.0
    %1843 = vmatpush1.xpose.msra.mxu0 0.0
    %1844 = vmatprep.subr.mxu0 0.0
    %1845 = vmatpush1.xpose.msra.mxu0 0.0
    %1846 = vmatprep.subr.mxu0 0.0
    %1847 = vmatpush1.xpose.msra.mxu0 0.0
    %1848 = vmatprep.subr.mxu0 0.0
    %1849 = vmatpush1.xpose.msra.mxu0 0.0
    %1850 = vmatprep.subr.mxu0 0.0
    %1851 = vmatpush1.xpose.msra.mxu0 0.0
    %1852 = vmatprep.subr.mxu0 0.0
    %1853 = vmatpush1.xpose.msra.mxu0 0.0
    %1854 = vmatprep.subr.mxu0 0.0
    %1855 = vmatpush1.xpose.msra.mxu0 0.0
    %1856 = vmatprep.subr.mxu0 0.0
    %1857 = vmatpush1.xpose.msra.mxu0 0.0
    %1858 = vmatprep.subr.mxu0 0.0
    %1859 = vmatpush1.xpose.msra.mxu0 0.0
    %1860 = vmatprep.subr.mxu0 0.0
    %1861 = vmatpush1.xpose.msra.mxu0 0.0
    %1862 = vmatprep.subr.mxu0 0.0
    %1863 = vmatpush1.xpose.msra.mxu0 0.0
    %1864 = vmatprep.subr.mxu0 0.0
    %1865 = vmatpush1.xpose.msra.mxu0 0.0
    %1866 = vmatprep.mubr.f32.mxu0 %v329
    %1867 = vmatmul.mubr.f32.gmra.mrb[0].mxu0 %v321
    %v1868 = vpop.f32.mrb[0].mxu0
    %v1869 = vadd.f32 %v1799, %v1868
    %v1870 = vpop.f32.mrb[0].mxu0
    %1871 = vdwg.mxu0
    %1872 = vmatprep.subr.mxu0 %v86
    %1873 = vmatpush1.xpose.msra.mxu0 %v85
    %1874 = vmatprep.subr.mxu0 0.0
    %1875 = vmatpush1.xpose.msra.mxu0 0.0
    %1876 = vmatprep.subr.mxu0 0.0
    %1877 = vmatpush1.xpose.msra.mxu0 0.0
    %1878 = vmatprep.subr.mxu0 0.0
    %1879 = vmatpush1.xpose.msra.mxu0 0.0
    %1880 = vmatprep.subr.mxu0 0.0
    %1881 = vmatpush1.xpose.msra.mxu0 0.0
    %1882 = vmatprep.subr.mxu0 0.0
    %1883 = vmatpush1.xpose.msra.mxu0 0.0
    %1884 = vmatprep.subr.mxu0 0.0
    %1885 = vmatpush1.xpose.msra.mxu0 0.0
    %1886 = vmatprep.subr.mxu0 0.0
    %1887 = vmatpush1.xpose.msra.mxu0 0.0
    %1888 = vmatprep.subr.mxu0 0.0
    %1889 = vmatpush1.xpose.msra.mxu0 0.0
    %1890 = vmatprep.subr.mxu0 0.0
    %1891 = vmatpush1.xpose.msra.mxu0 0.0
    %1892 = vmatprep.subr.mxu0 0.0
    %1893 = vmatpush1.xpose.msra.mxu0 0.0
    %1894 = vmatprep.subr.mxu0 0.0
    %1895 = vmatpush1.xpose.msra.mxu0 0.0
    %1896 = vmatprep.subr.mxu0 0.0
    %1897 = vmatpush1.xpose.msra.mxu0 0.0
    %1898 = vmatprep.subr.mxu0 0.0
    %1899 = vmatpush1.xpose.msra.mxu0 0.0
    %1900 = vmatprep.subr.mxu0 0.0
    %1901 = vmatpush1.xpose.msra.mxu0 0.0
    %1902 = vmatprep.subr.mxu0 0.0
    %1903 = vmatpush1.xpose.msra.mxu0 0.0
    %1904 = vmatprep.subr.mxu0 0.0
    %1905 = vmatpush1.xpose.msra.mxu0 0.0
    %1906 = vmatprep.subr.mxu0 0.0
    %1907 = vmatpush1.xpose.msra.mxu0 0.0
    %1908 = vmatprep.subr.mxu0 0.0
    %1909 = vmatpush1.xpose.msra.mxu0 0.0
    %1910 = vmatprep.subr.mxu0 0.0
    %1911 = vmatpush1.xpose.msra.mxu0 0.0
    %1912 = vmatprep.subr.mxu0 0.0
    %1913 = vmatpush1.xpose.msra.mxu0 0.0
    %1914 = vmatprep.subr.mxu0 0.0
    %1915 = vmatpush1.xpose.msra.mxu0 0.0
    %1916 = vmatprep.subr.mxu0 0.0
    %1917 = vmatpush1.xpose.msra.mxu0 0.0
    %1918 = vmatprep.subr.mxu0 0.0
    %1919 = vmatpush1.xpose.msra.mxu0 0.0
    %1920 = vmatprep.subr.mxu0 0.0
    %1921 = vmatpush1.xpose.msra.mxu0 0.0
    %1922 = vmatprep.subr.mxu0 0.0
    %1923 = vmatpush1.xpose.msra.mxu0 0.0
    %1924 = vmatprep.subr.mxu0 0.0
    %1925 = vmatpush1.xpose.msra.mxu0 0.0
    %1926 = vmatprep.subr.mxu0 0.0
    %1927 = vmatpush1.xpose.msra.mxu0 0.0
    %1928 = vmatprep.subr.mxu0 0.0
    %1929 = vmatpush1.xpose.msra.mxu0 0.0
    %1930 = vmatprep.subr.mxu0 0.0
    %1931 = vmatpush1.xpose.msra.mxu0 0.0
    %1932 = vmatprep.subr.mxu0 0.0
    %1933 = vmatpush1.xpose.msra.mxu0 0.0
    %1934 = vmatprep.subr.mxu0 0.0
    %1935 = vmatpush1.xpose.msra.mxu0 0.0
    %1936 = vmatprep.mubr.f32.mxu0 %v330
    %1937 = vmatmul.mubr.f32.gmra.mrb[0].mxu0 %v328
    %v1938 = vpop.f32.mrb[0].mxu0
    %v1939 = vadd.f32 %v1869, %v1938
    %v1940 = vpop.f32.mrb[0].mxu0
    %1941 = vdwg.mxu0
    %1942 = vmatprep.subr.mxu0 %v88
    %1943 = vmatpush1.xpose.msra.mxu0 %v87
    %1944 = vmatprep.subr.mxu0 0.0
    %1945 = vmatpush1.xpose.msra.mxu0 0.0
    %1946 = vmatprep.subr.mxu0 0.0
    %1947 = vmatpush1.xpose.msra.mxu0 0.0
    %1948 = vmatprep.subr.mxu0 0.0
    %1949 = vmatpush1.xpose.msra.mxu0 0.0
    %1950 = vmatprep.subr.mxu0 0.0
    %1951 = vmatpush1.xpose.msra.mxu0 0.0
    %1952 = vmatprep.subr.mxu0 0.0
    %1953 = vmatpush1.xpose.msra.mxu0 0.0
    %1954 = vmatprep.subr.mxu0 0.0
    %1955 = vmatpush1.xpose.msra.mxu0 0.0
    %1956 = vmatprep.subr.mxu0 0.0
    %1957 = vmatpush1.xpose.msra.mxu0 0.0
    %1958 = vmatprep.subr.mxu0 0.0
    %1959 = vmatpush1.xpose.msra.mxu0 0.0
    %1960 = vmatprep.subr.mxu0 0.0
    %1961 = vmatpush1.xpose.msra.mxu0 0.0
    %1962 = vmatprep.subr.mxu0 0.0
    %1963 = vmatpush1.xpose.msra.mxu0 0.0
    %1964 = vmatprep.subr.mxu0 0.0
    %1965 = vmatpush1.xpose.msra.mxu0 0.0
    %1966 = vmatprep.subr.mxu0 0.0
    %1967 = vmatpush1.xpose.msra.mxu0 0.0
    %1968 = vmatprep.subr.mxu0 0.0
    %1969 = vmatpush1.xpose.msra.mxu0 0.0
    %1970 = vmatprep.subr.mxu0 0.0
    %1971 = vmatpush1.xpose.msra.mxu0 0.0
    %1972 = vmatprep.subr.mxu0 0.0
    %1973 = vmatpush1.xpose.msra.mxu0 0.0
    %1974 = vmatprep.subr.mxu0 0.0
    %1975 = vmatpush1.xpose.msra.mxu0 0.0
    %1976 = vmatprep.subr.mxu0 0.0
    %1977 = vmatpush1.xpose.msra.mxu0 0.0
    %1978 = vmatprep.subr.mxu0 0.0
    %1979 = vmatpush1.xpose.msra.mxu0 0.0
    %1980 = vmatprep.subr.mxu0 0.0
    %1981 = vmatpush1.xpose.msra.mxu0 0.0
    %1982 = vmatprep.subr.mxu0 0.0
    %1983 = vmatpush1.xpose.msra.mxu0 0.0
    %1984 = vmatprep.subr.mxu0 0.0
    %1985 = vmatpush1.xpose.msra.mxu0 0.0
    %1986 = vmatprep.subr.mxu0 0.0
    %1987 = vmatpush1.xpose.msra.mxu0 0.0
    %1988 = vmatprep.subr.mxu0 0.0
    %1989 = vmatpush1.xpose.msra.mxu0 0.0
    %1990 = vmatprep.subr.mxu0 0.0
    %1991 = vmatpush1.xpose.msra.mxu0 0.0
    %1992 = vmatprep.subr.mxu0 0.0
    %1993 = vmatpush1.xpose.msra.mxu0 0.0
    %1994 = vmatprep.subr.mxu0 0.0
    %1995 = vmatpush1.xpose.msra.mxu0 0.0
    %1996 = vmatprep.subr.mxu0 0.0
    %1997 = vmatpush1.xpose.msra.mxu0 0.0
    %1998 = vmatprep.subr.mxu0 0.0
    %1999 = vmatpush1.xpose.msra.mxu0 0.0
    %2000 = vmatprep.subr.mxu0 0.0
    %2001 = vmatpush1.xpose.msra.mxu0 0.0
    %2002 = vmatprep.subr.mxu0 0.0
    %2003 = vmatpush1.xpose.msra.mxu0 0.0
    %2004 = vmatprep.subr.mxu0 0.0
    %2005 = vmatpush1.xpose.msra.mxu0 0.0
    %2006 = vmatprep.mubr.f32.mxu0 %v346
    %2007 = vmatmul.mubr.f32.gmra.mrb[0].mxu0 %v338
    %v2008 = vpop.f32.mrb[0].mxu0
    %v2009 = vadd.f32 %v1939, %v2008
    %v2010 = vpop.f32.mrb[0].mxu0
    %2011 = vdwg.mxu0
    %2012 = vmatprep.subr.mxu0 %v90
    %2013 = vmatpush1.xpose.msra.mxu0 %v89
    %2014 = vmatprep.subr.mxu0 0.0
    %2015 = vmatpush1.xpose.msra.mxu0 0.0
    %2016 = vmatprep.subr.mxu0 0.0
    %2017 = vmatpush1.xpose.msra.mxu0 0.0
    %2018 = vmatprep.subr.mxu0 0.0
    %2019 = vmatpush1.xpose.msra.mxu0 0.0
    %2020 = vmatprep.subr.mxu0 0.0
    %2021 = vmatpush1.xpose.msra.mxu0 0.0
    %2022 = vmatprep.subr.mxu0 0.0
    %2023 = vmatpush1.xpose.msra.mxu0 0.0
    %2024 = vmatprep.subr.mxu0 0.0
    %2025 = vmatpush1.xpose.msra.mxu0 0.0
    %2026 = vmatprep.subr.mxu0 0.0
    %2027 = vmatpush1.xpose.msra.mxu0 0.0
    %2028 = vmatprep.subr.mxu0 0.0
    %2029 = vmatpush1.xpose.msra.mxu0 0.0
    %2030 = vmatprep.subr.mxu0 0.0
    %2031 = vmatpush1.xpose.msra.mxu0 0.0
    %2032 = vmatprep.subr.mxu0 0.0
    %2033 = vmatpush1.xpose.msra.mxu0 0.0
    %2034 = vmatprep.subr.mxu0 0.0
    %2035 = vmatpush1.xpose.msra.mxu0 0.0
    %2036 = vmatprep.subr.mxu0 0.0
    %2037 = vmatpush1.xpose.msra.mxu0 0.0
    %2038 = vmatprep.subr.mxu0 0.0
    %2039 = vmatpush1.xpose.msra.mxu0 0.0
    %2040 = vmatprep.subr.mxu0 0.0
    %2041 = vmatpush1.xpose.msra.mxu0 0.0
    %2042 = vmatprep.subr.mxu0 0.0
    %2043 = vmatpush1.xpose.msra.mxu0 0.0
    %2044 = vmatprep.subr.mxu0 0.0
    %2045 = vmatpush1.xpose.msra.mxu0 0.0
    %2046 = vmatprep.subr.mxu0 0.0
    %2047 = vmatpush1.xpose.msra.mxu0 0.0
    %2048 = vmatprep.subr.mxu0 0.0
    %2049 = vmatpush1.xpose.msra.mxu0 0.0
    %2050 = vmatprep.subr.mxu0 0.0
    %2051 = vmatpush1.xpose.msra.mxu0 0.0
    %2052 = vmatprep.subr.mxu0 0.0
    %2053 = vmatpush1.xpose.msra.mxu0 0.0
    %2054 = vmatprep.subr.mxu0 0.0
    %2055 = vmatpush1.xpose.msra.mxu0 0.0
    %2056 = vmatprep.subr.mxu0 0.0
    %2057 = vmatpush1.xpose.msra.mxu0 0.0
    %2058 = vmatprep.subr.mxu0 0.0
    %2059 = vmatpush1.xpose.msra.mxu0 0.0
    %2060 = vmatprep.subr.mxu0 0.0
    %2061 = vmatpush1.xpose.msra.mxu0 0.0
    %2062 = vmatprep.subr.mxu0 0.0
    %2063 = vmatpush1.xpose.msra.mxu0 0.0
    %2064 = vmatprep.subr.mxu0 0.0
    %2065 = vmatpush1.xpose.msra.mxu0 0.0
    %2066 = vmatprep.subr.mxu0 0.0
    %2067 = vmatpush1.xpose.msra.mxu0 0.0
    %2068 = vmatprep.subr.mxu0 0.0
    %2069 = vmatpush1.xpose.msra.mxu0 0.0
    %2070 = vmatprep.subr.mxu0 0.0
    %2071 = vmatpush1.xpose.msra.mxu0 0.0
    %2072 = vmatprep.subr.mxu0 0.0
    %2073 = vmatpush1.xpose.msra.mxu0 0.0
    %2074 = vmatprep.subr.mxu0 0.0
    %2075 = vmatpush1.xpose.msra.mxu0 0.0
    %2076 = vmatprep.mubr.f32.mxu0 %v347
    %2077 = vmatmul.mubr.f32.gmra.mrb[0].mxu0 %v345
    %v2078 = vpop.f32.mrb[0].mxu0
    %v2079 = vadd.f32 %v2009, %v2078
    %v2080 = vpop.f32.mrb[0].mxu0
    %2081 = vdwg.mxu0
    %2082 = vmatprep.subr.mxu0 %v92
    %2083 = vmatpush1.xpose.msra.mxu0 %v91
    %2084 = vmatprep.subr.mxu0 0.0
    %2085 = vmatpush1.xpose.msra.mxu0 0.0
    %2086 = vmatprep.subr.mxu0 0.0
    %2087 = vmatpush1.xpose.msra.mxu0 0.0
    %2088 = vmatprep.subr.mxu0 0.0
    %2089 = vmatpush1.xpose.msra.mxu0 0.0
    %2090 = vmatprep.subr.mxu0 0.0
    %2091 = vmatpush1.xpose.msra.mxu0 0.0
    %2092 = vmatprep.subr.mxu0 0.0
    %2093 = vmatpush1.xpose.msra.mxu0 0.0
    %2094 = vmatprep.subr.mxu0 0.0
    %2095 = vmatpush1.xpose.msra.mxu0 0.0
    %2096 = vmatprep.subr.mxu0 0.0
    %2097 = vmatpush1.xpose.msra.mxu0 0.0
    %2098 = vmatprep.subr.mxu0 0.0
    %2099 = vmatpush1.xpose.msra.mxu0 0.0
    %2100 = vmatprep.subr.mxu0 0.0
    %2101 = vmatpush1.xpose.msra.mxu0 0.0
    %2102 = vmatprep.subr.mxu0 0.0
    %2103 = vmatpush1.xpose.msra.mxu0 0.0
    %2104 = vmatprep.subr.mxu0 0.0
    %2105 = vmatpush1.xpose.msra.mxu0 0.0
    %2106 = vmatprep.subr.mxu0 0.0
    %2107 = vmatpush1.xpose.msra.mxu0 0.0
    %2108 = vmatprep.subr.mxu0 0.0
    %2109 = vmatpush1.xpose.msra.mxu0 0.0
    %2110 = vmatprep.subr.mxu0 0.0
    %2111 = vmatpush1.xpose.msra.mxu0 0.0
    %2112 = vmatprep.subr.mxu0 0.0
    %2113 = vmatpush1.xpose.msra.mxu0 0.0
    %2114 = vmatprep.subr.mxu0 0.0
    %2115 = vmatpush1.xpose.msra.mxu0 0.0
    %2116 = vmatprep.subr.mxu0 0.0
    %2117 = vmatpush1.xpose.msra.mxu0 0.0
    %2118 = vmatprep.subr.mxu0 0.0
    %2119 = vmatpush1.xpose.msra.mxu0 0.0
    %2120 = vmatprep.subr.mxu0 0.0
    %2121 = vmatpush1.xpose.msra.mxu0 0.0
    %2122 = vmatprep.subr.mxu0 0.0
    %2123 = vmatpush1.xpose.msra.mxu0 0.0
    %2124 = vmatprep.subr.mxu0 0.0
    %2125 = vmatpush1.xpose.msra.mxu0 0.0
    %2126 = vmatprep.subr.mxu0 0.0
    %2127 = vmatpush1.xpose.msra.mxu0 0.0
    %2128 = vmatprep.subr.mxu0 0.0
    %2129 = vmatpush1.xpose.msra.mxu0 0.0
    %2130 = vmatprep.subr.mxu0 0.0
    %2131 = vmatpush1.xpose.msra.mxu0 0.0
    %2132 = vmatprep.subr.mxu0 0.0
    %2133 = vmatpush1.xpose.msra.mxu0 0.0
    %2134 = vmatprep.subr.mxu0 0.0
    %2135 = vmatpush1.xpose.msra.mxu0 0.0
    %2136 = vmatprep.subr.mxu0 0.0
    %2137 = vmatpush1.xpose.msra.mxu0 0.0
    %2138 = vmatprep.subr.mxu0 0.0
    %2139 = vmatpush1.xpose.msra.mxu0 0.0
    %2140 = vmatprep.subr.mxu0 0.0
    %2141 = vmatpush1.xpose.msra.mxu0 0.0
    %2142 = vmatprep.subr.mxu0 0.0
    %2143 = vmatpush1.xpose.msra.mxu0 0.0
    %2144 = vmatprep.subr.mxu0 0.0
    %2145 = vmatpush1.xpose.msra.mxu0 0.0
    %2146 = vmatprep.mubr.f32.mxu0 %v363
    %2147 = vmatmul.mubr.f32.gmra.mrb[0].mxu0 %v355
    %v2148 = vpop.f32.mrb[0].mxu0
    %v2149 = vadd.f32 %v2079, %v2148
    %v2150 = vpop.f32.mrb[0].mxu0
    %2151 = vdwg.mxu0
    %2152 = vmatprep.subr.mxu0 %v94
    %2153 = vmatpush1.xpose.msra.mxu0 %v93
    %2154 = vmatprep.subr.mxu0 0.0
    %2155 = vmatpush1.xpose.msra.mxu0 0.0
    %2156 = vmatprep.subr.mxu0 0.0
    %2157 = vmatpush1.xpose.msra.mxu0 0.0
    %2158 = vmatprep.subr.mxu0 0.0
    %2159 = vmatpush1.xpose.msra.mxu0 0.0
    %2160 = vmatprep.subr.mxu0 0.0
    %2161 = vmatpush1.xpose.msra.mxu0 0.0
    %2162 = vmatprep.subr.mxu0 0.0
    %2163 = vmatpush1.xpose.msra.mxu0 0.0
    %2164 = vmatprep.subr.mxu0 0.0
    %2165 = vmatpush1.xpose.msra.mxu0 0.0
    %2166 = vmatprep.subr.mxu0 0.0
    %2167 = vmatpush1.xpose.msra.mxu0 0.0
    %2168 = vmatprep.subr.mxu0 0.0
    %2169 = vmatpush1.xpose.msra.mxu0 0.0
    %2170 = vmatprep.subr.mxu0 0.0
    %2171 = vmatpush1.xpose.msra.mxu0 0.0
    %2172 = vmatprep.subr.mxu0 0.0
    %2173 = vmatpush1.xpose.msra.mxu0 0.0
    %2174 = vmatprep.subr.mxu0 0.0
    %2175 = vmatpush1.xpose.msra.mxu0 0.0
    %2176 = vmatprep.subr.mxu0 0.0
    %2177 = vmatpush1.xpose.msra.mxu0 0.0
    %2178 = vmatprep.subr.mxu0 0.0
    %2179 = vmatpush1.xpose.msra.mxu0 0.0
    %2180 = vmatprep.subr.mxu0 0.0
    %2181 = vmatpush1.xpose.msra.mxu0 0.0
    %2182 = vmatprep.subr.mxu0 0.0
    %2183 = vmatpush1.xpose.msra.mxu0 0.0
    %2184 = vmatprep.subr.mxu0 0.0
    %2185 = vmatpush1.xpose.msra.mxu0 0.0
    %2186 = vmatprep.subr.mxu0 0.0
    %2187 = vmatpush1.xpose.msra.mxu0 0.0
    %2188 = vmatprep.subr.mxu0 0.0
    %2189 = vmatpush1.xpose.msra.mxu0 0.0
    %2190 = vmatprep.subr.mxu0 0.0
    %2191 = vmatpush1.xpose.msra.mxu0 0.0
    %2192 = vmatprep.subr.mxu0 0.0
    %2193 = vmatpush1.xpose.msra.mxu0 0.0
    %2194 = vmatprep.subr.mxu0 0.0
    %2195 = vmatpush1.xpose.msra.mxu0 0.0
    %2196 = vmatprep.subr.mxu0 0.0
    %2197 = vmatpush1.xpose.msra.mxu0 0.0
    %2198 = vmatprep.subr.mxu0 0.0
    %2199 = vmatpush1.xpose.msra.mxu0 0.0
    %2200 = vmatprep.subr.mxu0 0.0
    %2201 = vmatpush1.xpose.msra.mxu0 0.0
    %2202 = vmatprep.subr.mxu0 0.0
    %2203 = vmatpush1.xpose.msra.mxu0 0.0
    %2204 = vmatprep.subr.mxu0 0.0
    %2205 = vmatpush1.xpose.msra.mxu0 0.0
    %2206 = vmatprep.subr.mxu0 0.0
    %2207 = vmatpush1.xpose.msra.mxu0 0.0
    %2208 = vmatprep.subr.mxu0 0.0
    %2209 = vmatpush1.xpose.msra.mxu0 0.0
    %2210 = vmatprep.subr.mxu0 0.0
    %2211 = vmatpush1.xpose.msra.mxu0 0.0
    %2212 = vmatprep.subr.mxu0 0.0
    %2213 = vmatpush1.xpose.msra.mxu0 0.0
    %2214 = vmatprep.subr.mxu0 0.0
    %2215 = vmatpush1.xpose.msra.mxu0 0.0
    %2216 = vmatprep.mubr.f32.mxu0 %v364
    %2217 = vmatmul.mubr.f32.gmra.mrb[0].mxu0 %v362
    %v2218 = vpop.f32.mrb[0].mxu0
    %v2219 = vadd.f32 %v2149, %v2218
    %v2220 = vpop.f32.mrb[0].mxu0
    %2221 = vdwg.mxu0
    %2222 = vmatprep.subr.mxu0 %v96
    %2223 = vmatpush1.xpose.msra.mxu0 %v95
    %2224 = vmatprep.subr.mxu0 0.0
    %2225 = vmatpush1.xpose.msra.mxu0 0.0
    %2226 = vmatprep.subr.mxu0 0.0
    %2227 = vmatpush1.xpose.msra.mxu0 0.0
    %2228 = vmatprep.subr.mxu0 0.0
    %2229 = vmatpush1.xpose.msra.mxu0 0.0
    %2230 = vmatprep.subr.mxu0 0.0
    %2231 = vmatpush1.xpose.msra.mxu0 0.0
    %2232 = vmatprep.subr.mxu0 0.0
    %2233 = vmatpush1.xpose.msra.mxu0 0.0
    %2234 = vmatprep.subr.mxu0 0.0
    %2235 = vmatpush1.xpose.msra.mxu0 0.0
    %2236 = vmatprep.subr.mxu0 0.0
    %2237 = vmatpush1.xpose.msra.mxu0 0.0
    %2238 = vmatprep.subr.mxu0 0.0
    %2239 = vmatpush1.xpose.msra.mxu0 0.0
    %2240 = vmatprep.subr.mxu0 0.0
    %2241 = vmatpush1.xpose.msra.mxu0 0.0
    %2242 = vmatprep.subr.mxu0 0.0
    %2243 = vmatpush1.xpose.msra.mxu0 0.0
    %2244 = vmatprep.subr.mxu0 0.0
    %2245 = vmatpush1.xpose.msra.mxu0 0.0
    %2246 = vmatprep.subr.mxu0 0.0
    %2247 = vmatpush1.xpose.msra.mxu0 0.0
    %2248 = vmatprep.subr.mxu0 0.0
    %2249 = vmatpush1.xpose.msra.mxu0 0.0
    %2250 = vmatprep.subr.mxu0 0.0
    %2251 = vmatpush1.xpose.msra.mxu0 0.0
    %2252 = vmatprep.subr.mxu0 0.0
    %2253 = vmatpush1.xpose.msra.mxu0 0.0
    %2254 = vmatprep.subr.mxu0 0.0
    %2255 = vmatpush1.xpose.msra.mxu0 0.0
    %2256 = vmatprep.subr.mxu0 0.0
    %2257 = vmatpush1.xpose.msra.mxu0 0.0
    %2258 = vmatprep.subr.mxu0 0.0
    %2259 = vmatpush1.xpose.msra.mxu0 0.0
    %2260 = vmatprep.subr.mxu0 0.0
    %2261 = vmatpush1.xpose.msra.mxu0 0.0
    %2262 = vmatprep.subr.mxu0 0.0
    %2263 = vmatpush1.xpose.msra.mxu0 0.0
    %2264 = vmatprep.subr.mxu0 0.0
    %2265 = vmatpush1.xpose.msra.mxu0 0.0
    %2266 = vmatprep.subr.mxu0 0.0
    %2267 = vmatpush1.xpose.msra.mxu0 0.0
    %2268 = vmatprep.subr.mxu0 0.0
    %2269 = vmatpush1.xpose.msra.mxu0 0.0
    %2270 = vmatprep.subr.mxu0 0.0
    %2271 = vmatpush1.xpose.msra.mxu0 0.0
    %2272 = vmatprep.subr.mxu0 0.0
    %2273 = vmatpush1.xpose.msra.mxu0 0.0
    %2274 = vmatprep.subr.mxu0 0.0
    %2275 = vmatpush1.xpose.msra.mxu0 0.0
    %2276 = vmatprep.subr.mxu0 0.0
    %2277 = vmatpush1.xpose.msra.mxu0 0.0
    %2278 = vmatprep.subr.mxu0 0.0
    %2279 = vmatpush1.xpose.msra.mxu0 0.0
    %2280 = vmatprep.subr.mxu0 0.0
    %2281 = vmatpush1.xpose.msra.mxu0 0.0
    %2282 = vmatprep.subr.mxu0 0.0
    %2283 = vmatpush1.xpose.msra.mxu0 0.0
    %2284 = vmatprep.subr.mxu0 0.0
    %2285 = vmatpush1.xpose.msra.mxu0 0.0
    %2286 = vmatprep.mubr.f32.mxu0 %v380
    %2287 = vmatmul.mubr.f32.gmra.mrb[0].mxu0 %v372
    %v2288 = vpop.f32.mrb[0].mxu0
    %v2289 = vadd.f32 %v2219, %v2288
    %v2290 = vpop.f32.mrb[0].mxu0
    %2291 = vdwg.mxu0
    %2292 = vmatprep.subr.mxu0 %v98
    %2293 = vmatpush1.xpose.msra.mxu0 %v97
    %2294 = vmatprep.subr.mxu0 0.0
    %2295 = vmatpush1.xpose.msra.mxu0 0.0
    %2296 = vmatprep.subr.mxu0 0.0
    %2297 = vmatpush1.xpose.msra.mxu0 0.0
    %2298 = vmatprep.subr.mxu0 0.0
    %2299 = vmatpush1.xpose.msra.mxu0 0.0
    %2300 = vmatprep.subr.mxu0 0.0
    %2301 = vmatpush1.xpose.msra.mxu0 0.0
    %2302 = vmatprep.subr.mxu0 0.0
    %2303 = vmatpush1.xpose.msra.mxu0 0.0
    %2304 = vmatprep.subr.mxu0 0.0
    %2305 = vmatpush1.xpose.msra.mxu0 0.0
    %2306 = vmatprep.subr.mxu0 0.0
    %2307 = vmatpush1.xpose.msra.mxu0 0.0
    %2308 = vmatprep.subr.mxu0 0.0
    %2309 = vmatpush1.xpose.msra.mxu0 0.0
    %2310 = vmatprep.subr.mxu0 0.0
    %2311 = vmatpush1.xpose.msra.mxu0 0.0
    %2312 = vmatprep.subr.mxu0 0.0
    %2313 = vmatpush1.xpose.msra.mxu0 0.0
    %2314 = vmatprep.subr.mxu0 0.0
    %2315 = vmatpush1.xpose.msra.mxu0 0.0
    %2316 = vmatprep.subr.mxu0 0.0
    %2317 = vmatpush1.xpose.msra.mxu0 0.0
    %2318 = vmatprep.subr.mxu0 0.0
    %2319 = vmatpush1.xpose.msra.mxu0 0.0
    %2320 = vmatprep.subr.mxu0 0.0
    %2321 = vmatpush1.xpose.msra.mxu0 0.0
    %2322 = vmatprep.subr.mxu0 0.0
    %2323 = vmatpush1.xpose.msra.mxu0 0.0
    %2324 = vmatprep.subr.mxu0 0.0
    %2325 = vmatpush1.xpose.msra.mxu0 0.0
    %2326 = vmatprep.subr.mxu0 0.0
    %2327 = vmatpush1.xpose.msra.mxu0 0.0
    %2328 = vmatprep.subr.mxu0 0.0
    %2329 = vmatpush1.xpose.msra.mxu0 0.0
    %2330 = vmatprep.subr.mxu0 0.0
    %2331 = vmatpush1.xpose.msra.mxu0 0.0
    %2332 = vmatprep.subr.mxu0 0.0
    %2333 = vmatpush1.xpose.msra.mxu0 0.0
    %2334 = vmatprep.subr.mxu0 0.0
    %2335 = vmatpush1.xpose.msra.mxu0 0.0
    %2336 = vmatprep.subr.mxu0 0.0
    %2337 = vmatpush1.xpose.msra.mxu0 0.0
    %2338 = vmatprep.subr.mxu0 0.0
    %2339 = vmatpush1.xpose.msra.mxu0 0.0
    %2340 = vmatprep.subr.mxu0 0.0
    %2341 = vmatpush1.xpose.msra.mxu0 0.0
    %2342 = vmatprep.subr.mxu0 0.0
    %2343 = vmatpush1.xpose.msra.mxu0 0.0
    %2344 = vmatprep.subr.mxu0 0.0
    %2345 = vmatpush1.xpose.msra.mxu0 0.0
    %2346 = vmatprep.subr.mxu0 0.0
    %2347 = vmatpush1.xpose.msra.mxu0 0.0
    %2348 = vmatprep.subr.mxu0 0.0
    %2349 = vmatpush1.xpose.msra.mxu0 0.0
    %2350 = vmatprep.subr.mxu0 0.0
    %2351 = vmatpush1.xpose.msra.mxu0 0.0
    %2352 = vmatprep.subr.mxu0 0.0
    %2353 = vmatpush1.xpose.msra.mxu0 0.0
    %2354 = vmatprep.subr.mxu0 0.0
    %2355 = vmatpush1.xpose.msra.mxu0 0.0
    %2356 = vmatprep.mubr.f32.mxu0 %v381
    %2357 = vmatmul.mubr.f32.gmra.mrb[0].mxu0 %v379
    %v2358 = vpop.f32.mrb[0].mxu0
    %v2359 = vadd.f32 %v2289, %v2358
    %v2360 = vpop.f32.mrb[0].mxu0
    %2361 = vdwg.mxu0
    %2362 = vmatprep.subr.mxu0 %v100
    %2363 = vmatpush1.xpose.msra.mxu0 %v99
    %2364 = vmatprep.subr.mxu0 0.0
    %2365 = vmatpush1.xpose.msra.mxu0 0.0
    %2366 = vmatprep.subr.mxu0 0.0
    %2367 = vmatpush1.xpose.msra.mxu0 0.0
    %2368 = vmatprep.subr.mxu0 0.0
    %2369 = vmatpush1.xpose.msra.mxu0 0.0
    %2370 = vmatprep.subr.mxu0 0.0
    %2371 = vmatpush1.xpose.msra.mxu0 0.0
    %2372 = vmatprep.subr.mxu0 0.0
    %2373 = vmatpush1.xpose.msra.mxu0 0.0
    %2374 = vmatprep.subr.mxu0 0.0
    %2375 = vmatpush1.xpose.msra.mxu0 0.0
    %2376 = vmatprep.subr.mxu0 0.0
    %2377 = vmatpush1.xpose.msra.mxu0 0.0
    %2378 = vmatprep.subr.mxu0 0.0
    %2379 = vmatpush1.xpose.msra.mxu0 0.0
    %2380 = vmatprep.subr.mxu0 0.0
    %2381 = vmatpush1.xpose.msra.mxu0 0.0
    %2382 = vmatprep.subr.mxu0 0.0
    %2383 = vmatpush1.xpose.msra.mxu0 0.0
    %2384 = vmatprep.subr.mxu0 0.0
    %2385 = vmatpush1.xpose.msra.mxu0 0.0
    %2386 = vmatprep.subr.mxu0 0.0
    %2387 = vmatpush1.xpose.msra.mxu0 0.0
    %2388 = vmatprep.subr.mxu0 0.0
    %2389 = vmatpush1.xpose.msra.mxu0 0.0
    %2390 = vmatprep.subr.mxu0 0.0
    %2391 = vmatpush1.xpose.msra.mxu0 0.0
    %2392 = vmatprep.subr.mxu0 0.0
    %2393 = vmatpush1.xpose.msra.mxu0 0.0
    %2394 = vmatprep.subr.mxu0 0.0
    %2395 = vmatpush1.xpose.msra.mxu0 0.0
    %2396 = vmatprep.subr.mxu0 0.0
    %2397 = vmatpush1.xpose.msra.mxu0 0.0
    %2398 = vmatprep.subr.mxu0 0.0
    %2399 = vmatpush1.xpose.msra.mxu0 0.0
    %2400 = vmatprep.subr.mxu0 0.0
    %2401 = vmatpush1.xpose.msra.mxu0 0.0
    %2402 = vmatprep.subr.mxu0 0.0
    %2403 = vmatpush1.xpose.msra.mxu0 0.0
    %2404 = vmatprep.subr.mxu0 0.0
    %2405 = vmatpush1.xpose.msra.mxu0 0.0
    %2406 = vmatprep.subr.mxu0 0.0
    %2407 = vmatpush1.xpose.msra.mxu0 0.0
    %2408 = vmatprep.subr.mxu0 0.0
    %2409 = vmatpush1.xpose.msra.mxu0 0.0
    %2410 = vmatprep.subr.mxu0 0.0
    %2411 = vmatpush1.xpose.msra.mxu0 0.0
    %2412 = vmatprep.subr.mxu0 0.0
    %2413 = vmatpush1.xpose.msra.mxu0 0.0
    %2414 = vmatprep.subr.mxu0 0.0
    %2415 = vmatpush1.xpose.msra.mxu0 0.0
    %2416 = vmatprep.subr.mxu0 0.0
    %2417 = vmatpush1.xpose.msra.mxu0 0.0
    %2418 = vmatprep.subr.mxu0 0.0
    %2419 = vmatpush1.xpose.msra.mxu0 0.0
    %2420 = vmatprep.subr.mxu0 0.0
    %2421 = vmatpush1.xpose.msra.mxu0 0.0
    %2422 = vmatprep.subr.mxu0 0.0
    %2423 = vmatpush1.xpose.msra.mxu0 0.0
    %2424 = vmatprep.subr.mxu0 0.0
    %2425 = vmatpush1.xpose.msra.mxu0 0.0
    %2426 = vmatprep.mubr.f32.mxu0 %v397
    %2427 = vmatmul.mubr.f32.gmra.mrb[0].mxu0 %v389
    %v2428 = vpop.f32.mrb[0].mxu0
    %v2429 = vadd.f32 %v2359, %v2428
    %v2430 = vpop.f32.mrb[0].mxu0
    %2431 = vdwg.mxu0
    %2432 = vmatprep.subr.mxu0 %v102
    %2433 = vmatpush1.xpose.msra.mxu0 %v101
    %2434 = vmatprep.subr.mxu0 0.0
    %2435 = vmatpush1.xpose.msra.mxu0 0.0
    %2436 = vmatprep.subr.mxu0 0.0
    %2437 = vmatpush1.xpose.msra.mxu0 0.0
    %2438 = vmatprep.subr.mxu0 0.0
    %2439 = vmatpush1.xpose.msra.mxu0 0.0
    %2440 = vmatprep.subr.mxu0 0.0
    %2441 = vmatpush1.xpose.msra.mxu0 0.0
    %2442 = vmatprep.subr.mxu0 0.0
    %2443 = vmatpush1.xpose.msra.mxu0 0.0
    %2444 = vmatprep.subr.mxu0 0.0
    %2445 = vmatpush1.xpose.msra.mxu0 0.0
    %2446 = vmatprep.subr.mxu0 0.0
    %2447 = vmatpush1.xpose.msra.mxu0 0.0
    %2448 = vmatprep.subr.mxu0 0.0
    %2449 = vmatpush1.xpose.msra.mxu0 0.0
    %2450 = vmatprep.subr.mxu0 0.0
    %2451 = vmatpush1.xpose.msra.mxu0 0.0
    %2452 = vmatprep.subr.mxu0 0.0
    %2453 = vmatpush1.xpose.msra.mxu0 0.0
    %2454 = vmatprep.subr.mxu0 0.0
    %2455 = vmatpush1.xpose.msra.mxu0 0.0
    %2456 = vmatprep.subr.mxu0 0.0
    %2457 = vmatpush1.xpose.msra.mxu0 0.0
    %2458 = vmatprep.subr.mxu0 0.0
    %2459 = vmatpush1.xpose.msra.mxu0 0.0
    %2460 = vmatprep.subr.mxu0 0.0
    %2461 = vmatpush1.xpose.msra.mxu0 0.0
    %2462 = vmatprep.subr.mxu0 0.0
    %2463 = vmatpush1.xpose.msra.mxu0 0.0
    %2464 = vmatprep.subr.mxu0 0.0
    %2465 = vmatpush1.xpose.msra.mxu0 0.0
    %2466 = vmatprep.subr.mxu0 0.0
    %2467 = vmatpush1.xpose.msra.mxu0 0.0
    %2468 = vmatprep.subr.mxu0 0.0
    %2469 = vmatpush1.xpose.msra.mxu0 0.0
    %2470 = vmatprep.subr.mxu0 0.0
    %2471 = vmatpush1.xpose.msra.mxu0 0.0
    %2472 = vmatprep.subr.mxu0 0.0
    %2473 = vmatpush1.xpose.msra.mxu0 0.0
    %2474 = vmatprep.subr.mxu0 0.0
    %2475 = vmatpush1.xpose.msra.mxu0 0.0
    %2476 = vmatprep.subr.mxu0 0.0
    %2477 = vmatpush1.xpose.msra.mxu0 0.0
    %2478 = vmatprep.subr.mxu0 0.0
    %2479 = vmatpush1.xpose.msra.mxu0 0.0
    %2480 = vmatprep.subr.mxu0 0.0
    %2481 = vmatpush1.xpose.msra.mxu0 0.0
    %2482 = vmatprep.subr.mxu0 0.0
    %2483 = vmatpush1.xpose.msra.mxu0 0.0
    %2484 = vmatprep.subr.mxu0 0.0
    %2485 = vmatpush1.xpose.msra.mxu0 0.0
    %2486 = vmatprep.subr.mxu0 0.0
    %2487 = vmatpush1.xpose.msra.mxu0 0.0
    %2488 = vmatprep.subr.mxu0 0.0
    %2489 = vmatpush1.xpose.msra.mxu0 0.0
    %2490 = vmatprep.subr.mxu0 0.0
    %2491 = vmatpush1.xpose.msra.mxu0 0.0
    %2492 = vmatprep.subr.mxu0 0.0
    %2493 = vmatpush1.xpose.msra.mxu0 0.0
    %2494 = vmatprep.subr.mxu0 0.0
    %2495 = vmatpush1.xpose.msra.mxu0 0.0
    %2496 = vmatprep.mubr.f32.mxu0 %v398
    %2497 = vmatmul.mubr.f32.gmra.mrb[0].mxu0 %v396
    %v2498 = vpop.f32.mrb[0].mxu0
    %v2499 = vadd.f32 %v2429, %v2498
    %v2500 = vpop.f32.mrb[0].mxu0
    %2501 = vdwg.mxu0
    %2502 = vmatprep.subr.mxu0 %v104
    %2503 = vmatpush1.xpose.msra.mxu0 %v103
    %2504 = vmatprep.subr.mxu0 0.0
    %2505 = vmatpush1.xpose.msra.mxu0 0.0
    %2506 = vmatprep.subr.mxu0 0.0
    %2507 = vmatpush1.xpose.msra.mxu0 0.0
    %2508 = vmatprep.subr.mxu0 0.0
    %2509 = vmatpush1.xpose.msra.mxu0 0.0
    %2510 = vmatprep.subr.mxu0 0.0
    %2511 = vmatpush1.xpose.msra.mxu0 0.0
    %2512 = vmatprep.subr.mxu0 0.0
    %2513 = vmatpush1.xpose.msra.mxu0 0.0
    %2514 = vmatprep.subr.mxu0 0.0
    %2515 = vmatpush1.xpose.msra.mxu0 0.0
    %2516 = vmatprep.subr.mxu0 0.0
    %2517 = vmatpush1.xpose.msra.mxu0 0.0
    %2518 = vmatprep.subr.mxu0 0.0
    %2519 = vmatpush1.xpose.msra.mxu0 0.0
    %2520 = vmatprep.subr.mxu0 0.0
    %2521 = vmatpush1.xpose.msra.mxu0 0.0
    %2522 = vmatprep.subr.mxu0 0.0
    %2523 = vmatpush1.xpose.msra.mxu0 0.0
    %2524 = vmatprep.subr.mxu0 0.0
    %2525 = vmatpush1.xpose.msra.mxu0 0.0
    %2526 = vmatprep.subr.mxu0 0.0
    %2527 = vmatpush1.xpose.msra.mxu0 0.0
    %2528 = vmatprep.subr.mxu0 0.0
    %2529 = vmatpush1.xpose.msra.mxu0 0.0
    %2530 = vmatprep.subr.mxu0 0.0
    %2531 = vmatpush1.xpose.msra.mxu0 0.0
    %2532 = vmatprep.subr.mxu0 0.0
    %2533 = vmatpush1.xpose.msra.mxu0 0.0
    %2534 = vmatprep.subr.mxu0 0.0
    %2535 = vmatpush1.xpose.msra.mxu0 0.0
    %2536 = vmatprep.subr.mxu0 0.0
    %2537 = vmatpush1.xpose.msra.mxu0 0.0
    %2538 = vmatprep.subr.mxu0 0.0
    %2539 = vmatpush1.xpose.msra.mxu0 0.0
    %2540 = vmatprep.subr.mxu0 0.0
    %2541 = vmatpush1.xpose.msra.mxu0 0.0
    %2542 = vmatprep.subr.mxu0 0.0
    %2543 = vmatpush1.xpose.msra.mxu0 0.0
    %2544 = vmatprep.subr.mxu0 0.0
    %2545 = vmatpush1.xpose.msra.mxu0 0.0
    %2546 = vmatprep.subr.mxu0 0.0
    %2547 = vmatpush1.xpose.msra.mxu0 0.0
    %2548 = vmatprep.subr.mxu0 0.0
    %2549 = vmatpush1.xpose.msra.mxu0 0.0
    %2550 = vmatprep.subr.mxu0 0.0
    %2551 = vmatpush1.xpose.msra.mxu0 0.0
    %2552 = vmatprep.subr.mxu0 0.0
    %2553 = vmatpush1.xpose.msra.mxu0 0.0
    %2554 = vmatprep.subr.mxu0 0.0
    %2555 = vmatpush1.xpose.msra.mxu0 0.0
    %2556 = vmatprep.subr.mxu0 0.0
    %2557 = vmatpush1.xpose.msra.mxu0 0.0
    %2558 = vmatprep.subr.mxu0 0.0
    %2559 = vmatpush1.xpose.msra.mxu0 0.0
    %2560 = vmatprep.subr.mxu0 0.0
    %2561 = vmatpush1.xpose.msra.mxu0 0.0
    %2562 = vmatprep.subr.mxu0 0.0
    %2563 = vmatpush1.xpose.msra.mxu0 0.0
    %2564 = vmatprep.subr.mxu0 0.0
    %2565 = vmatpush1.xpose.msra.mxu0 0.0
    %2566 = vmatprep.mubr.f32.mxu0 %v414
    %2567 = vmatmul.mubr.f32.gmra.mrb[0].mxu0 %v406
    %v2568 = vpop.f32.mrb[0].mxu0
    %v2569 = vadd.f32 %v2499, %v2568
    %v2570 = vpop.f32.mrb[0].mxu0
    %2571 = vdwg.mxu0
    %2572 = vmatprep.subr.mxu0 %v106
    %2573 = vmatpush1.xpose.msra.mxu0 %v105
    %2574 = vmatprep.subr.mxu0 0.0
    %2575 = vmatpush1.xpose.msra.mxu0 0.0
    %2576 = vmatprep.subr.mxu0 0.0
    %2577 = vmatpush1.xpose.msra.mxu0 0.0
    %2578 = vmatprep.subr.mxu0 0.0
    %2579 = vmatpush1.xpose.msra.mxu0 0.0
    %2580 = vmatprep.subr.mxu0 0.0
    %2581 = vmatpush1.xpose.msra.mxu0 0.0
    %2582 = vmatprep.subr.mxu0 0.0
    %2583 = vmatpush1.xpose.msra.mxu0 0.0
    %2584 = vmatprep.subr.mxu0 0.0
    %2585 = vmatpush1.xpose.msra.mxu0 0.0
    %2586 = vmatprep.subr.mxu0 0.0
    %2587 = vmatpush1.xpose.msra.mxu0 0.0
    %2588 = vmatprep.subr.mxu0 0.0
    %2589 = vmatpush1.xpose.msra.mxu0 0.0
    %2590 = vmatprep.subr.mxu0 0.0
    %2591 = vmatpush1.xpose.msra.mxu0 0.0
    %2592 = vmatprep.subr.mxu0 0.0
    %2593 = vmatpush1.xpose.msra.mxu0 0.0
    %2594 = vmatprep.subr.mxu0 0.0
    %2595 = vmatpush1.xpose.msra.mxu0 0.0
    %2596 = vmatprep.subr.mxu0 0.0
    %2597 = vmatpush1.xpose.msra.mxu0 0.0
    %2598 = vmatprep.subr.mxu0 0.0
    %2599 = vmatpush1.xpose.msra.mxu0 0.0
    %2600 = vmatprep.subr.mxu0 0.0
    %2601 = vmatpush1.xpose.msra.mxu0 0.0
    %2602 = vmatprep.subr.mxu0 0.0
    %2603 = vmatpush1.xpose.msra.mxu0 0.0
    %2604 = vmatprep.subr.mxu0 0.0
    %2605 = vmatpush1.xpose.msra.mxu0 0.0
    %2606 = vmatprep.subr.mxu0 0.0
    %2607 = vmatpush1.xpose.msra.mxu0 0.0
    %2608 = vmatprep.subr.mxu0 0.0
    %2609 = vmatpush1.xpose.msra.mxu0 0.0
    %2610 = vmatprep.subr.mxu0 0.0
    %2611 = vmatpush1.xpose.msra.mxu0 0.0
    %2612 = vmatprep.subr.mxu0 0.0
    %2613 = vmatpush1.xpose.msra.mxu0 0.0
    %2614 = vmatprep.subr.mxu0 0.0
    %2615 = vmatpush1.xpose.msra.mxu0 0.0
    %2616 = vmatprep.subr.mxu0 0.0
    %2617 = vmatpush1.xpose.msra.mxu0 0.0
    %2618 = vmatprep.subr.mxu0 0.0
    %2619 = vmatpush1.xpose.msra.mxu0 0.0
    %2620 = vmatprep.subr.mxu0 0.0
    %2621 = vmatpush1.xpose.msra.mxu0 0.0
    %2622 = vmatprep.subr.mxu0 0.0
    %2623 = vmatpush1.xpose.msra.mxu0 0.0
    %2624 = vmatprep.subr.mxu0 0.0
    %2625 = vmatpush1.xpose.msra.mxu0 0.0
    %2626 = vmatprep.subr.mxu0 0.0
    %2627 = vmatpush1.xpose.msra.mxu0 0.0
    %2628 = vmatprep.subr.mxu0 0.0
    %2629 = vmatpush1.xpose.msra.mxu0 0.0
    %2630 = vmatprep.subr.mxu0 0.0
    %2631 = vmatpush1.xpose.msra.mxu0 0.0
    %2632 = vmatprep.subr.mxu0 0.0
    %2633 = vmatpush1.xpose.msra.mxu0 0.0
    %2634 = vmatprep.subr.mxu0 0.0
    %2635 = vmatpush1.xpose.msra.mxu0 0.0
    %2636 = vmatprep.mubr.f32.mxu0 %v415
    %2637 = vmatmul.mubr.f32.gmra.mrb[0].mxu0 %v413
    %v2638 = vpop.f32.mrb[0].mxu0
    %v2639 = vadd.f32 %v2569, %v2638
    %v2640 = vpop.f32.mrb[0].mxu0
    %2641 = vdwg.mxu0
    %2642 = vmatprep.subr.mxu0 %v108
    %2643 = vmatpush1.xpose.msra.mxu0 %v107
    %2644 = vmatprep.subr.mxu0 0.0
    %2645 = vmatpush1.xpose.msra.mxu0 0.0
    %2646 = vmatprep.subr.mxu0 0.0
    %2647 = vmatpush1.xpose.msra.mxu0 0.0
    %2648 = vmatprep.subr.mxu0 0.0
    %2649 = vmatpush1.xpose.msra.mxu0 0.0
    %2650 = vmatprep.subr.mxu0 0.0
    %2651 = vmatpush1.xpose.msra.mxu0 0.0
    %2652 = vmatprep.subr.mxu0 0.0
    %2653 = vmatpush1.xpose.msra.mxu0 0.0
    %2654 = vmatprep.subr.mxu0 0.0
    %2655 = vmatpush1.xpose.msra.mxu0 0.0
    %2656 = vmatprep.subr.mxu0 0.0
    %2657 = vmatpush1.xpose.msra.mxu0 0.0
    %2658 = vmatprep.subr.mxu0 0.0
    %2659 = vmatpush1.xpose.msra.mxu0 0.0
    %2660 = vmatprep.subr.mxu0 0.0
    %2661 = vmatpush1.xpose.msra.mxu0 0.0
    %2662 = vmatprep.subr.mxu0 0.0
    %2663 = vmatpush1.xpose.msra.mxu0 0.0
    %2664 = vmatprep.subr.mxu0 0.0
    %2665 = vmatpush1.xpose.msra.mxu0 0.0
    %2666 = vmatprep.subr.mxu0 0.0
    %2667 = vmatpush1.xpose.msra.mxu0 0.0
    %2668 = vmatprep.subr.mxu0 0.0
    %2669 = vmatpush1.xpose.msra.mxu0 0.0
    %2670 = vmatprep.subr.mxu0 0.0
    %2671 = vmatpush1.xpose.msra.mxu0 0.0
    %2672 = vmatprep.subr.mxu0 0.0
    %2673 = vmatpush1.xpose.msra.mxu0 0.0
    %2674 = vmatprep.subr.mxu0 0.0
    %2675 = vmatpush1.xpose.msra.mxu0 0.0
    %2676 = vmatprep.subr.mxu0 0.0
    %2677 = vmatpush1.xpose.msra.mxu0 0.0
    %2678 = vmatprep.subr.mxu0 0.0
    %2679 = vmatpush1.xpose.msra.mxu0 0.0
    %2680 = vmatprep.subr.mxu0 0.0
    %2681 = vmatpush1.xpose.msra.mxu0 0.0
    %2682 = vmatprep.subr.mxu0 0.0
    %2683 = vmatpush1.xpose.msra.mxu0 0.0
    %2684 = vmatprep.subr.mxu0 0.0
    %2685 = vmatpush1.xpose.msra.mxu0 0.0
    %2686 = vmatprep.subr.mxu0 0.0
    %2687 = vmatpush1.xpose.msra.mxu0 0.0
    %2688 = vmatprep.subr.mxu0 0.0
    %2689 = vmatpush1.xpose.msra.mxu0 0.0
    %2690 = vmatprep.subr.mxu0 0.0
    %2691 = vmatpush1.xpose.msra.mxu0 0.0
    %2692 = vmatprep.subr.mxu0 0.0
    %2693 = vmatpush1.xpose.msra.mxu0 0.0
    %2694 = vmatprep.subr.mxu0 0.0
    %2695 = vmatpush1.xpose.msra.mxu0 0.0
    %2696 = vmatprep.subr.mxu0 0.0
    %2697 = vmatpush1.xpose.msra.mxu0 0.0
    %2698 = vmatprep.subr.mxu0 0.0
    %2699 = vmatpush1.xpose.msra.mxu0 0.0
    %2700 = vmatprep.subr.mxu0 0.0
    %2701 = vmatpush1.xpose.msra.mxu0 0.0
    %2702 = vmatprep.subr.mxu0 0.0
    %2703 = vmatpush1.xpose.msra.mxu0 0.0
    %2704 = vmatprep.subr.mxu0 0.0
    %2705 = vmatpush1.xpose.msra.mxu0 0.0
    %2706 = vmatprep.mubr.f32.mxu0 %v431
    %2707 = vmatmul.mubr.f32.gmra.mrb[0].mxu0 %v423
    %v2708 = vpop.f32.mrb[0].mxu0
    %v2709 = vadd.f32 %v2639, %v2708
    %v2710 = vpop.f32.mrb[0].mxu0
    %2711 = vdwg.mxu0
    %2712 = vmatprep.subr.mxu0 %v110
    %2713 = vmatpush1.xpose.msra.mxu0 %v109
    %2714 = vmatprep.subr.mxu0 0.0
    %2715 = vmatpush1.xpose.msra.mxu0 0.0
    %2716 = vmatprep.subr.mxu0 0.0
    %2717 = vmatpush1.xpose.msra.mxu0 0.0
    %2718 = vmatprep.subr.mxu0 0.0
    %2719 = vmatpush1.xpose.msra.mxu0 0.0
    %2720 = vmatprep.subr.mxu0 0.0
    %2721 = vmatpush1.xpose.msra.mxu0 0.0
    %2722 = vmatprep.subr.mxu0 0.0
    %2723 = vmatpush1.xpose.msra.mxu0 0.0
    %2724 = vmatprep.subr.mxu0 0.0
    %2725 = vmatpush1.xpose.msra.mxu0 0.0
    %2726 = vmatprep.subr.mxu0 0.0
    %2727 = vmatpush1.xpose.msra.mxu0 0.0
    %2728 = vmatprep.subr.mxu0 0.0
    %2729 = vmatpush1.xpose.msra.mxu0 0.0
    %2730 = vmatprep.subr.mxu0 0.0
    %2731 = vmatpush1.xpose.msra.mxu0 0.0
    %2732 = vmatprep.subr.mxu0 0.0
    %2733 = vmatpush1.xpose.msra.mxu0 0.0
    %2734 = vmatprep.subr.mxu0 0.0
    %2735 = vmatpush1.xpose.msra.mxu0 0.0
    %2736 = vmatprep.subr.mxu0 0.0
    %2737 = vmatpush1.xpose.msra.mxu0 0.0
    %2738 = vmatprep.subr.mxu0 0.0
    %2739 = vmatpush1.xpose.msra.mxu0 0.0
    %2740 = vmatprep.subr.mxu0 0.0
    %2741 = vmatpush1.xpose.msra.mxu0 0.0
    %2742 = vmatprep.subr.mxu0 0.0
    %2743 = vmatpush1.xpose.msra.mxu0 0.0
    %2744 = vmatprep.subr.mxu0 0.0
    %2745 = vmatpush1.xpose.msra.mxu0 0.0
    %2746 = vmatprep.subr.mxu0 0.0
    %2747 = vmatpush1.xpose.msra.mxu0 0.0
    %2748 = vmatprep.subr.mxu0 0.0
    %2749 = vmatpush1.xpose.msra.mxu0 0.0
    %2750 = vmatprep.subr.mxu0 0.0
    %2751 = vmatpush1.xpose.msra.mxu0 0.0
    %2752 = vmatprep.subr.mxu0 0.0
    %2753 = vmatpush1.xpose.msra.mxu0 0.0
    %2754 = vmatprep.subr.mxu0 0.0
    %2755 = vmatpush1.xpose.msra.mxu0 0.0
    %2756 = vmatprep.subr.mxu0 0.0
    %2757 = vmatpush1.xpose.msra.mxu0 0.0
    %2758 = vmatprep.subr.mxu0 0.0
    %2759 = vmatpush1.xpose.msra.mxu0 0.0
    %2760 = vmatprep.subr.mxu0 0.0
    %2761 = vmatpush1.xpose.msra.mxu0 0.0
    %2762 = vmatprep.subr.mxu0 0.0
    %2763 = vmatpush1.xpose.msra.mxu0 0.0
    %2764 = vmatprep.subr.mxu0 0.0
    %2765 = vmatpush1.xpose.msra.mxu0 0.0
    %2766 = vmatprep.subr.mxu0 0.0
    %2767 = vmatpush1.xpose.msra.mxu0 0.0
    %2768 = vmatprep.subr.mxu0 0.0
    %2769 = vmatpush1.xpose.msra.mxu0 0.0
    %2770 = vmatprep.subr.mxu0 0.0
    %2771 = vmatpush1.xpose.msra.mxu0 0.0
    %2772 = vmatprep.subr.mxu0 0.0
    %2773 = vmatpush1.xpose.msra.mxu0 0.0
    %2774 = vmatprep.subr.mxu0 0.0
    %2775 = vmatpush1.xpose.msra.mxu0 0.0
    %2776 = vmatprep.mubr.f32.mxu0 %v432
    %2777 = vmatmul.mubr.f32.gmra.mrb[0].mxu0 %v430
    %v2778 = vpop.f32.mrb[0].mxu0
    %v2779 = vadd.f32 %v2709, %v2778
    %v2780 = vpop.f32.mrb[0].mxu0
    %2781 = vdwg.mxu0
    %2782 = vmatprep.subr.mxu0 %v112
    %2783 = vmatpush1.xpose.msra.mxu0 %v111
    %2784 = vmatprep.subr.mxu0 0.0
    %2785 = vmatpush1.xpose.msra.mxu0 0.0
    %2786 = vmatprep.subr.mxu0 0.0
    %2787 = vmatpush1.xpose.msra.mxu0 0.0
    %2788 = vmatprep.subr.mxu0 0.0
    %2789 = vmatpush1.xpose.msra.mxu0 0.0
    %2790 = vmatprep.subr.mxu0 0.0
    %2791 = vmatpush1.xpose.msra.mxu0 0.0
    %2792 = vmatprep.subr.mxu0 0.0
    %2793 = vmatpush1.xpose.msra.mxu0 0.0
    %2794 = vmatprep.subr.mxu0 0.0
    %2795 = vmatpush1.xpose.msra.mxu0 0.0
    %2796 = vmatprep.subr.mxu0 0.0
    %2797 = vmatpush1.xpose.msra.mxu0 0.0
    %2798 = vmatprep.subr.mxu0 0.0
    %2799 = vmatpush1.xpose.msra.mxu0 0.0
    %2800 = vmatprep.subr.mxu0 0.0
    %2801 = vmatpush1.xpose.msra.mxu0 0.0
    %2802 = vmatprep.subr.mxu0 0.0
    %2803 = vmatpush1.xpose.msra.mxu0 0.0
    %2804 = vmatprep.subr.mxu0 0.0
    %2805 = vmatpush1.xpose.msra.mxu0 0.0
    %2806 = vmatprep.subr.mxu0 0.0
    %2807 = vmatpush1.xpose.msra.mxu0 0.0
    %2808 = vmatprep.subr.mxu0 0.0
    %2809 = vmatpush1.xpose.msra.mxu0 0.0
    %2810 = vmatprep.subr.mxu0 0.0
    %2811 = vmatpush1.xpose.msra.mxu0 0.0
    %2812 = vmatprep.subr.mxu0 0.0
    %2813 = vmatpush1.xpose.msra.mxu0 0.0
    %2814 = vmatprep.subr.mxu0 0.0
    %2815 = vmatpush1.xpose.msra.mxu0 0.0
    %2816 = vmatprep.subr.mxu0 0.0
    %2817 = vmatpush1.xpose.msra.mxu0 0.0
    %2818 = vmatprep.subr.mxu0 0.0
    %2819 = vmatpush1.xpose.msra.mxu0 0.0
    %2820 = vmatprep.subr.mxu0 0.0
    %2821 = vmatpush1.xpose.msra.mxu0 0.0
    %2822 = vmatprep.subr.mxu0 0.0
    %2823 = vmatpush1.xpose.msra.mxu0 0.0
    %2824 = vmatprep.subr.mxu0 0.0
    %2825 = vmatpush1.xpose.msra.mxu0 0.0
    %2826 = vmatprep.subr.mxu0 0.0
    %2827 = vmatpush1.xpose.msra.mxu0 0.0
    %2828 = vmatprep.subr.mxu0 0.0
    %2829 = vmatpush1.xpose.msra.mxu0 0.0
    %2830 = vmatprep.subr.mxu0 0.0
    %2831 = vmatpush1.xpose.msra.mxu0 0.0
    %2832 = vmatprep.subr.mxu0 0.0
    %2833 = vmatpush1.xpose.msra.mxu0 0.0
    %2834 = vmatprep.subr.mxu0 0.0
    %2835 = vmatpush1.xpose.msra.mxu0 0.0
    %2836 = vmatprep.subr.mxu0 0.0
    %2837 = vmatpush1.xpose.msra.mxu0 0.0
    %2838 = vmatprep.subr.mxu0 0.0
    %2839 = vmatpush1.xpose.msra.mxu0 0.0
    %2840 = vmatprep.subr.mxu0 0.0
    %2841 = vmatpush1.xpose.msra.mxu0 0.0
    %2842 = vmatprep.subr.mxu0 0.0
    %2843 = vmatpush1.xpose.msra.mxu0 0.0
    %2844 = vmatprep.subr.mxu0 0.0
    %2845 = vmatpush1.xpose.msra.mxu0 0.0
    %2846 = vmatprep.mubr.f32.mxu0 %v448
    %2847 = vmatmul.mubr.f32.gmra.mrb[0].mxu0 %v440
    %v2848 = vpop.f32.mrb[0].mxu0
    %v2849 = vadd.f32 %v2779, %v2848
    %v2850 = vpop.f32.mrb[0].mxu0
    %2851 = vdwg.mxu0
    %2852 = vmatprep.subr.mxu0 %v114
    %2853 = vmatpush1.xpose.msra.mxu0 %v113
    %2854 = vmatprep.subr.mxu0 0.0
    %2855 = vmatpush1.xpose.msra.mxu0 0.0
    %2856 = vmatprep.subr.mxu0 0.0
    %2857 = vmatpush1.xpose.msra.mxu0 0.0
    %2858 = vmatprep.subr.mxu0 0.0
    %2859 = vmatpush1.xpose.msra.mxu0 0.0
    %2860 = vmatprep.subr.mxu0 0.0
    %2861 = vmatpush1.xpose.msra.mxu0 0.0
    %2862 = vmatprep.subr.mxu0 0.0
    %2863 = vmatpush1.xpose.msra.mxu0 0.0
    %2864 = vmatprep.subr.mxu0 0.0
    %2865 = vmatpush1.xpose.msra.mxu0 0.0
    %2866 = vmatprep.subr.mxu0 0.0
    %2867 = vmatpush1.xpose.msra.mxu0 0.0
    %2868 = vmatprep.subr.mxu0 0.0
    %2869 = vmatpush1.xpose.msra.mxu0 0.0
    %2870 = vmatprep.subr.mxu0 0.0
    %2871 = vmatpush1.xpose.msra.mxu0 0.0
    %2872 = vmatprep.subr.mxu0 0.0
    %2873 = vmatpush1.xpose.msra.mxu0 0.0
    %2874 = vmatprep.subr.mxu0 0.0
    %2875 = vmatpush1.xpose.msra.mxu0 0.0
    %2876 = vmatprep.subr.mxu0 0.0
    %2877 = vmatpush1.xpose.msra.mxu0 0.0
    %2878 = vmatprep.subr.mxu0 0.0
    %2879 = vmatpush1.xpose.msra.mxu0 0.0
    %2880 = vmatprep.subr.mxu0 0.0
    %2881 = vmatpush1.xpose.msra.mxu0 0.0
    %2882 = vmatprep.subr.mxu0 0.0
    %2883 = vmatpush1.xpose.msra.mxu0 0.0
    %2884 = vmatprep.subr.mxu0 0.0
    %2885 = vmatpush1.xpose.msra.mxu0 0.0
    %2886 = vmatprep.subr.mxu0 0.0
    %2887 = vmatpush1.xpose.msra.mxu0 0.0
    %2888 = vmatprep.subr.mxu0 0.0
    %2889 = vmatpush1.xpose.msra.mxu0 0.0
    %2890 = vmatprep.subr.mxu0 0.0
    %2891 = vmatpush1.xpose.msra.mxu0 0.0
    %2892 = vmatprep.subr.mxu0 0.0
    %2893 = vmatpush1.xpose.msra.mxu0 0.0
    %2894 = vmatprep.subr.mxu0 0.0
    %2895 = vmatpush1.xpose.msra.mxu0 0.0
    %2896 = vmatprep.subr.mxu0 0.0
    %2897 = vmatpush1.xpose.msra.mxu0 0.0
    %2898 = vmatprep.subr.mxu0 0.0
    %2899 = vmatpush1.xpose.msra.mxu0 0.0
    %2900 = vmatprep.subr.mxu0 0.0
    %2901 = vmatpush1.xpose.msra.mxu0 0.0
    %2902 = vmatprep.subr.mxu0 0.0
    %2903 = vmatpush1.xpose.msra.mxu0 0.0
    %2904 = vmatprep.subr.mxu0 0.0
    %2905 = vmatpush1.xpose.msra.mxu0 0.0
    %2906 = vmatprep.subr.mxu0 0.0
    %2907 = vmatpush1.xpose.msra.mxu0 0.0
    %2908 = vmatprep.subr.mxu0 0.0
    %2909 = vmatpush1.xpose.msra.mxu0 0.0
    %2910 = vmatprep.subr.mxu0 0.0
    %2911 = vmatpush1.xpose.msra.mxu0 0.0
    %2912 = vmatprep.subr.mxu0 0.0
    %2913 = vmatpush1.xpose.msra.mxu0 0.0
    %2914 = vmatprep.subr.mxu0 0.0
    %2915 = vmatpush1.xpose.msra.mxu0 0.0
    %2916 = vmatprep.mubr.f32.mxu0 %v449
    %2917 = vmatmul.mubr.f32.gmra.mrb[0].mxu0 %v447
    %v2918 = vpop.f32.mrb[0].mxu0
    %v2919 = vadd.f32 %v2849, %v2918
    %v2920 = vpop.f32.mrb[0].mxu0
    %2921 = vdwg.mxu0
    %2922 = vmatprep.subr.mxu0 %v116
    %2923 = vmatpush1.xpose.msra.mxu0 %v115
    %2924 = vmatprep.subr.mxu0 0.0
    %2925 = vmatpush1.xpose.msra.mxu0 0.0
    %2926 = vmatprep.subr.mxu0 0.0
    %2927 = vmatpush1.xpose.msra.mxu0 0.0
    %2928 = vmatprep.subr.mxu0 0.0
    %2929 = vmatpush1.xpose.msra.mxu0 0.0
    %2930 = vmatprep.subr.mxu0 0.0
    %2931 = vmatpush1.xpose.msra.mxu0 0.0
    %2932 = vmatprep.subr.mxu0 0.0
    %2933 = vmatpush1.xpose.msra.mxu0 0.0
    %2934 = vmatprep.subr.mxu0 0.0
    %2935 = vmatpush1.xpose.msra.mxu0 0.0
    %2936 = vmatprep.subr.mxu0 0.0
    %2937 = vmatpush1.xpose.msra.mxu0 0.0
    %2938 = vmatprep.subr.mxu0 0.0
    %2939 = vmatpush1.xpose.msra.mxu0 0.0
    %2940 = vmatprep.subr.mxu0 0.0
    %2941 = vmatpush1.xpose.msra.mxu0 0.0
    %2942 = vmatprep.subr.mxu0 0.0
    %2943 = vmatpush1.xpose.msra.mxu0 0.0
    %2944 = vmatprep.subr.mxu0 0.0
    %2945 = vmatpush1.xpose.msra.mxu0 0.0
    %2946 = vmatprep.subr.mxu0 0.0
    %2947 = vmatpush1.xpose.msra.mxu0 0.0
    %2948 = vmatprep.subr.mxu0 0.0
    %2949 = vmatpush1.xpose.msra.mxu0 0.0
    %2950 = vmatprep.subr.mxu0 0.0
    %2951 = vmatpush1.xpose.msra.mxu0 0.0
    %2952 = vmatprep.subr.mxu0 0.0
    %2953 = vmatpush1.xpose.msra.mxu0 0.0
    %2954 = vmatprep.subr.mxu0 0.0
    %2955 = vmatpush1.xpose.msra.mxu0 0.0
    %2956 = vmatprep.subr.mxu0 0.0
    %2957 = vmatpush1.xpose.msra.mxu0 0.0
    %2958 = vmatprep.subr.mxu0 0.0
    %2959 = vmatpush1.xpose.msra.mxu0 0.0
    %2960 = vmatprep.subr.mxu0 0.0
    %2961 = vmatpush1.xpose.msra.mxu0 0.0
    %2962 = vmatprep.subr.mxu0 0.0
    %2963 = vmatpush1.xpose.msra.mxu0 0.0
    %2964 = vmatprep.subr.mxu0 0.0
    %2965 = vmatpush1.xpose.msra.mxu0 0.0
    %2966 = vmatprep.subr.mxu0 0.0
    %2967 = vmatpush1.xpose.msra.mxu0 0.0
    %2968 = vmatprep.subr.mxu0 0.0
    %2969 = vmatpush1.xpose.msra.mxu0 0.0
    %2970 = vmatprep.subr.mxu0 0.0
    %2971 = vmatpush1.xpose.msra.mxu0 0.0
    %2972 = vmatprep.subr.mxu0 0.0
    %2973 = vmatpush1.xpose.msra.mxu0 0.0
    %2974 = vmatprep.subr.mxu0 0.0
    %2975 = vmatpush1.xpose.msra.mxu0 0.0
    %2976 = vmatprep.subr.mxu0 0.0
    %2977 = vmatpush1.xpose.msra.mxu0 0.0
    %2978 = vmatprep.subr.mxu0 0.0
    %2979 = vmatpush1.xpose.msra.mxu0 0.0
    %2980 = vmatprep.subr.mxu0 0.0
    %2981 = vmatpush1.xpose.msra.mxu0 0.0
    %2982 = vmatprep.subr.mxu0 0.0
    %2983 = vmatpush1.xpose.msra.mxu0 0.0
    %2984 = vmatprep.subr.mxu0 0.0
    %2985 = vmatpush1.xpose.msra.mxu0 0.0
    %2986 = vmatprep.mubr.f32.mxu0 %v465
    %2987 = vmatmul.mubr.f32.gmra.mrb[0].mxu0 %v457
    %v2988 = vpop.f32.mrb[0].mxu0
    %v2989 = vadd.f32 %v2919, %v2988
    %v2990 = vpop.f32.mrb[0].mxu0
    %2991 = vdwg.mxu0
    %2992 = vmatprep.subr.mxu0 %v118
    %2993 = vmatpush1.xpose.msra.mxu0 %v117
    %2994 = vmatprep.subr.mxu0 0.0
    %2995 = vmatpush1.xpose.msra.mxu0 0.0
    %2996 = vmatprep.subr.mxu0 0.0
    %2997 = vmatpush1.xpose.msra.mxu0 0.0
    %2998 = vmatprep.subr.mxu0 0.0
    %2999 = vmatpush1.xpose.msra.mxu0 0.0
    %3000 = vmatprep.subr.mxu0 0.0
    %3001 = vmatpush1.xpose.msra.mxu0 0.0
    %3002 = vmatprep.subr.mxu0 0.0
    %3003 = vmatpush1.xpose.msra.mxu0 0.0
    %3004 = vmatprep.subr.mxu0 0.0
    %3005 = vmatpush1.xpose.msra.mxu0 0.0
    %3006 = vmatprep.subr.mxu0 0.0
    %3007 = vmatpush1.xpose.msra.mxu0 0.0
    %3008 = vmatprep.subr.mxu0 0.0
    %3009 = vmatpush1.xpose.msra.mxu0 0.0
    %3010 = vmatprep.subr.mxu0 0.0
    %3011 = vmatpush1.xpose.msra.mxu0 0.0
    %3012 = vmatprep.subr.mxu0 0.0
    %3013 = vmatpush1.xpose.msra.mxu0 0.0
    %3014 = vmatprep.subr.mxu0 0.0
    %3015 = vmatpush1.xpose.msra.mxu0 0.0
    %3016 = vmatprep.subr.mxu0 0.0
    %3017 = vmatpush1.xpose.msra.mxu0 0.0
    %3018 = vmatprep.subr.mxu0 0.0
    %3019 = vmatpush1.xpose.msra.mxu0 0.0
    %3020 = vmatprep.subr.mxu0 0.0
    %3021 = vmatpush1.xpose.msra.mxu0 0.0
    %3022 = vmatprep.subr.mxu0 0.0
    %3023 = vmatpush1.xpose.msra.mxu0 0.0
    %3024 = vmatprep.subr.mxu0 0.0
    %3025 = vmatpush1.xpose.msra.mxu0 0.0
    %3026 = vmatprep.subr.mxu0 0.0
    %3027 = vmatpush1.xpose.msra.mxu0 0.0
    %3028 = vmatprep.subr.mxu0 0.0
    %3029 = vmatpush1.xpose.msra.mxu0 0.0
    %3030 = vmatprep.subr.mxu0 0.0
    %3031 = vmatpush1.xpose.msra.mxu0 0.0
    %3032 = vmatprep.subr.mxu0 0.0
    %3033 = vmatpush1.xpose.msra.mxu0 0.0
    %3034 = vmatprep.subr.mxu0 0.0
    %3035 = vmatpush1.xpose.msra.mxu0 0.0
    %3036 = vmatprep.subr.mxu0 0.0
    %3037 = vmatpush1.xpose.msra.mxu0 0.0
    %3038 = vmatprep.subr.mxu0 0.0
    %3039 = vmatpush1.xpose.msra.mxu0 0.0
    %3040 = vmatprep.subr.mxu0 0.0
    %3041 = vmatpush1.xpose.msra.mxu0 0.0
    %3042 = vmatprep.subr.mxu0 0.0
    %3043 = vmatpush1.xpose.msra.mxu0 0.0
    %3044 = vmatprep.subr.mxu0 0.0
    %3045 = vmatpush1.xpose.msra.mxu0 0.0
    %3046 = vmatprep.subr.mxu0 0.0
    %3047 = vmatpush1.xpose.msra.mxu0 0.0
    %3048 = vmatprep.subr.mxu0 0.0
    %3049 = vmatpush1.xpose.msra.mxu0 0.0
    %3050 = vmatprep.subr.mxu0 0.0
    %3051 = vmatpush1.xpose.msra.mxu0 0.0
    %3052 = vmatprep.subr.mxu0 0.0
    %3053 = vmatpush1.xpose.msra.mxu0 0.0
    %3054 = vmatprep.subr.mxu0 0.0
    %3055 = vmatpush1.xpose.msra.mxu0 0.0
    %3056 = vmatprep.mubr.f32.mxu0 %v466
    %3057 = vmatmul.mubr.f32.gmra.mrb[0].mxu0 %v464
    %v3058 = vpop.f32.mrb[0].mxu0
    %v3059 = vadd.f32 %v2989, %v3058
    %v3060 = vpop.f32.mrb[0].mxu0
    %3061 = vdwg.mxu0
    %3062 = vmatprep.subr.mxu0 %v120
    %3063 = vmatpush1.xpose.msra.mxu0 %v119
    %3064 = vmatprep.subr.mxu0 0.0
    %3065 = vmatpush1.xpose.msra.mxu0 0.0
    %3066 = vmatprep.subr.mxu0 0.0
    %3067 = vmatpush1.xpose.msra.mxu0 0.0
    %3068 = vmatprep.subr.mxu0 0.0
    %3069 = vmatpush1.xpose.msra.mxu0 0.0
    %3070 = vmatprep.subr.mxu0 0.0
    %3071 = vmatpush1.xpose.msra.mxu0 0.0
    %3072 = vmatprep.subr.mxu0 0.0
    %3073 = vmatpush1.xpose.msra.mxu0 0.0
    %3074 = vmatprep.subr.mxu0 0.0
    %3075 = vmatpush1.xpose.msra.mxu0 0.0
    %3076 = vmatprep.subr.mxu0 0.0
    %3077 = vmatpush1.xpose.msra.mxu0 0.0
    %3078 = vmatprep.subr.mxu0 0.0
    %3079 = vmatpush1.xpose.msra.mxu0 0.0
    %3080 = vmatprep.subr.mxu0 0.0
    %3081 = vmatpush1.xpose.msra.mxu0 0.0
    %3082 = vmatprep.subr.mxu0 0.0
    %3083 = vmatpush1.xpose.msra.mxu0 0.0
    %3084 = vmatprep.subr.mxu0 0.0
    %3085 = vmatpush1.xpose.msra.mxu0 0.0
    %3086 = vmatprep.subr.mxu0 0.0
    %3087 = vmatpush1.xpose.msra.mxu0 0.0
    %3088 = vmatprep.subr.mxu0 0.0
    %3089 = vmatpush1.xpose.msra.mxu0 0.0
    %3090 = vmatprep.subr.mxu0 0.0
    %3091 = vmatpush1.xpose.msra.mxu0 0.0
    %3092 = vmatprep.subr.mxu0 0.0
    %3093 = vmatpush1.xpose.msra.mxu0 0.0
    %3094 = vmatprep.subr.mxu0 0.0
    %3095 = vmatpush1.xpose.msra.mxu0 0.0
    %3096 = vmatprep.subr.mxu0 0.0
    %3097 = vmatpush1.xpose.msra.mxu0 0.0
    %3098 = vmatprep.subr.mxu0 0.0
    %3099 = vmatpush1.xpose.msra.mxu0 0.0
    %3100 = vmatprep.subr.mxu0 0.0
    %3101 = vmatpush1.xpose.msra.mxu0 0.0
    %3102 = vmatprep.subr.mxu0 0.0
    %3103 = vmatpush1.xpose.msra.mxu0 0.0
    %3104 = vmatprep.subr.mxu0 0.0
    %3105 = vmatpush1.xpose.msra.mxu0 0.0
    %3106 = vmatprep.subr.mxu0 0.0
    %3107 = vmatpush1.xpose.msra.mxu0 0.0
    %3108 = vmatprep.subr.mxu0 0.0
    %3109 = vmatpush1.xpose.msra.mxu0 0.0
    %3110 = vmatprep.subr.mxu0 0.0
    %3111 = vmatpush1.xpose.msra.mxu0 0.0
    %3112 = vmatprep.subr.mxu0 0.0
    %3113 = vmatpush1.xpose.msra.mxu0 0.0
    %3114 = vmatprep.subr.mxu0 0.0
    %3115 = vmatpush1.xpose.msra.mxu0 0.0
    %3116 = vmatprep.subr.mxu0 0.0
    %3117 = vmatpush1.xpose.msra.mxu0 0.0
    %3118 = vmatprep.subr.mxu0 0.0
    %3119 = vmatpush1.xpose.msra.mxu0 0.0
    %3120 = vmatprep.subr.mxu0 0.0
    %3121 = vmatpush1.xpose.msra.mxu0 0.0
    %3122 = vmatprep.subr.mxu0 0.0
    %3123 = vmatpush1.xpose.msra.mxu0 0.0
    %3124 = vmatprep.subr.mxu0 0.0
    %3125 = vmatpush1.xpose.msra.mxu0 0.0
    %3126 = vmatprep.mubr.f32.mxu0 %v482
    %3127 = vmatmul.mubr.f32.gmra.mrb[0].mxu0 %v474
    %v3128 = vpop.f32.mrb[0].mxu0
    %v3129 = vadd.f32 %v3059, %v3128
    %v3130 = vpop.f32.mrb[0].mxu0
    %3131 = vdwg.mxu0
    %3132 = vmatprep.subr.mxu0 %v122
    %3133 = vmatpush1.xpose.msra.mxu0 %v121
    %3134 = vmatprep.subr.mxu0 0.0
    %3135 = vmatpush1.xpose.msra.mxu0 0.0
    %3136 = vmatprep.subr.mxu0 0.0
    %3137 = vmatpush1.xpose.msra.mxu0 0.0
    %3138 = vmatprep.subr.mxu0 0.0
    %3139 = vmatpush1.xpose.msra.mxu0 0.0
    %3140 = vmatprep.subr.mxu0 0.0
    %3141 = vmatpush1.xpose.msra.mxu0 0.0
    %3142 = vmatprep.subr.mxu0 0.0
    %3143 = vmatpush1.xpose.msra.mxu0 0.0
    %3144 = vmatprep.subr.mxu0 0.0
    %3145 = vmatpush1.xpose.msra.mxu0 0.0
    %3146 = vmatprep.subr.mxu0 0.0
    %3147 = vmatpush1.xpose.msra.mxu0 0.0
    %3148 = vmatprep.subr.mxu0 0.0
    %3149 = vmatpush1.xpose.msra.mxu0 0.0
    %3150 = vmatprep.subr.mxu0 0.0
    %3151 = vmatpush1.xpose.msra.mxu0 0.0
    %3152 = vmatprep.subr.mxu0 0.0
    %3153 = vmatpush1.xpose.msra.mxu0 0.0
    %3154 = vmatprep.subr.mxu0 0.0
    %3155 = vmatpush1.xpose.msra.mxu0 0.0
    %3156 = vmatprep.subr.mxu0 0.0
    %3157 = vmatpush1.xpose.msra.mxu0 0.0
    %3158 = vmatprep.subr.mxu0 0.0
    %3159 = vmatpush1.xpose.msra.mxu0 0.0
    %3160 = vmatprep.subr.mxu0 0.0
    %3161 = vmatpush1.xpose.msra.mxu0 0.0
    %3162 = vmatprep.subr.mxu0 0.0
    %3163 = vmatpush1.xpose.msra.mxu0 0.0
    %3164 = vmatprep.subr.mxu0 0.0
    %3165 = vmatpush1.xpose.msra.mxu0 0.0
    %3166 = vmatprep.subr.mxu0 0.0
    %3167 = vmatpush1.xpose.msra.mxu0 0.0
    %3168 = vmatprep.subr.mxu0 0.0
    %3169 = vmatpush1.xpose.msra.mxu0 0.0
    %3170 = vmatprep.subr.mxu0 0.0
    %3171 = vmatpush1.xpose.msra.mxu0 0.0
    %3172 = vmatprep.subr.mxu0 0.0
    %3173 = vmatpush1.xpose.msra.mxu0 0.0
    %3174 = vmatprep.subr.mxu0 0.0
    %3175 = vmatpush1.xpose.msra.mxu0 0.0
    %3176 = vmatprep.subr.mxu0 0.0
    %3177 = vmatpush1.xpose.msra.mxu0 0.0
    %3178 = vmatprep.subr.mxu0 0.0
    %3179 = vmatpush1.xpose.msra.mxu0 0.0
    %3180 = vmatprep.subr.mxu0 0.0
    %3181 = vmatpush1.xpose.msra.mxu0 0.0
    %3182 = vmatprep.subr.mxu0 0.0
    %3183 = vmatpush1.xpose.msra.mxu0 0.0
    %3184 = vmatprep.subr.mxu0 0.0
    %3185 = vmatpush1.xpose.msra.mxu0 0.0
    %3186 = vmatprep.subr.mxu0 0.0
    %3187 = vmatpush1.xpose.msra.mxu0 0.0
    %3188 = vmatprep.subr.mxu0 0.0
    %3189 = vmatpush1.xpose.msra.mxu0 0.0
    %3190 = vmatprep.subr.mxu0 0.0
    %3191 = vmatpush1.xpose.msra.mxu0 0.0
    %3192 = vmatprep.subr.mxu0 0.0
    %3193 = vmatpush1.xpose.msra.mxu0 0.0
    %3194 = vmatprep.subr.mxu0 0.0
    %3195 = vmatpush1.xpose.msra.mxu0 0.0
    %3196 = vmatprep.mubr.f32.mxu0 %v483
    %3197 = vmatmul.mubr.f32.gmra.mrb[0].mxu0 %v481
    %v3198 = vpop.f32.mrb[0].mxu0
    %v3199 = vadd.f32 %v3129, %v3198
    %v3200 = vpop.f32.mrb[0].mxu0
    %3201 = vdwg.mxu0
    %3202 = vmatprep.subr.mxu0 %v124
    %3203 = vmatpush1.xpose.msra.mxu0 %v123
    %3204 = vmatprep.subr.mxu0 0.0
    %3205 = vmatpush1.xpose.msra.mxu0 0.0
    %3206 = vmatprep.subr.mxu0 0.0
    %3207 = vmatpush1.xpose.msra.mxu0 0.0
    %3208 = vmatprep.subr.mxu0 0.0
    %3209 = vmatpush1.xpose.msra.mxu0 0.0
    %3210 = vmatprep.subr.mxu0 0.0
    %3211 = vmatpush1.xpose.msra.mxu0 0.0
    %3212 = vmatprep.subr.mxu0 0.0
    %3213 = vmatpush1.xpose.msra.mxu0 0.0
    %3214 = vmatprep.subr.mxu0 0.0
    %3215 = vmatpush1.xpose.msra.mxu0 0.0
    %3216 = vmatprep.subr.mxu0 0.0
    %3217 = vmatpush1.xpose.msra.mxu0 0.0
    %3218 = vmatprep.subr.mxu0 0.0
    %3219 = vmatpush1.xpose.msra.mxu0 0.0
    %3220 = vmatprep.subr.mxu0 0.0
    %3221 = vmatpush1.xpose.msra.mxu0 0.0
    %3222 = vmatprep.subr.mxu0 0.0
    %3223 = vmatpush1.xpose.msra.mxu0 0.0
    %3224 = vmatprep.subr.mxu0 0.0
    %3225 = vmatpush1.xpose.msra.mxu0 0.0
    %3226 = vmatprep.subr.mxu0 0.0
    %3227 = vmatpush1.xpose.msra.mxu0 0.0
    %3228 = vmatprep.subr.mxu0 0.0
    %3229 = vmatpush1.xpose.msra.mxu0 0.0
    %3230 = vmatprep.subr.mxu0 0.0
    %3231 = vmatpush1.xpose.msra.mxu0 0.0
    %3232 = vmatprep.subr.mxu0 0.0
    %3233 = vmatpush1.xpose.msra.mxu0 0.0
    %3234 = vmatprep.subr.mxu0 0.0
    %3235 = vmatpush1.xpose.msra.mxu0 0.0
    %3236 = vmatprep.subr.mxu0 0.0
    %3237 = vmatpush1.xpose.msra.mxu0 0.0
    %3238 = vmatprep.subr.mxu0 0.0
    %3239 = vmatpush1.xpose.msra.mxu0 0.0
    %3240 = vmatprep.subr.mxu0 0.0
    %3241 = vmatpush1.xpose.msra.mxu0 0.0
    %3242 = vmatprep.subr.mxu0 0.0
    %3243 = vmatpush1.xpose.msra.mxu0 0.0
    %3244 = vmatprep.subr.mxu0 0.0
    %3245 = vmatpush1.xpose.msra.mxu0 0.0
    %3246 = vmatprep.subr.mxu0 0.0
    %3247 = vmatpush1.xpose.msra.mxu0 0.0
    %3248 = vmatprep.subr.mxu0 0.0
    %3249 = vmatpush1.xpose.msra.mxu0 0.0
    %3250 = vmatprep.subr.mxu0 0.0
    %3251 = vmatpush1.xpose.msra.mxu0 0.0
    %3252 = vmatprep.subr.mxu0 0.0
    %3253 = vmatpush1.xpose.msra.mxu0 0.0
    %3254 = vmatprep.subr.mxu0 0.0
    %3255 = vmatpush1.xpose.msra.mxu0 0.0
    %3256 = vmatprep.subr.mxu0 0.0
    %3257 = vmatpush1.xpose.msra.mxu0 0.0
    %3258 = vmatprep.subr.mxu0 0.0
    %3259 = vmatpush1.xpose.msra.mxu0 0.0
    %3260 = vmatprep.subr.mxu0 0.0
    %3261 = vmatpush1.xpose.msra.mxu0 0.0
    %3262 = vmatprep.subr.mxu0 0.0
    %3263 = vmatpush1.xpose.msra.mxu0 0.0
    %3264 = vmatprep.subr.mxu0 0.0
    %3265 = vmatpush1.xpose.msra.mxu0 0.0
    %3266 = vmatprep.mubr.f32.mxu0 %v499
    %3267 = vmatmul.mubr.f32.gmra.mrb[0].mxu0 %v491
    %v3268 = vpop.f32.mrb[0].mxu0
    %v3269 = vadd.f32 %v3199, %v3268
    %v3270 = vpop.f32.mrb[0].mxu0
    %3271 = vdwg.mxu0
    %3272 = vmatprep.subr.mxu0 %v126
    %3273 = vmatpush1.xpose.msra.mxu0 %v125
    %3274 = vmatprep.subr.mxu0 0.0
    %3275 = vmatpush1.xpose.msra.mxu0 0.0
    %3276 = vmatprep.subr.mxu0 0.0
    %3277 = vmatpush1.xpose.msra.mxu0 0.0
    %3278 = vmatprep.subr.mxu0 0.0
    %3279 = vmatpush1.xpose.msra.mxu0 0.0
    %3280 = vmatprep.subr.mxu0 0.0
    %3281 = vmatpush1.xpose.msra.mxu0 0.0
    %3282 = vmatprep.subr.mxu0 0.0
    %3283 = vmatpush1.xpose.msra.mxu0 0.0
    %3284 = vmatprep.subr.mxu0 0.0
    %3285 = vmatpush1.xpose.msra.mxu0 0.0
    %3286 = vmatprep.subr.mxu0 0.0
    %3287 = vmatpush1.xpose.msra.mxu0 0.0
    %3288 = vmatprep.subr.mxu0 0.0
    %3289 = vmatpush1.xpose.msra.mxu0 0.0
    %3290 = vmatprep.subr.mxu0 0.0
    %3291 = vmatpush1.xpose.msra.mxu0 0.0
    %3292 = vmatprep.subr.mxu0 0.0
    %3293 = vmatpush1.xpose.msra.mxu0 0.0
    %3294 = vmatprep.subr.mxu0 0.0
    %3295 = vmatpush1.xpose.msra.mxu0 0.0
    %3296 = vmatprep.subr.mxu0 0.0
    %3297 = vmatpush1.xpose.msra.mxu0 0.0
    %3298 = vmatprep.subr.mxu0 0.0
    %3299 = vmatpush1.xpose.msra.mxu0 0.0
    %3300 = vmatprep.subr.mxu0 0.0
    %3301 = vmatpush1.xpose.msra.mxu0 0.0
    %3302 = vmatprep.subr.mxu0 0.0
    %3303 = vmatpush1.xpose.msra.mxu0 0.0
    %3304 = vmatprep.subr.mxu0 0.0
    %3305 = vmatpush1.xpose.msra.mxu0 0.0
    %3306 = vmatprep.subr.mxu0 0.0
    %3307 = vmatpush1.xpose.msra.mxu0 0.0
    %3308 = vmatprep.subr.mxu0 0.0
    %3309 = vmatpush1.xpose.msra.mxu0 0.0
    %3310 = vmatprep.subr.mxu0 0.0
    %3311 = vmatpush1.xpose.msra.mxu0 0.0
    %3312 = vmatprep.subr.mxu0 0.0
    %3313 = vmatpush1.xpose.msra.mxu0 0.0
    %3314 = vmatprep.subr.mxu0 0.0
    %3315 = vmatpush1.xpose.msra.mxu0 0.0
    %3316 = vmatprep.subr.mxu0 0.0
    %3317 = vmatpush1.xpose.msra.mxu0 0.0
    %3318 = vmatprep.subr.mxu0 0.0
    %3319 = vmatpush1.xpose.msra.mxu0 0.0
    %3320 = vmatprep.subr.mxu0 0.0
    %3321 = vmatpush1.xpose.msra.mxu0 0.0
    %3322 = vmatprep.subr.mxu0 0.0
    %3323 = vmatpush1.xpose.msra.mxu0 0.0
    %3324 = vmatprep.subr.mxu0 0.0
    %3325 = vmatpush1.xpose.msra.mxu0 0.0
    %3326 = vmatprep.subr.mxu0 0.0
    %3327 = vmatpush1.xpose.msra.mxu0 0.0
    %3328 = vmatprep.subr.mxu0 0.0
    %3329 = vmatpush1.xpose.msra.mxu0 0.0
    %3330 = vmatprep.subr.mxu0 0.0
    %3331 = vmatpush1.xpose.msra.mxu0 0.0
    %3332 = vmatprep.subr.mxu0 0.0
    %3333 = vmatpush1.xpose.msra.mxu0 0.0
    %3334 = vmatprep.subr.mxu0 0.0
    %3335 = vmatpush1.xpose.msra.mxu0 0.0
    %3336 = vmatprep.mubr.f32.mxu0 %v500
    %3337 = vmatmul.mubr.f32.gmra.mrb[0].mxu0 %v498
    %v3338 = vpop.f32.mrb[0].mxu0
    %v3339 = vadd.f32 %v3269, %v3338
    %v3340 = vpop.f32.mrb[0].mxu0
    %3341 = vdwg.mxu0
    %3342 = vmatprep.subr.mxu0 %v128
    %3343 = vmatpush1.xpose.msra.mxu0 %v127
    %3344 = vmatprep.subr.mxu0 0.0
    %3345 = vmatpush1.xpose.msra.mxu0 0.0
    %3346 = vmatprep.subr.mxu0 0.0
    %3347 = vmatpush1.xpose.msra.mxu0 0.0
    %3348 = vmatprep.subr.mxu0 0.0
    %3349 = vmatpush1.xpose.msra.mxu0 0.0
    %3350 = vmatprep.subr.mxu0 0.0
    %3351 = vmatpush1.xpose.msra.mxu0 0.0
    %3352 = vmatprep.subr.mxu0 0.0
    %3353 = vmatpush1.xpose.msra.mxu0 0.0
    %3354 = vmatprep.subr.mxu0 0.0
    %3355 = vmatpush1.xpose.msra.mxu0 0.0
    %3356 = vmatprep.subr.mxu0 0.0
    %3357 = vmatpush1.xpose.msra.mxu0 0.0
    %3358 = vmatprep.subr.mxu0 0.0
    %3359 = vmatpush1.xpose.msra.mxu0 0.0
    %3360 = vmatprep.subr.mxu0 0.0
    %3361 = vmatpush1.xpose.msra.mxu0 0.0
    %3362 = vmatprep.subr.mxu0 0.0
    %3363 = vmatpush1.xpose.msra.mxu0 0.0
    %3364 = vmatprep.subr.mxu0 0.0
    %3365 = vmatpush1.xpose.msra.mxu0 0.0
    %3366 = vmatprep.subr.mxu0 0.0
    %3367 = vmatpush1.xpose.msra.mxu0 0.0
    %3368 = vmatprep.subr.mxu0 0.0
    %3369 = vmatpush1.xpose.msra.mxu0 0.0
    %3370 = vmatprep.subr.mxu0 0.0
    %3371 = vmatpush1.xpose.msra.mxu0 0.0
    %3372 = vmatprep.subr.mxu0 0.0
    %3373 = vmatpush1.xpose.msra.mxu0 0.0
    %3374 = vmatprep.subr.mxu0 0.0
    %3375 = vmatpush1.xpose.msra.mxu0 0.0
    %3376 = vmatprep.subr.mxu0 0.0
    %3377 = vmatpush1.xpose.msra.mxu0 0.0
    %3378 = vmatprep.subr.mxu0 0.0
    %3379 = vmatpush1.xpose.msra.mxu0 0.0
    %3380 = vmatprep.subr.mxu0 0.0
    %3381 = vmatpush1.xpose.msra.mxu0 0.0
    %3382 = vmatprep.subr.mxu0 0.0
    %3383 = vmatpush1.xpose.msra.mxu0 0.0
    %3384 = vmatprep.subr.mxu0 0.0
    %3385 = vmatpush1.xpose.msra.mxu0 0.0
    %3386 = vmatprep.subr.mxu0 0.0
    %3387 = vmatpush1.xpose.msra.mxu0 0.0
    %3388 = vmatprep.subr.mxu0 0.0
    %3389 = vmatpush1.xpose.msra.mxu0 0.0
    %3390 = vmatprep.subr.mxu0 0.0
    %3391 = vmatpush1.xpose.msra.mxu0 0.0
    %3392 = vmatprep.subr.mxu0 0.0
    %3393 = vmatpush1.xpose.msra.mxu0 0.0
    %3394 = vmatprep.subr.mxu0 0.0
    %3395 = vmatpush1.xpose.msra.mxu0 0.0
    %3396 = vmatprep.subr.mxu0 0.0
    %3397 = vmatpush1.xpose.msra.mxu0 0.0
    %3398 = vmatprep.subr.mxu0 0.0
    %3399 = vmatpush1.xpose.msra.mxu0 0.0
    %3400 = vmatprep.subr.mxu0 0.0
    %3401 = vmatpush1.xpose.msra.mxu0 0.0
    %3402 = vmatprep.subr.mxu0 0.0
    %3403 = vmatpush1.xpose.msra.mxu0 0.0
    %3404 = vmatprep.subr.mxu0 0.0
    %3405 = vmatpush1.xpose.msra.mxu0 0.0
    %3406 = vmatprep.mubr.f32.mxu0 %v516
    %3407 = vmatmul.mubr.f32.gmra.mrb[0].mxu0 %v508
    %v3408 = vpop.f32.mrb[0].mxu0
    %v3409 = vadd.f32 %v3339, %v3408
    %v3410 = vpop.f32.mrb[0].mxu0
    %3411 = vdwg.mxu0
    %3412 = vmatprep.subr.mxu0 %v130
    %3413 = vmatpush1.xpose.msra.mxu0 %v129
    %3414 = vmatprep.subr.mxu0 0.0
    %3415 = vmatpush1.xpose.msra.mxu0 0.0
    %3416 = vmatprep.subr.mxu0 0.0
    %3417 = vmatpush1.xpose.msra.mxu0 0.0
    %3418 = vmatprep.subr.mxu0 0.0
    %3419 = vmatpush1.xpose.msra.mxu0 0.0
    %3420 = vmatprep.subr.mxu0 0.0
    %3421 = vmatpush1.xpose.msra.mxu0 0.0
    %3422 = vmatprep.subr.mxu0 0.0
    %3423 = vmatpush1.xpose.msra.mxu0 0.0
    %3424 = vmatprep.subr.mxu0 0.0
    %3425 = vmatpush1.xpose.msra.mxu0 0.0
    %3426 = vmatprep.subr.mxu0 0.0
    %3427 = vmatpush1.xpose.msra.mxu0 0.0
    %3428 = vmatprep.subr.mxu0 0.0
    %3429 = vmatpush1.xpose.msra.mxu0 0.0
    %3430 = vmatprep.subr.mxu0 0.0
    %3431 = vmatpush1.xpose.msra.mxu0 0.0
    %3432 = vmatprep.subr.mxu0 0.0
    %3433 = vmatpush1.xpose.msra.mxu0 0.0
    %3434 = vmatprep.subr.mxu0 0.0
    %3435 = vmatpush1.xpose.msra.mxu0 0.0
    %3436 = vmatprep.subr.mxu0 0.0
    %3437 = vmatpush1.xpose.msra.mxu0 0.0
    %3438 = vmatprep.subr.mxu0 0.0
    %3439 = vmatpush1.xpose.msra.mxu0 0.0
    %3440 = vmatprep.subr.mxu0 0.0
    %3441 = vmatpush1.xpose.msra.mxu0 0.0
    %3442 = vmatprep.subr.mxu0 0.0
    %3443 = vmatpush1.xpose.msra.mxu0 0.0
    %3444 = vmatprep.subr.mxu0 0.0
    %3445 = vmatpush1.xpose.msra.mxu0 0.0
    %3446 = vmatprep.subr.mxu0 0.0
    %3447 = vmatpush1.xpose.msra.mxu0 0.0
    %3448 = vmatprep.subr.mxu0 0.0
    %3449 = vmatpush1.xpose.msra.mxu0 0.0
    %3450 = vmatprep.subr.mxu0 0.0
    %3451 = vmatpush1.xpose.msra.mxu0 0.0
    %3452 = vmatprep.subr.mxu0 0.0
    %3453 = vmatpush1.xpose.msra.mxu0 0.0
    %3454 = vmatprep.subr.mxu0 0.0
    %3455 = vmatpush1.xpose.msra.mxu0 0.0
    %3456 = vmatprep.subr.mxu0 0.0
    %3457 = vmatpush1.xpose.msra.mxu0 0.0
    %3458 = vmatprep.subr.mxu0 0.0
    %3459 = vmatpush1.xpose.msra.mxu0 0.0
    %3460 = vmatprep.subr.mxu0 0.0
    %3461 = vmatpush1.xpose.msra.mxu0 0.0
    %3462 = vmatprep.subr.mxu0 0.0
    %3463 = vmatpush1.xpose.msra.mxu0 0.0
    %3464 = vmatprep.subr.mxu0 0.0
    %3465 = vmatpush1.xpose.msra.mxu0 0.0
    %3466 = vmatprep.subr.mxu0 0.0
    %3467 = vmatpush1.xpose.msra.mxu0 0.0
    %3468 = vmatprep.subr.mxu0 0.0
    %3469 = vmatpush1.xpose.msra.mxu0 0.0
    %3470 = vmatprep.subr.mxu0 0.0
    %3471 = vmatpush1.xpose.msra.mxu0 0.0
    %3472 = vmatprep.subr.mxu0 0.0
    %3473 = vmatpush1.xpose.msra.mxu0 0.0
    %3474 = vmatprep.subr.mxu0 0.0
    %3475 = vmatpush1.xpose.msra.mxu0 0.0
    %3476 = vmatprep.mubr.f32.mxu0 %v517
    %3477 = vmatmul.mubr.f32.gmra.mrb[0].mxu0 %v515
    %v3478 = vpop.f32.mrb[0].mxu0
    %v3479 = vadd.f32 %v3409, %v3478
    %v3480 = vpop.f32.mrb[0].mxu0
    %3481 = vdwg.mxu0
    %3482 = vmatprep.subr.mxu0 %v132
    %3483 = vmatpush1.xpose.msra.mxu0 %v131
    %3484 = vmatprep.subr.mxu0 0.0
    %3485 = vmatpush1.xpose.msra.mxu0 0.0
    %3486 = vmatprep.subr.mxu0 0.0
    %3487 = vmatpush1.xpose.msra.mxu0 0.0
    %3488 = vmatprep.subr.mxu0 0.0
    %3489 = vmatpush1.xpose.msra.mxu0 0.0
    %3490 = vmatprep.subr.mxu0 0.0
    %3491 = vmatpush1.xpose.msra.mxu0 0.0
    %3492 = vmatprep.subr.mxu0 0.0
    %3493 = vmatpush1.xpose.msra.mxu0 0.0
    %3494 = vmatprep.subr.mxu0 0.0
    %3495 = vmatpush1.xpose.msra.mxu0 0.0
    %3496 = vmatprep.subr.mxu0 0.0
    %3497 = vmatpush1.xpose.msra.mxu0 0.0
    %3498 = vmatprep.subr.mxu0 0.0
    %3499 = vmatpush1.xpose.msra.mxu0 0.0
    %3500 = vmatprep.subr.mxu0 0.0
    %3501 = vmatpush1.xpose.msra.mxu0 0.0
    %3502 = vmatprep.subr.mxu0 0.0
    %3503 = vmatpush1.xpose.msra.mxu0 0.0
    %3504 = vmatprep.subr.mxu0 0.0
    %3505 = vmatpush1.xpose.msra.mxu0 0.0
    %3506 = vmatprep.subr.mxu0 0.0
    %3507 = vmatpush1.xpose.msra.mxu0 0.0
    %3508 = vmatprep.subr.mxu0 0.0
    %3509 = vmatpush1.xpose.msra.mxu0 0.0
    %3510 = vmatprep.subr.mxu0 0.0
    %3511 = vmatpush1.xpose.msra.mxu0 0.0
    %3512 = vmatprep.subr.mxu0 0.0
    %3513 = vmatpush1.xpose.msra.mxu0 0.0
    %3514 = vmatprep.subr.mxu0 0.0
    %3515 = vmatpush1.xpose.msra.mxu0 0.0
    %3516 = vmatprep.subr.mxu0 0.0
    %3517 = vmatpush1.xpose.msra.mxu0 0.0
    %3518 = vmatprep.subr.mxu0 0.0
    %3519 = vmatpush1.xpose.msra.mxu0 0.0
    %3520 = vmatprep.subr.mxu0 0.0
    %3521 = vmatpush1.xpose.msra.mxu0 0.0
    %3522 = vmatprep.subr.mxu0 0.0
    %3523 = vmatpush1.xpose.msra.mxu0 0.0
    %3524 = vmatprep.subr.mxu0 0.0
    %3525 = vmatpush1.xpose.msra.mxu0 0.0
    %3526 = vmatprep.subr.mxu0 0.0
    %3527 = vmatpush1.xpose.msra.mxu0 0.0
    %3528 = vmatprep.subr.mxu0 0.0
    %3529 = vmatpush1.xpose.msra.mxu0 0.0
    %3530 = vmatprep.subr.mxu0 0.0
    %3531 = vmatpush1.xpose.msra.mxu0 0.0
    %3532 = vmatprep.subr.mxu0 0.0
    %3533 = vmatpush1.xpose.msra.mxu0 0.0
    %3534 = vmatprep.subr.mxu0 0.0
    %3535 = vmatpush1.xpose.msra.mxu0 0.0
    %3536 = vmatprep.subr.mxu0 0.0
    %3537 = vmatpush1.xpose.msra.mxu0 0.0
    %3538 = vmatprep.subr.mxu0 0.0
    %3539 = vmatpush1.xpose.msra.mxu0 0.0
    %3540 = vmatprep.subr.mxu0 0.0
    %3541 = vmatpush1.xpose.msra.mxu0 0.0
    %3542 = vmatprep.subr.mxu0 0.0
    %3543 = vmatpush1.xpose.msra.mxu0 0.0
    %3544 = vmatprep.subr.mxu0 0.0
    %3545 = vmatpush1.xpose.msra.mxu0 0.0
    %3546 = vmatprep.mubr.f32.mxu0 %v533
    %3547 = vmatmul.mubr.f32.gmra.mrb[0].mxu0 %v525
    %v3548 = vpop.f32.mrb[0].mxu0
    %v3549 = vadd.f32 %v3479, %v3548
    %v3550 = vpop.f32.mrb[0].mxu0
    %3551 = vdwg.mxu0
    %3552 = vmatprep.subr.mxu0 %v134
    %3553 = vmatpush1.xpose.msra.mxu0 %v133
    %3554 = vmatprep.subr.mxu0 0.0
    %3555 = vmatpush1.xpose.msra.mxu0 0.0
    %3556 = vmatprep.subr.mxu0 0.0
    %3557 = vmatpush1.xpose.msra.mxu0 0.0
    %3558 = vmatprep.subr.mxu0 0.0
    %3559 = vmatpush1.xpose.msra.mxu0 0.0
    %3560 = vmatprep.subr.mxu0 0.0
    %3561 = vmatpush1.xpose.msra.mxu0 0.0
    %3562 = vmatprep.subr.mxu0 0.0
    %3563 = vmatpush1.xpose.msra.mxu0 0.0
    %3564 = vmatprep.subr.mxu0 0.0
    %3565 = vmatpush1.xpose.msra.mxu0 0.0
    %3566 = vmatprep.subr.mxu0 0.0
    %3567 = vmatpush1.xpose.msra.mxu0 0.0
    %3568 = vmatprep.subr.mxu0 0.0
    %3569 = vmatpush1.xpose.msra.mxu0 0.0
    %3570 = vmatprep.subr.mxu0 0.0
    %3571 = vmatpush1.xpose.msra.mxu0 0.0
    %3572 = vmatprep.subr.mxu0 0.0
    %3573 = vmatpush1.xpose.msra.mxu0 0.0
    %3574 = vmatprep.subr.mxu0 0.0
    %3575 = vmatpush1.xpose.msra.mxu0 0.0
    %3576 = vmatprep.subr.mxu0 0.0
    %3577 = vmatpush1.xpose.msra.mxu0 0.0
    %3578 = vmatprep.subr.mxu0 0.0
    %3579 = vmatpush1.xpose.msra.mxu0 0.0
    %3580 = vmatprep.subr.mxu0 0.0
    %3581 = vmatpush1.xpose.msra.mxu0 0.0
    %3582 = vmatprep.subr.mxu0 0.0
    %3583 = vmatpush1.xpose.msra.mxu0 0.0
    %3584 = vmatprep.subr.mxu0 0.0
    %3585 = vmatpush1.xpose.msra.mxu0 0.0
    %3586 = vmatprep.subr.mxu0 0.0
    %3587 = vmatpush1.xpose.msra.mxu0 0.0
    %3588 = vmatprep.subr.mxu0 0.0
    %3589 = vmatpush1.xpose.msra.mxu0 0.0
    %3590 = vmatprep.subr.mxu0 0.0
    %3591 = vmatpush1.xpose.msra.mxu0 0.0
    %3592 = vmatprep.subr.mxu0 0.0
    %3593 = vmatpush1.xpose.msra.mxu0 0.0
    %3594 = vmatprep.subr.mxu0 0.0
    %3595 = vmatpush1.xpose.msra.mxu0 0.0
    %3596 = vmatprep.subr.mxu0 0.0
    %3597 = vmatpush1.xpose.msra.mxu0 0.0
    %3598 = vmatprep.subr.mxu0 0.0
    %3599 = vmatpush1.xpose.msra.mxu0 0.0
    %3600 = vmatprep.subr.mxu0 0.0
    %3601 = vmatpush1.xpose.msra.mxu0 0.0
    %3602 = vmatprep.subr.mxu0 0.0
    %3603 = vmatpush1.xpose.msra.mxu0 0.0
    %3604 = vmatprep.subr.mxu0 0.0
    %3605 = vmatpush1.xpose.msra.mxu0 0.0
    %3606 = vmatprep.subr.mxu0 0.0
    %3607 = vmatpush1.xpose.msra.mxu0 0.0
    %3608 = vmatprep.subr.mxu0 0.0
    %3609 = vmatpush1.xpose.msra.mxu0 0.0
    %3610 = vmatprep.subr.mxu0 0.0
    %3611 = vmatpush1.xpose.msra.mxu0 0.0
    %3612 = vmatprep.subr.mxu0 0.0
    %3613 = vmatpush1.xpose.msra.mxu0 0.0
    %3614 = vmatprep.subr.mxu0 0.0
    %3615 = vmatpush1.xpose.msra.mxu0 0.0
    %3616 = vmatprep.mubr.f32.mxu0 %v534
    %3617 = vmatmul.mubr.f32.gmra.mrb[0].mxu0 %v532
    %v3618 = vpop.f32.mrb[0].mxu0
    %v3619 = vadd.f32 %v3549, %v3618
    %v3620 = vpop.f32.mrb[0].mxu0
    %3621 = vdwg.mxu0
    %3622 = vmatprep.subr.mxu0 %v136
    %3623 = vmatpush1.xpose.msra.mxu0 %v135
    %3624 = vmatprep.subr.mxu0 0.0
    %3625 = vmatpush1.xpose.msra.mxu0 0.0
    %3626 = vmatprep.subr.mxu0 0.0
    %3627 = vmatpush1.xpose.msra.mxu0 0.0
    %3628 = vmatprep.subr.mxu0 0.0
    %3629 = vmatpush1.xpose.msra.mxu0 0.0
    %3630 = vmatprep.subr.mxu0 0.0
    %3631 = vmatpush1.xpose.msra.mxu0 0.0
    %3632 = vmatprep.subr.mxu0 0.0
    %3633 = vmatpush1.xpose.msra.mxu0 0.0
    %3634 = vmatprep.subr.mxu0 0.0
    %3635 = vmatpush1.xpose.msra.mxu0 0.0
    %3636 = vmatprep.subr.mxu0 0.0
    %3637 = vmatpush1.xpose.msra.mxu0 0.0
    %3638 = vmatprep.subr.mxu0 0.0
    %3639 = vmatpush1.xpose.msra.mxu0 0.0
    %3640 = vmatprep.subr.mxu0 0.0
    %3641 = vmatpush1.xpose.msra.mxu0 0.0
    %3642 = vmatprep.subr.mxu0 0.0
    %3643 = vmatpush1.xpose.msra.mxu0 0.0
    %3644 = vmatprep.subr.mxu0 0.0
    %3645 = vmatpush1.xpose.msra.mxu0 0.0
    %3646 = vmatprep.subr.mxu0 0.0
    %3647 = vmatpush1.xpose.msra.mxu0 0.0
    %3648 = vmatprep.subr.mxu0 0.0
    %3649 = vmatpush1.xpose.msra.mxu0 0.0
    %3650 = vmatprep.subr.mxu0 0.0
    %3651 = vmatpush1.xpose.msra.mxu0 0.0
    %3652 = vmatprep.subr.mxu0 0.0
    %3653 = vmatpush1.xpose.msra.mxu0 0.0
    %3654 = vmatprep.subr.mxu0 0.0
    %3655 = vmatpush1.xpose.msra.mxu0 0.0
    %3656 = vmatprep.subr.mxu0 0.0
    %3657 = vmatpush1.xpose.msra.mxu0 0.0
    %3658 = vmatprep.subr.mxu0 0.0
    %3659 = vmatpush1.xpose.msra.mxu0 0.0
    %3660 = vmatprep.subr.mxu0 0.0
    %3661 = vmatpush1.xpose.msra.mxu0 0.0
    %3662 = vmatprep.subr.mxu0 0.0
    %3663 = vmatpush1.xpose.msra.mxu0 0.0
    %3664 = vmatprep.subr.mxu0 0.0
    %3665 = vmatpush1.xpose.msra.mxu0 0.0
    %3666 = vmatprep.subr.mxu0 0.0
    %3667 = vmatpush1.xpose.msra.mxu0 0.0
    %3668 = vmatprep.subr.mxu0 0.0
    %3669 = vmatpush1.xpose.msra.mxu0 0.0
    %3670 = vmatprep.subr.mxu0 0.0
    %3671 = vmatpush1.xpose.msra.mxu0 0.0
    %3672 = vmatprep.subr.mxu0 0.0
    %3673 = vmatpush1.xpose.msra.mxu0 0.0
    %3674 = vmatprep.subr.mxu0 0.0
    %3675 = vmatpush1.xpose.msra.mxu0 0.0
    %3676 = vmatprep.subr.mxu0 0.0
    %3677 = vmatpush1.xpose.msra.mxu0 0.0
    %3678 = vmatprep.subr.mxu0 0.0
    %3679 = vmatpush1.xpose.msra.mxu0 0.0
    %3680 = vmatprep.subr.mxu0 0.0
    %3681 = vmatpush1.xpose.msra.mxu0 0.0
    %3682 = vmatprep.subr.mxu0 0.0
    %3683 = vmatpush1.xpose.msra.mxu0 0.0
    %3684 = vmatprep.subr.mxu0 0.0
    %3685 = vmatpush1.xpose.msra.mxu0 0.0
    %3686 = vmatprep.mubr.f32.mxu0 %v550
    %3687 = vmatmul.mubr.f32.gmra.mrb[0].mxu0 %v542
    %v3688 = vpop.f32.mrb[0].mxu0
    %v3689 = vadd.f32 %v3619, %v3688
    %v3690 = vpop.f32.mrb[0].mxu0
    %3691 = vdwg.mxu0
    %3692 = vmatprep.subr.mxu0 %v138
    %3693 = vmatpush1.xpose.msra.mxu0 %v137
    %3694 = vmatprep.subr.mxu0 0.0
    %3695 = vmatpush1.xpose.msra.mxu0 0.0
    %3696 = vmatprep.subr.mxu0 0.0
    %3697 = vmatpush1.xpose.msra.mxu0 0.0
    %3698 = vmatprep.subr.mxu0 0.0
    %3699 = vmatpush1.xpose.msra.mxu0 0.0
    %3700 = vmatprep.subr.mxu0 0.0
    %3701 = vmatpush1.xpose.msra.mxu0 0.0
    %3702 = vmatprep.subr.mxu0 0.0
    %3703 = vmatpush1.xpose.msra.mxu0 0.0
    %3704 = vmatprep.subr.mxu0 0.0
    %3705 = vmatpush1.xpose.msra.mxu0 0.0
    %3706 = vmatprep.subr.mxu0 0.0
    %3707 = vmatpush1.xpose.msra.mxu0 0.0
    %3708 = vmatprep.subr.mxu0 0.0
    %3709 = vmatpush1.xpose.msra.mxu0 0.0
    %3710 = vmatprep.subr.mxu0 0.0
    %3711 = vmatpush1.xpose.msra.mxu0 0.0
    %3712 = vmatprep.subr.mxu0 0.0
    %3713 = vmatpush1.xpose.msra.mxu0 0.0
    %3714 = vmatprep.subr.mxu0 0.0
    %3715 = vmatpush1.xpose.msra.mxu0 0.0
    %3716 = vmatprep.subr.mxu0 0.0
    %3717 = vmatpush1.xpose.msra.mxu0 0.0
    %3718 = vmatprep.subr.mxu0 0.0
    %3719 = vmatpush1.xpose.msra.mxu0 0.0
    %3720 = vmatprep.subr.mxu0 0.0
    %3721 = vmatpush1.xpose.msra.mxu0 0.0
    %3722 = vmatprep.subr.mxu0 0.0
    %3723 = vmatpush1.xpose.msra.mxu0 0.0
    %3724 = vmatprep.subr.mxu0 0.0
    %3725 = vmatpush1.xpose.msra.mxu0 0.0
    %3726 = vmatprep.subr.mxu0 0.0
    %3727 = vmatpush1.xpose.msra.mxu0 0.0
    %3728 = vmatprep.subr.mxu0 0.0
    %3729 = vmatpush1.xpose.msra.mxu0 0.0
    %3730 = vmatprep.subr.mxu0 0.0
    %3731 = vmatpush1.xpose.msra.mxu0 0.0
    %3732 = vmatprep.subr.mxu0 0.0
    %3733 = vmatpush1.xpose.msra.mxu0 0.0
    %3734 = vmatprep.subr.mxu0 0.0
    %3735 = vmatpush1.xpose.msra.mxu0 0.0
    %3736 = vmatprep.subr.mxu0 0.0
    %3737 = vmatpush1.xpose.msra.mxu0 0.0
    %3738 = vmatprep.subr.mxu0 0.0
    %3739 = vmatpush1.xpose.msra.mxu0 0.0
    %3740 = vmatprep.subr.mxu0 0.0
    %3741 = vmatpush1.xpose.msra.mxu0 0.0
    %3742 = vmatprep.subr.mxu0 0.0
    %3743 = vmatpush1.xpose.msra.mxu0 0.0
    %3744 = vmatprep.subr.mxu0 0.0
    %3745 = vmatpush1.xpose.msra.mxu0 0.0
    %3746 = vmatprep.subr.mxu0 0.0
    %3747 = vmatpush1.xpose.msra.mxu0 0.0
    %3748 = vmatprep.subr.mxu0 0.0
    %3749 = vmatpush1.xpose.msra.mxu0 0.0
    %3750 = vmatprep.subr.mxu0 0.0
    %3751 = vmatpush1.xpose.msra.mxu0 0.0
    %3752 = vmatprep.subr.mxu0 0.0
    %3753 = vmatpush1.xpose.msra.mxu0 0.0
    %3754 = vmatprep.subr.mxu0 0.0
    %3755 = vmatpush1.xpose.msra.mxu0 0.0
    %3756 = vmatprep.mubr.f32.mxu0 %v551
    %3757 = vmatmul.mubr.f32.gmra.mrb[0].mxu0 %v549
    %v3758 = vpop.f32.mrb[0].mxu0
    %v3759 = vadd.f32 %v3689, %v3758
    %v3760 = vpop.f32.mrb[0].mxu0
    %3761 = vdwg.mxu0
    %3762 = vmatprep.subr.mxu0 %v140
    %3763 = vmatpush1.xpose.msra.mxu0 %v139
    %3764 = vmatprep.subr.mxu0 0.0
    %3765 = vmatpush1.xpose.msra.mxu0 0.0
    %3766 = vmatprep.subr.mxu0 0.0
    %3767 = vmatpush1.xpose.msra.mxu0 0.0
    %3768 = vmatprep.subr.mxu0 0.0
    %3769 = vmatpush1.xpose.msra.mxu0 0.0
    %3770 = vmatprep.subr.mxu0 0.0
    %3771 = vmatpush1.xpose.msra.mxu0 0.0
    %3772 = vmatprep.subr.mxu0 0.0
    %3773 = vmatpush1.xpose.msra.mxu0 0.0
    %3774 = vmatprep.subr.mxu0 0.0
    %3775 = vmatpush1.xpose.msra.mxu0 0.0
    %3776 = vmatprep.subr.mxu0 0.0
    %3777 = vmatpush1.xpose.msra.mxu0 0.0
    %3778 = vmatprep.subr.mxu0 0.0
    %3779 = vmatpush1.xpose.msra.mxu0 0.0
    %3780 = vmatprep.subr.mxu0 0.0
    %3781 = vmatpush1.xpose.msra.mxu0 0.0
    %3782 = vmatprep.subr.mxu0 0.0
    %3783 = vmatpush1.xpose.msra.mxu0 0.0
    %3784 = vmatprep.subr.mxu0 0.0
    %3785 = vmatpush1.xpose.msra.mxu0 0.0
    %3786 = vmatprep.subr.mxu0 0.0
    %3787 = vmatpush1.xpose.msra.mxu0 0.0
    %3788 = vmatprep.subr.mxu0 0.0
    %3789 = vmatpush1.xpose.msra.mxu0 0.0
    %3790 = vmatprep.subr.mxu0 0.0
    %3791 = vmatpush1.xpose.msra.mxu0 0.0
    %3792 = vmatprep.subr.mxu0 0.0
    %3793 = vmatpush1.xpose.msra.mxu0 0.0
    %3794 = vmatprep.subr.mxu0 0.0
    %3795 = vmatpush1.xpose.msra.mxu0 0.0
    %3796 = vmatprep.subr.mxu0 0.0
    %3797 = vmatpush1.xpose.msra.mxu0 0.0
    %3798 = vmatprep.subr.mxu0 0.0
    %3799 = vmatpush1.xpose.msra.mxu0 0.0
    %3800 = vmatprep.subr.mxu0 0.0
    %3801 = vmatpush1.xpose.msra.mxu0 0.0
    %3802 = vmatprep.subr.mxu0 0.0
    %3803 = vmatpush1.xpose.msra.mxu0 0.0
    %3804 = vmatprep.subr.mxu0 0.0
    %3805 = vmatpush1.xpose.msra.mxu0 0.0
    %3806 = vmatprep.subr.mxu0 0.0
    %3807 = vmatpush1.xpose.msra.mxu0 0.0
    %3808 = vmatprep.subr.mxu0 0.0
    %3809 = vmatpush1.xpose.msra.mxu0 0.0
    %3810 = vmatprep.subr.mxu0 0.0
    %3811 = vmatpush1.xpose.msra.mxu0 0.0
    %3812 = vmatprep.subr.mxu0 0.0
    %3813 = vmatpush1.xpose.msra.mxu0 0.0
    %3814 = vmatprep.subr.mxu0 0.0
    %3815 = vmatpush1.xpose.msra.mxu0 0.0
    %3816 = vmatprep.subr.mxu0 0.0
    %3817 = vmatpush1.xpose.msra.mxu0 0.0
    %3818 = vmatprep.subr.mxu0 0.0
    %3819 = vmatpush1.xpose.msra.mxu0 0.0
    %3820 = vmatprep.subr.mxu0 0.0
    %3821 = vmatpush1.xpose.msra.mxu0 0.0
    %3822 = vmatprep.subr.mxu0 0.0
    %3823 = vmatpush1.xpose.msra.mxu0 0.0
    %3824 = vmatprep.subr.mxu0 0.0
    %3825 = vmatpush1.xpose.msra.mxu0 0.0
    %3826 = vmatprep.mubr.f32.mxu0 %v567
    %3827 = vmatmul.mubr.f32.gmra.mrb[0].mxu0 %v559
    %v3828 = vpop.f32.mrb[0].mxu0
    %v3829 = vadd.f32 %v3759, %v3828
    %v3830 = vpop.f32.mrb[0].mxu0
    %3831 = vdwg.mxu0
    %3832 = vmatprep.subr.mxu0 %v142
    %3833 = vmatpush1.xpose.msra.mxu0 %v141
    %3834 = vmatprep.subr.mxu0 0.0
    %3835 = vmatpush1.xpose.msra.mxu0 0.0
    %3836 = vmatprep.subr.mxu0 0.0
    %3837 = vmatpush1.xpose.msra.mxu0 0.0
    %3838 = vmatprep.subr.mxu0 0.0
    %3839 = vmatpush1.xpose.msra.mxu0 0.0
    %3840 = vmatprep.subr.mxu0 0.0
    %3841 = vmatpush1.xpose.msra.mxu0 0.0
    %3842 = vmatprep.subr.mxu0 0.0
    %3843 = vmatpush1.xpose.msra.mxu0 0.0
    %3844 = vmatprep.subr.mxu0 0.0
    %3845 = vmatpush1.xpose.msra.mxu0 0.0
    %3846 = vmatprep.subr.mxu0 0.0
    %3847 = vmatpush1.xpose.msra.mxu0 0.0
    %3848 = vmatprep.subr.mxu0 0.0
    %3849 = vmatpush1.xpose.msra.mxu0 0.0
    %3850 = vmatprep.subr.mxu0 0.0
    %3851 = vmatpush1.xpose.msra.mxu0 0.0
    %3852 = vmatprep.subr.mxu0 0.0
    %3853 = vmatpush1.xpose.msra.mxu0 0.0
    %3854 = vmatprep.subr.mxu0 0.0
    %3855 = vmatpush1.xpose.msra.mxu0 0.0
    %3856 = vmatprep.subr.mxu0 0.0
    %3857 = vmatpush1.xpose.msra.mxu0 0.0
    %3858 = vmatprep.subr.mxu0 0.0
    %3859 = vmatpush1.xpose.msra.mxu0 0.0
    %3860 = vmatprep.subr.mxu0 0.0
    %3861 = vmatpush1.xpose.msra.mxu0 0.0
    %3862 = vmatprep.subr.mxu0 0.0
    %3863 = vmatpush1.xpose.msra.mxu0 0.0
    %3864 = vmatprep.subr.mxu0 0.0
    %3865 = vmatpush1.xpose.msra.mxu0 0.0
    %3866 = vmatprep.subr.mxu0 0.0
    %3867 = vmatpush1.xpose.msra.mxu0 0.0
    %3868 = vmatprep.subr.mxu0 0.0
    %3869 = vmatpush1.xpose.msra.mxu0 0.0
    %3870 = vmatprep.subr.mxu0 0.0
    %3871 = vmatpush1.xpose.msra.mxu0 0.0
    %3872 = vmatprep.subr.mxu0 0.0
    %3873 = vmatpush1.xpose.msra.mxu0 0.0
    %3874 = vmatprep.subr.mxu0 0.0
    %3875 = vmatpush1.xpose.msra.mxu0 0.0
    %3876 = vmatprep.subr.mxu0 0.0
    %3877 = vmatpush1.xpose.msra.mxu0 0.0
    %3878 = vmatprep.subr.mxu0 0.0
    %3879 = vmatpush1.xpose.msra.mxu0 0.0
    %3880 = vmatprep.subr.mxu0 0.0
    %3881 = vmatpush1.xpose.msra.mxu0 0.0
    %3882 = vmatprep.subr.mxu0 0.0
    %3883 = vmatpush1.xpose.msra.mxu0 0.0
    %3884 = vmatprep.subr.mxu0 0.0
    %3885 = vmatpush1.xpose.msra.mxu0 0.0
    %3886 = vmatprep.subr.mxu0 0.0
    %3887 = vmatpush1.xpose.msra.mxu0 0.0
    %3888 = vmatprep.subr.mxu0 0.0
    %3889 = vmatpush1.xpose.msra.mxu0 0.0
    %3890 = vmatprep.subr.mxu0 0.0
    %3891 = vmatpush1.xpose.msra.mxu0 0.0
    %3892 = vmatprep.subr.mxu0 0.0
    %3893 = vmatpush1.xpose.msra.mxu0 0.0
    %3894 = vmatprep.subr.mxu0 0.0
    %3895 = vmatpush1.xpose.msra.mxu0 0.0
    %3896 = vmatprep.mubr.f32.mxu0 %v568
    %3897 = vmatmul.mubr.f32.gmra.mrb[0].mxu0 %v566
    %v3898 = vpop.f32.mrb[0].mxu0
    %v3899 = vadd.f32 %v3829, %v3898
    %v3900 = vpop.f32.mrb[0].mxu0
    %3901 = vdwg.mxu0
    %3902 = vmatprep.subr.mxu0 %v144
    %3903 = vmatpush1.xpose.msra.mxu0 %v143
    %3904 = vmatprep.subr.mxu0 0.0
    %3905 = vmatpush1.xpose.msra.mxu0 0.0
    %3906 = vmatprep.subr.mxu0 0.0
    %3907 = vmatpush1.xpose.msra.mxu0 0.0
    %3908 = vmatprep.subr.mxu0 0.0
    %3909 = vmatpush1.xpose.msra.mxu0 0.0
    %3910 = vmatprep.subr.mxu0 0.0
    %3911 = vmatpush1.xpose.msra.mxu0 0.0
    %3912 = vmatprep.subr.mxu0 0.0
    %3913 = vmatpush1.xpose.msra.mxu0 0.0
    %3914 = vmatprep.subr.mxu0 0.0
    %3915 = vmatpush1.xpose.msra.mxu0 0.0
    %3916 = vmatprep.subr.mxu0 0.0
    %3917 = vmatpush1.xpose.msra.mxu0 0.0
    %3918 = vmatprep.subr.mxu0 0.0
    %3919 = vmatpush1.xpose.msra.mxu0 0.0
    %3920 = vmatprep.subr.mxu0 0.0
    %3921 = vmatpush1.xpose.msra.mxu0 0.0
    %3922 = vmatprep.subr.mxu0 0.0
    %3923 = vmatpush1.xpose.msra.mxu0 0.0
    %3924 = vmatprep.subr.mxu0 0.0
    %3925 = vmatpush1.xpose.msra.mxu0 0.0
    %3926 = vmatprep.subr.mxu0 0.0
    %3927 = vmatpush1.xpose.msra.mxu0 0.0
    %3928 = vmatprep.subr.mxu0 0.0
    %3929 = vmatpush1.xpose.msra.mxu0 0.0
    %3930 = vmatprep.subr.mxu0 0.0
    %3931 = vmatpush1.xpose.msra.mxu0 0.0
    %3932 = vmatprep.subr.mxu0 0.0
    %3933 = vmatpush1.xpose.msra.mxu0 0.0
    %3934 = vmatprep.subr.mxu0 0.0
    %3935 = vmatpush1.xpose.msra.mxu0 0.0
    %3936 = vmatprep.subr.mxu0 0.0
    %3937 = vmatpush1.xpose.msra.mxu0 0.0
    %3938 = vmatprep.subr.mxu0 0.0
    %3939 = vmatpush1.xpose.msra.mxu0 0.0
    %3940 = vmatprep.subr.mxu0 0.0
    %3941 = vmatpush1.xpose.msra.mxu0 0.0
    %3942 = vmatprep.subr.mxu0 0.0
    %3943 = vmatpush1.xpose.msra.mxu0 0.0
    %3944 = vmatprep.subr.mxu0 0.0
    %3945 = vmatpush1.xpose.msra.mxu0 0.0
    %3946 = vmatprep.subr.mxu0 0.0
    %3947 = vmatpush1.xpose.msra.mxu0 0.0
    %3948 = vmatprep.subr.mxu0 0.0
    %3949 = vmatpush1.xpose.msra.mxu0 0.0
    %3950 = vmatprep.subr.mxu0 0.0
    %3951 = vmatpush1.xpose.msra.mxu0 0.0
    %3952 = vmatprep.subr.mxu0 0.0
    %3953 = vmatpush1.xpose.msra.mxu0 0.0
    %3954 = vmatprep.subr.mxu0 0.0
    %3955 = vmatpush1.xpose.msra.mxu0 0.0
    %3956 = vmatprep.subr.mxu0 0.0
    %3957 = vmatpush1.xpose.msra.mxu0 0.0
    %3958 = vmatprep.subr.mxu0 0.0
    %3959 = vmatpush1.xpose.msra.mxu0 0.0
    %3960 = vmatprep.subr.mxu0 0.0
    %3961 = vmatpush1.xpose.msra.mxu0 0.0
    %3962 = vmatprep.subr.mxu0 0.0
    %3963 = vmatpush1.xpose.msra.mxu0 0.0
    %3964 = vmatprep.subr.mxu0 0.0
    %3965 = vmatpush1.xpose.msra.mxu0 0.0
    %3966 = vmatprep.mubr.f32.mxu0 %v584
    %3967 = vmatmul.mubr.f32.gmra.mrb[0].mxu0 %v576
    %v3968 = vpop.f32.mrb[0].mxu0
    %v3969 = vadd.f32 %v3899, %v3968
    %v3970 = vpop.f32.mrb[0].mxu0
    %3971 = vdwg.mxu0
    %3972 = vmatprep.subr.mxu0 %v146
    %3973 = vmatpush1.xpose.msra.mxu0 %v145
    %3974 = vmatprep.subr.mxu0 0.0
    %3975 = vmatpush1.xpose.msra.mxu0 0.0
    %3976 = vmatprep.subr.mxu0 0.0
    %3977 = vmatpush1.xpose.msra.mxu0 0.0
    %3978 = vmatprep.subr.mxu0 0.0
    %3979 = vmatpush1.xpose.msra.mxu0 0.0
    %3980 = vmatprep.subr.mxu0 0.0
    %3981 = vmatpush1.xpose.msra.mxu0 0.0
    %3982 = vmatprep.subr.mxu0 0.0
    %3983 = vmatpush1.xpose.msra.mxu0 0.0
    %3984 = vmatprep.subr.mxu0 0.0
    %3985 = vmatpush1.xpose.msra.mxu0 0.0
    %3986 = vmatprep.subr.mxu0 0.0
    %3987 = vmatpush1.xpose.msra.mxu0 0.0
    %3988 = vmatprep.subr.mxu0 0.0
    %3989 = vmatpush1.xpose.msra.mxu0 0.0
    %3990 = vmatprep.subr.mxu0 0.0
    %3991 = vmatpush1.xpose.msra.mxu0 0.0
    %3992 = vmatprep.subr.mxu0 0.0
    %3993 = vmatpush1.xpose.msra.mxu0 0.0
    %3994 = vmatprep.subr.mxu0 0.0
    %3995 = vmatpush1.xpose.msra.mxu0 0.0
    %3996 = vmatprep.subr.mxu0 0.0
    %3997 = vmatpush1.xpose.msra.mxu0 0.0
    %3998 = vmatprep.subr.mxu0 0.0
    %3999 = vmatpush1.xpose.msra.mxu0 0.0
    %4000 = vmatprep.subr.mxu0 0.0
    %4001 = vmatpush1.xpose.msra.mxu0 0.0
    %4002 = vmatprep.subr.mxu0 0.0
    %4003 = vmatpush1.xpose.msra.mxu0 0.0
    %4004 = vmatprep.subr.mxu0 0.0
    %4005 = vmatpush1.xpose.msra.mxu0 0.0
    %4006 = vmatprep.subr.mxu0 0.0
    %4007 = vmatpush1.xpose.msra.mxu0 0.0
    %4008 = vmatprep.subr.mxu0 0.0
    %4009 = vmatpush1.xpose.msra.mxu0 0.0
    %4010 = vmatprep.subr.mxu0 0.0
    %4011 = vmatpush1.xpose.msra.mxu0 0.0
    %4012 = vmatprep.subr.mxu0 0.0
    %4013 = vmatpush1.xpose.msra.mxu0 0.0
    %4014 = vmatprep.subr.mxu0 0.0
    %4015 = vmatpush1.xpose.msra.mxu0 0.0
    %4016 = vmatprep.subr.mxu0 0.0
    %4017 = vmatpush1.xpose.msra.mxu0 0.0
    %4018 = vmatprep.subr.mxu0 0.0
    %4019 = vmatpush1.xpose.msra.mxu0 0.0
    %4020 = vmatprep.subr.mxu0 0.0
    %4021 = vmatpush1.xpose.msra.mxu0 0.0
    %4022 = vmatprep.subr.mxu0 0.0
    %4023 = vmatpush1.xpose.msra.mxu0 0.0
    %4024 = vmatprep.subr.mxu0 0.0
    %4025 = vmatpush1.xpose.msra.mxu0 0.0
    %4026 = vmatprep.subr.mxu0 0.0
    %4027 = vmatpush1.xpose.msra.mxu0 0.0
    %4028 = vmatprep.subr.mxu0 0.0
    %4029 = vmatpush1.xpose.msra.mxu0 0.0
    %4030 = vmatprep.subr.mxu0 0.0
    %4031 = vmatpush1.xpose.msra.mxu0 0.0
    %4032 = vmatprep.subr.mxu0 0.0
    %4033 = vmatpush1.xpose.msra.mxu0 0.0
    %4034 = vmatprep.subr.mxu0 0.0
    %4035 = vmatpush1.xpose.msra.mxu0 0.0
    %4036 = vmatprep.mubr.f32.mxu0 %v585
    %4037 = vmatmul.mubr.f32.gmra.mrb[0].mxu0 %v583
    %v4038 = vpop.f32.mrb[0].mxu0
    %v4039 = vadd.f32 %v3969, %v4038
    %v4040 = vpop.f32.mrb[0].mxu0
    %4041 = vdwg.mxu0
    %vm4042 = vcmask 41984
    %4043 = vst.msk [vmem:[#allocation5] sm:$0x3] %vm4042, %v4039
    // Predicated region
    $region18: #{linear_classifier_forward.1} parent=1 // pred_check
      _
    $region19: #{linear_classifier_forward.1} parent=1 // pred_check_branch
      %4045 = sbr.rel (0) target = $region21
    $region20: #{linear_classifier_forward.1} parent=1 // pred_region
      %s4047 = ssub.s32 32, 32
      %4048 = vsyncadd [#allocation4], %s4047
      %s4050 = sshll.u32 [#allocation5], 4
      %s4051 = int_to_ptr.vmem [resolvable:$true] %s4050
      %4053 = dma.vmem_to_hbm [thread:$0]  %s4051, 32, %s3, [#allocation4]
    $region21: #{linear_classifier_forward.1} parent=1 // pred_fallthru
      _
    // Predicated region
    $region22: #{linear_classifier_forward.1} parent=1 // pred_check
      _
    $region23: #{linear_classifier_forward.1} parent=1 // pred_check_branch
      %4055 = sbr.rel (0) target = $region25
    $region24: #{linear_classifier_forward.1} parent=1 // pred_region
      %4056 = dma.done [#allocation4], 32
    $region25: #{linear_classifier_forward.1} parent=1 // pred_fallthru
      _
    %4057 = vsyncpa [#allocation3], 1
    %4058 = vsyncpa [#allocation4], 1

</llo_original>
